<compile_context>
chip_gen: v7x
topology: tpu7x:2x2x1
jax: 0.10.0
libtpu: 0.0.40
codegen_flags: <defaults>
</compile_context>

<pallas_src>
import jax
import jax.numpy as jnp
from jax import lax
from jax.experimental import pallas as pl
from jax.experimental.pallas import tpu as pltpu

POSE_DIM = 16
N_FRAMES = 34          # gives the canonical 32 * 12 = 384 flatten size
BATCH = 2
EPS = 1e-5
SLOPE_CONV = 0.2       # nn.LeakyReLU(0.2, True)

W_COLS = 256           # lane width of the packed weight-matrix buffer
V_COLS = 256           # lane width of the packed bias/BN-vector buffer


# ----------------------------- static layouts ------------------------------
def _round8(n):
    return (n + 7) // 8 * 8


def _dims(pose_dim, n_frames):
    l1 = n_frames - 2
    l2 = l1 - 2
    l3 = (l2 - 4) // 2 + 1
    l4 = l3 - 2
    return dict(l1=l1, l2=l2, l3=l3, l4=l4, flat=32 * l4)


def _weight_layout(pose_dim, n_frames):
    """All weight matrices (kernel layout: (rows=contraction, cols=out)) packed
    row-wise into one (total_rows, 256) buffer; rows padded to multiples of 8."""
    d = _dims(pose_dim, n_frames)
    order = [
        ("e1", 3 * pose_dim, 32),
        ("e2", 3 * 32, 64),
        ("e3", 4 * 64, 64),
        ("e4", 3 * 64, 32),
        ("fc1", d["flat"], 256),
        ("fc2", 256, 128),
        ("fc3", 128, 32),
        ("fc_mu", 32, 32),
        ("fc_lv", 32, 32),
        ("pre1", 32, 64),
        ("pre2", 64, 4 * n_frames),
        ("d1", 3 * 4, 32),
        ("d2", 3 * 32, 32),
        ("d3", 3 * 32, 32),
        ("d4", 3 * 32, pose_dim),
    ]
    spec, off = {}, 0
    for name, rows, cols in order:
        spec[name] = (off, rows, cols)
        off += _round8(rows)
    return spec, off


def _vector_layout(pose_dim, n_frames):
    """All biases / BN gammas / BN betas packed one per row of a (rows,256) buffer."""
    order = [
        ("e1_b", 32), ("e1_g", 32), ("e1_be", 32),
        ("e2_b", 64), ("e2_g", 64), ("e2_be", 64),
        ("e3_b", 64), ("e3_g", 64), ("e3_be", 64),
        ("e4_b", 32),
        ("fc1_b", 256), ("fc1_g", 256), ("fc1_be", 256),
        ("fc2_b", 128), ("fc2_g", 128), ("fc2_be", 128),
        ("fc3_b", 32),
        ("mu_b", 32), ("lv_b", 32),
        ("pre1_b", 64), ("pre1_g", 64), ("pre1_be", 64),
        ("pre2_b", 4 * n_frames),
        ("d1_b", 32), ("d1_g", 32), ("d1_be", 32),
        ("d2_b", 32), ("d2_g", 32), ("d2_be", 32),
        ("d3_b", 32),
        ("d4_b", pose_dim),
    ]
    spec = {name: (i, width) for i, (name, width) in enumerate(order)}
    return spec, _round8(len(order))


# --------------------------------- kernel ----------------------------------
def _make_kernel(pose_dim, n_frames, batch):
    wspec, _ = _weight_layout(pose_dim, n_frames)
    vspec, _ = _vector_layout(pose_dim, n_frames)
    B, T = batch, n_frames

    def kernel(x_ref, w_ref, v_ref, out_ref, feat_ref, mu_ref, logvar_ref):
        f32 = jnp.float32

        def W(name):
            off, rows, cols = wspec[name]
            return w_ref[off:off + rows, :cols]

        def V(name):
            row, cols = vspec[name]
            return v_ref[row:row + 1, :cols]

        def lrelu(x):
            return jnp.maximum(x, SLOPE_CONV * x)

        def batchnorm(x, gamma, beta):
            # training-mode BatchNorm: biased batch stats over all rows
            # (rows = batch*time for conv maps, rows = batch for FC features).
            mean = jnp.mean(x, axis=0, keepdims=True)
            ctr = x - mean
            var = jnp.mean(ctr * ctr, axis=0, keepdims=True)
            return ctr * (gamma * lax.rsqrt(var + EPS)) + beta

        def conv(x, lin, w, bias, k):
            # time-major im2col conv: x (B*lin, Cin) -> one matmul -> (B*lout, Cout)
            lout = lin - k + 1
            taps = []
            for j in range(k):
                taps.append(jnp.concatenate(
                    [x[b * lin + j: b * lin + j + lout, :] for b in range(B)],
                    axis=0))
            xcol = jnp.concatenate(taps, axis=1)              # (B*lout, k*Cin)
            return jnp.dot(xcol, w, preferred_element_type=f32) + bias, lout

        def pad_time(x, lin, k):
            # zero-pad (k-1) rows on each side of every sample block
            cin = x.shape[1]
            z = jnp.zeros((k - 1, cin), f32)
            blocks = []
            for b in range(B):
                blocks += [z, x[b * lin:(b + 1) * lin, :], z]
            return jnp.concatenate(blocks, axis=0), lin + 2 * (k - 1)

        # ------------------------------ encoder ------------------------------
        x = jnp.concatenate([x_ref[b] for b in range(B)], axis=0).astype(f32)

        h, L = conv(x, T, W("e1"), V("e1_b"), 3)
        h = lrelu(batchnorm(h, V("e1_g"), V("e1_be")))
        h, L = conv(h, L, W("e2"), V("e2_b"), 3)
        h = lrelu(batchnorm(h, V("e2_g"), V("e2_be")))

        # stride-2 conv: full stride-1 conv, then one 0/1 row-selection matmul
        hf, Lf = conv(h, L, W("e3"), V("e3_b"), 4)
        Ls = (L - 4) // 2 + 1
        r = lax.broadcasted_iota(jnp.int32, (Ls, Lf), 0)
        c = lax.broadcasted_iota(jnp.int32, (Ls, Lf), 1)
        sel = (c == 2 * r).astype(f32)
        zer = jnp.zeros((Ls, Lf), f32)
        ssub = jnp.concatenate(
            [jnp.concatenate([sel if bb == b else zer for bb in range(B)], axis=1)
             for b in range(B)], axis=0)                      # (B*Ls, B*Lf)
        h = jnp.dot(ssub, hf, preferred_element_type=f32)
        L = Ls
        h = lrelu(batchnorm(h, V("e3_g"), V("e3_be")))

        h, L = conv(h, L, W("e4"), V("e4_b"), 3)              # (B*l4, 32)

        # flatten (time-major order; fc1 rows are permuted host-side to match)
        vrows = []
        for b in range(B):
            vrows.append(jnp.concatenate(
                [h[b * L + l: b * L + l + 1, :] for l in range(L)], axis=1))
        flat = jnp.concatenate(vrows, axis=0)                 # (B, 32*l4)

        y = jnp.dot(flat, W("fc1"), preferred_element_type=f32) + V("fc1_b")
        y = batchnorm(y, V("fc1_g"), V("fc1_be"))    # nn.LeakyReLU(True) == identity
        y = jnp.dot(y, W("fc2"), preferred_element_type=f32) + V("fc2_b")
        y = batchnorm(y, V("fc2_g"), V("fc2_be"))    # nn.LeakyReLU(True) == identity
        y = jnp.dot(y, W("fc3"), preferred_element_type=f32) + V("fc3_b")

        mu = jnp.dot(y, W("fc_mu"), preferred_element_type=f32) + V("mu_b")
        logvar = jnp.dot(y, W("fc_lv"), preferred_element_type=f32) + V("lv_b")
        z = mu                                                # variational_encoding=False

        feat_ref[...] = z
        mu_ref[...] = mu
        logvar_ref[...] = logvar

        # ------------------------------ decoder ------------------------------
        h = jnp.dot(z, W("pre1"), preferred_element_type=f32) + V("pre1_b")
        h = batchnorm(h, V("pre1_g"), V("pre1_be"))  # nn.LeakyReLU(True) == identity
        p = jnp.dot(h, W("pre2"), preferred_element_type=f32) + V("pre2_b")  # (B, 4*T)

        # view(B, 4, T) -> time-major (B*T, 4): lane slices + one small transpose
        cm = jnp.concatenate(
            [jnp.concatenate([p[b:b + 1, ch * T:(ch + 1) * T] for b in range(B)],
                             axis=1) for ch in range(4)], axis=0)   # (4, B*T)
        d = cm.T                                                    # (B*T, 4)
        L = T

        # ConvTranspose1d == zero-pad + conv with kernel flipped host-side
        dp, Lp = pad_time(d, L, 3)
        d, L = conv(dp, Lp, W("d1"), V("d1_b"), 3)
        d = lrelu(batchnorm(d, V("d1_g"), V("d1_be")))
        dp, Lp = pad_time(d, L, 3)
        d, L = conv(dp, Lp, W("d2"), V("d2_b"), 3)
        d = lrelu(batchnorm(d, V("d2_g"), V("d2_be")))

        d, L = conv(d, L, W("d3"), V("d3_b"), 3)
        d, L = conv(d, L, W("d4"), V("d4_b"), 3)              # (B*T, D)

        for b in range(B):
            out_ref[b] = d[b * T:(b + 1) * T, :]

    return kernel


# ------------------------------ parameter init ------------------------------
def init_params(key, pose_dim=POSE_DIM, n_frames=N_FRAMES):
    """Random torch-layout parameters, converted to the kernel layouts and packed
    into one weight-matrix buffer and one bias/BN-vector buffer."""
    dd = _dims(pose_dim, n_frames)
    wspec, wrows = _weight_layout(pose_dim, n_frames)
    vspec, vrows = _vector_layout(pose_dim, n_frames)

    keys = iter(jax.random.split(key, 64))

    def rnd(*shape, scale=0.1):
        return scale * jax.random.normal(next(keys), shape, jnp.float32)

    # kernel-layout weight matrices: rows = contraction (tap-major, then Cin)
    def conv_w(cout, cin, k):
        wt = rnd(cout, cin, k)                               # torch Conv1d layout
        return jnp.transpose(wt, (2, 1, 0)).reshape(k * cin, cout)

    def convT_w(cin, cout, k):
        wt = rnd(cin, cout, k)                               # torch ConvTranspose1d
        return jnp.transpose(wt[:, :, ::-1], (2, 0, 1)).reshape(k * cin, cout)

    def lin_w(fin, fout):
        return rnd(fout, fin).T                              # torch Linear -> (fin,fout)

    def fc1_w(flat, fout, c4, l4):
        wt = rnd(fout, flat)                                 # torch flatten order c*l4+l
        return jnp.transpose(wt.reshape(fout, c4, l4), (2, 1, 0)).reshape(flat, fout)

    weights = {
        "e1": conv_w(32, pose_dim, 3),
        "e2": conv_w(64, 32, 3),
        "e3": conv_w(64, 64, 4),
        "e4": conv_w(32, 64, 3),
        "fc1": fc1_w(dd["flat"], 256, 32, dd["l4"]),
        "fc2": lin_w(256, 128),
        "fc3": lin_w(128, 32),
        "fc_mu": lin_w(32, 32),
        "fc_lv": lin_w(32, 32),
        "pre1": lin_w(32, 64),
        "pre2": lin_w(64, 4 * n_frames),
        "d1": convT_w(4, 32, 3),
        "d2": convT_w(32, 32, 3),
        "d3": conv_w(32, 32, 3),
        "d4": conv_w(pose_dim, 32, 3),
    }

    vectors = {}

    def bias(name, width):
        vectors[name] = rnd(1, width, scale=0.05)

    def bn(prefix, width):
        vectors[prefix + "_g"] = 1.0 + rnd(1, width)
        vectors[prefix + "_be"] = rnd(1, width, scale=0.05)

    bias("e1_b", 32); bn("e1", 32)
    bias("e2_b", 64); bn("e2", 64)
    bias("e3_b", 64); bn("e3", 64)
    bias("e4_b", 32)
    bias("fc1_b", 256); bn("fc1", 256)
    bias("fc2_b", 128); bn("fc2", 128)
    bias("fc3_b", 32)
    bias("mu_b", 32); bias("lv_b", 32)
    bias("pre1_b", 64); bn("pre1", 64)
    bias("pre2_b", 4 * n_frames)
    bias("d1_b", 32); bn("d1", 32)
    bias("d2_b", 32); bn("d2", 32)
    bias("d3_b", 32)
    bias("d4_b", pose_dim)

    wbuf = jnp.zeros((wrows, W_COLS), jnp.float32)
    for name, (off, rows, cols) in wspec.items():
        wbuf = wbuf.at[off:off + rows, :cols].set(weights[name])
    vbuf = jnp.zeros((vrows, V_COLS), jnp.float32)
    for name, (row, cols) in vspec.items():
        vbuf = vbuf.at[row, :cols].set(vectors[name][0])
    return wbuf, vbuf


# ---------------------------------- wrapper ---------------------------------
def make_forward(pose_dim=POSE_DIM, n_frames=N_FRAMES):
    @jax.jit
    def forward(poses, wbuf, vbuf):
        """poses: (B, T, D) -> (out_poses, poses_feat, pose_mu, pose_logvar)."""
        batch, t, d = poses.shape
        kernel = _make_kernel(pose_dim, n_frames, batch)
        vmem = lambda: pl.BlockSpec(memory_space=pltpu.MemorySpace.VMEM)
        out_poses, feat, mu, logvar = pl.pallas_call(
            kernel,
            out_shape=(
                jax.ShapeDtypeStruct((batch, t, d), jnp.float32),   # decoded poses
                jax.ShapeDtypeStruct((batch, 32), jnp.float32),     # poses_feat
                jax.ShapeDtypeStruct((batch, 32), jnp.float32),     # pose_mu
                jax.ShapeDtypeStruct((batch, 32), jnp.float32),     # pose_logvar
            ),
            in_specs=[vmem(), vmem(), vmem()],
            out_specs=(vmem(), vmem(), vmem(), vmem()),
        )(poses.astype(jnp.float32), wbuf, vbuf)
        return out_poses, feat, mu, logvar

    return forward


if __name__ == "__main__":
    key = jax.random.PRNGKey(0)
    pkey, xkey = jax.random.split(key)

    wbuf, vbuf = init_params(pkey, POSE_DIM, N_FRAMES)
    poses = jax.random.normal(xkey, (BATCH, N_FRAMES, POSE_DIM), jnp.float32)

    forward = make_forward(POSE_DIM, N_FRAMES)
    out_poses, feat, mu, logvar = forward(poses, wbuf, vbuf)
    jax.block_until_ready((out_poses, feat, mu, logvar))

    assert out_poses.shape == (BATCH, N_FRAMES, POSE_DIM)
    assert feat.shape == (BATCH, 32)
    assert mu.shape == (BATCH, 32)
    assert logvar.shape == (BATCH, 32)
    assert bool(jnp.all(jnp.isfinite(out_poses)))
    assert bool(jnp.all(jnp.isfinite(feat)))
    assert bool(jnp.all(jnp.isfinite(mu)))
    assert bool(jnp.all(jnp.isfinite(logvar)))
    # variational_encoding=False => poses_feat is exactly mu
    assert bool(jnp.all(feat == mu))

    print("KERNEL_OK")
</pallas_src>

<mosaic_0001>
module attributes {stable_mosaic.version = 11 : i64} {
  func.func @kernel(%arg0: memref<2x34x16xf32, #tpu.memory_space<vmem>>, %arg1: memref<1824x256xf32, #tpu.memory_space<vmem>>, %arg2: memref<32x256xf32, #tpu.memory_space<vmem>>, %arg3: memref<2x34x16xf32, #tpu.memory_space<vmem>>, %arg4: memref<2x32xf32, #tpu.memory_space<vmem>>, %arg5: memref<2x32xf32, #tpu.memory_space<vmem>>, %arg6: memref<2x32xf32, #tpu.memory_space<vmem>>) attributes {dimension_semantics = [], scalar_prefetch = 0 : i64, scratch_operands = 0 : i64, tpu.core_type = #tpu.core_type<tc>} {
    %c0 = arith.constant 0 : index
    %c0_0 = arith.constant 0 : index
    %c0_1 = arith.constant 0 : index
    %0 = vector.load %arg0[%c0, %c0_0, %c0_1] : memref<2x34x16xf32, #tpu.memory_space<vmem>>, vector<1x34x16xf32>
    %1 = vector.shape_cast %0 : vector<1x34x16xf32> to vector<34x16xf32>
    %c1 = arith.constant 1 : index
    %c0_2 = arith.constant 0 : index
    %c0_3 = arith.constant 0 : index
    %2 = vector.load %arg0[%c1, %c0_2, %c0_3] : memref<2x34x16xf32, #tpu.memory_space<vmem>>, vector<1x34x16xf32>
    %3 = vector.shape_cast %2 : vector<1x34x16xf32> to vector<34x16xf32>
    %4 = tpu.concatenate %1, %3 in 0 : vector<34x16xf32>, vector<34x16xf32> -> vector<68x16xf32>
    %c0_4 = arith.constant 0 : index
    %c0_5 = arith.constant 0 : index
    %5 = vector.load %arg1[%c0_4, %c0_5] : memref<1824x256xf32, #tpu.memory_space<vmem>>, vector<48x32xf32>
    %c0_6 = arith.constant 0 : index
    %c0_7 = arith.constant 0 : index
    %6 = vector.load %arg2[%c0_6, %c0_7] : memref<32x256xf32, #tpu.memory_space<vmem>>, vector<1x32xf32>
    %7 = vector.extract_strided_slice %4 {offsets = [0, 0], sizes = [32, 16], strides = [1, 1]} : vector<68x16xf32> to vector<32x16xf32>
    %8 = vector.extract_strided_slice %4 {offsets = [34, 0], sizes = [32, 16], strides = [1, 1]} : vector<68x16xf32> to vector<32x16xf32>
    %9 = tpu.concatenate %7, %8 in 0 : vector<32x16xf32>, vector<32x16xf32> -> vector<64x16xf32>
    %10 = vector.extract_strided_slice %4 {offsets = [1, 0], sizes = [32, 16], strides = [1, 1]} : vector<68x16xf32> to vector<32x16xf32>
    %11 = vector.extract_strided_slice %4 {offsets = [35, 0], sizes = [32, 16], strides = [1, 1]} : vector<68x16xf32> to vector<32x16xf32>
    %12 = tpu.concatenate %10, %11 in 0 : vector<32x16xf32>, vector<32x16xf32> -> vector<64x16xf32>
    %13 = vector.extract_strided_slice %4 {offsets = [2, 0], sizes = [32, 16], strides = [1, 1]} : vector<68x16xf32> to vector<32x16xf32>
    %14 = vector.extract_strided_slice %4 {offsets = [36, 0], sizes = [32, 16], strides = [1, 1]} : vector<68x16xf32> to vector<32x16xf32>
    %15 = tpu.concatenate %13, %14 in 0 : vector<32x16xf32>, vector<32x16xf32> -> vector<64x16xf32>
    %16 = tpu.concatenate %9, %12, %15 in 1 : vector<64x16xf32>, vector<64x16xf32>, vector<64x16xf32> -> vector<64x48xf32>
    %cst = arith.constant dense<0.000000e+00> : vector<64x32xf32>
    %17 = tpu.matmul %16, %5, %cst {dimension_numbers = #tpu.dot_dimension_numbers<[1], [0], [0], [1], [0, 0, 1, 1], [], []>} : vector<64x48xf32>, vector<48x32xf32>, vector<64x32xf32> -> vector<64x32xf32>
    %18 = vector.broadcast %6 : vector<1x32xf32> to vector<64x32xf32>
    %19 = arith.addf %17, %18 : vector<64x32xf32>
    %c1_8 = arith.constant 1 : index
    %c0_9 = arith.constant 0 : index
    %20 = vector.load %arg2[%c1_8, %c0_9] : memref<32x256xf32, #tpu.memory_space<vmem>>, vector<1x32xf32>
    %c2 = arith.constant 2 : index
    %c0_10 = arith.constant 0 : index
    %21 = vector.load %arg2[%c2, %c0_10] : memref<32x256xf32, #tpu.memory_space<vmem>>, vector<1x32xf32>
    %cst_11 = arith.constant dense<0.000000e+00> : vector<32xf32>
    %22 = vector.multi_reduction <add>, %19, %cst_11 [0] : vector<64x32xf32> to vector<32xf32>
    %23 = vector.shape_cast %22 : vector<32xf32> to vector<1x32xf32>
    %cst_12 = arith.constant 6.400000e+01 : f32
    %24 = vector.broadcast %cst_12 : f32 to vector<1x32xf32>
    %25 = arith.divf %23, %24 : vector<1x32xf32>
    %26 = vector.broadcast %25 : vector<1x32xf32> to vector<64x32xf32>
    %27 = arith.subf %19, %26 : vector<64x32xf32>
    %28 = arith.mulf %27, %27 : vector<64x32xf32>
    %cst_13 = arith.constant dense<0.000000e+00> : vector<32xf32>
    %29 = vector.multi_reduction <add>, %28, %cst_13 [0] : vector<64x32xf32> to vector<32xf32>
    %30 = vector.shape_cast %29 : vector<32xf32> to vector<1x32xf32>
    %cst_14 = arith.constant 6.400000e+01 : f32
    %31 = vector.broadcast %cst_14 : f32 to vector<1x32xf32>
    %32 = arith.divf %30, %31 : vector<1x32xf32>
    %cst_15 = arith.constant 9.99999974E-6 : f32
    %33 = vector.broadcast %cst_15 : f32 to vector<1x32xf32>
    %34 = arith.addf %32, %33 : vector<1x32xf32>
    %35 = math.rsqrt %34 : vector<1x32xf32>
    %36 = arith.mulf %20, %35 : vector<1x32xf32>
    %37 = vector.broadcast %36 : vector<1x32xf32> to vector<64x32xf32>
    %38 = arith.mulf %27, %37 : vector<64x32xf32>
    %39 = vector.broadcast %21 : vector<1x32xf32> to vector<64x32xf32>
    %40 = arith.addf %38, %39 : vector<64x32xf32>
    %cst_16 = arith.constant 2.000000e-01 : f32
    %41 = vector.broadcast %cst_16 : f32 to vector<64x32xf32>
    %42 = arith.mulf %41, %40 : vector<64x32xf32>
    %43 = arith.maximumf %40, %42 : vector<64x32xf32>
    %c48 = arith.constant 48 : index
    %c0_17 = arith.constant 0 : index
    %44 = vector.load %arg1[%c48, %c0_17] : memref<1824x256xf32, #tpu.memory_space<vmem>>, vector<96x64xf32>
    %c3 = arith.constant 3 : index
    %c0_18 = arith.constant 0 : index
    %45 = vector.load %arg2[%c3, %c0_18] : memref<32x256xf32, #tpu.memory_space<vmem>>, vector<1x64xf32>
    %46 = vector.extract_strided_slice %43 {offsets = [0, 0], sizes = [30, 32], strides = [1, 1]} : vector<64x32xf32> to vector<30x32xf32>
    %47 = vector.extract_strided_slice %43 {offsets = [32, 0], sizes = [30, 32], strides = [1, 1]} : vector<64x32xf32> to vector<30x32xf32>
    %48 = tpu.concatenate %46, %47 in 0 : vector<30x32xf32>, vector<30x32xf32> -> vector<60x32xf32>
    %49 = vector.extract_strided_slice %43 {offsets = [1, 0], sizes = [30, 32], strides = [1, 1]} : vector<64x32xf32> to vector<30x32xf32>
    %50 = vector.extract_strided_slice %43 {offsets = [33, 0], sizes = [30, 32], strides = [1, 1]} : vector<64x32xf32> to vector<30x32xf32>
    %51 = tpu.concatenate %49, %50 in 0 : vector<30x32xf32>, vector<30x32xf32> -> vector<60x32xf32>
    %52 = vector.extract_strided_slice %43 {offsets = [2, 0], sizes = [30, 32], strides = [1, 1]} : vector<64x32xf32> to vector<30x32xf32>
    %53 = vector.extract_strided_slice %43 {offsets = [34, 0], sizes = [30, 32], strides = [1, 1]} : vector<64x32xf32> to vector<30x32xf32>
    %54 = tpu.concatenate %52, %53 in 0 : vector<30x32xf32>, vector<30x32xf32> -> vector<60x32xf32>
    %55 = tpu.concatenate %48, %51, %54 in 1 : vector<60x32xf32>, vector<60x32xf32>, vector<60x32xf32> -> vector<60x96xf32>
    %cst_19 = arith.constant dense<0.000000e+00> : vector<60x64xf32>
    %56 = tpu.matmul %55, %44, %cst_19 {dimension_numbers = #tpu.dot_dimension_numbers<[1], [0], [0], [1], [0, 0, 1, 1], [], []>} : vector<60x96xf32>, vector<96x64xf32>, vector<60x64xf32> -> vector<60x64xf32>
    %57 = vector.broadcast %45 : vector<1x64xf32> to vector<60x64xf32>
    %58 = arith.addf %56, %57 : vector<60x64xf32>
    %c4 = arith.constant 4 : index
    %c0_20 = arith.constant 0 : index
    %59 = vector.load %arg2[%c4, %c0_20] : memref<32x256xf32, #tpu.memory_space<vmem>>, vector<1x64xf32>
    %c5 = arith.constant 5 : index
    %c0_21 = arith.constant 0 : index
    %60 = vector.load %arg2[%c5, %c0_21] : memref<32x256xf32, #tpu.memory_space<vmem>>, vector<1x64xf32>
    %cst_22 = arith.constant dense<0.000000e+00> : vector<64xf32>
    %61 = vector.multi_reduction <add>, %58, %cst_22 [0] : vector<60x64xf32> to vector<64xf32>
    %62 = vector.shape_cast %61 : vector<64xf32> to vector<1x64xf32>
    %cst_23 = arith.constant 6.000000e+01 : f32
    %63 = vector.broadcast %cst_23 : f32 to vector<1x64xf32>
    %64 = arith.divf %62, %63 : vector<1x64xf32>
    %65 = vector.broadcast %64 : vector<1x64xf32> to vector<60x64xf32>
    %66 = arith.subf %58, %65 : vector<60x64xf32>
    %67 = arith.mulf %66, %66 : vector<60x64xf32>
    %cst_24 = arith.constant dense<0.000000e+00> : vector<64xf32>
    %68 = vector.multi_reduction <add>, %67, %cst_24 [0] : vector<60x64xf32> to vector<64xf32>
    %69 = vector.shape_cast %68 : vector<64xf32> to vector<1x64xf32>
    %cst_25 = arith.constant 6.000000e+01 : f32
    %70 = vector.broadcast %cst_25 : f32 to vector<1x64xf32>
    %71 = arith.divf %69, %70 : vector<1x64xf32>
    %cst_26 = arith.constant 9.99999974E-6 : f32
    %72 = vector.broadcast %cst_26 : f32 to vector<1x64xf32>
    %73 = arith.addf %71, %72 : vector<1x64xf32>
    %74 = math.rsqrt %73 : vector<1x64xf32>
    %75 = arith.mulf %59, %74 : vector<1x64xf32>
    %76 = vector.broadcast %75 : vector<1x64xf32> to vector<60x64xf32>
    %77 = arith.mulf %66, %76 : vector<60x64xf32>
    %78 = vector.broadcast %60 : vector<1x64xf32> to vector<60x64xf32>
    %79 = arith.addf %77, %78 : vector<60x64xf32>
    %cst_27 = arith.constant 2.000000e-01 : f32
    %80 = vector.broadcast %cst_27 : f32 to vector<60x64xf32>
    %81 = arith.mulf %80, %79 : vector<60x64xf32>
    %82 = arith.maximumf %79, %81 : vector<60x64xf32>
    %c144 = arith.constant 144 : index
    %c0_28 = arith.constant 0 : index
    %83 = vector.load %arg1[%c144, %c0_28] : memref<1824x256xf32, #tpu.memory_space<vmem>>, vector<256x64xf32>
    %c6 = arith.constant 6 : index
    %c0_29 = arith.constant 0 : index
    %84 = vector.load %arg2[%c6, %c0_29] : memref<32x256xf32, #tpu.memory_space<vmem>>, vector<1x64xf32>
    %85 = vector.extract_strided_slice %82 {offsets = [0, 0], sizes = [27, 64], strides = [1, 1]} : vector<60x64xf32> to vector<27x64xf32>
    %86 = vector.extract_strided_slice %82 {offsets = [30, 0], sizes = [27, 64], strides = [1, 1]} : vector<60x64xf32> to vector<27x64xf32>
    %87 = tpu.concatenate %85, %86 in 0 : vector<27x64xf32>, vector<27x64xf32> -> vector<54x64xf32>
    %88 = vector.extract_strided_slice %82 {offsets = [1, 0], sizes = [27, 64], strides = [1, 1]} : vector<60x64xf32> to vector<27x64xf32>
    %89 = vector.extract_strided_slice %82 {offsets = [31, 0], sizes = [27, 64], strides = [1, 1]} : vector<60x64xf32> to vector<27x64xf32>
    %90 = tpu.concatenate %88, %89 in 0 : vector<27x64xf32>, vector<27x64xf32> -> vector<54x64xf32>
    %91 = vector.extract_strided_slice %82 {offsets = [2, 0], sizes = [27, 64], strides = [1, 1]} : vector<60x64xf32> to vector<27x64xf32>
    %92 = vector.extract_strided_slice %82 {offsets = [32, 0], sizes = [27, 64], strides = [1, 1]} : vector<60x64xf32> to vector<27x64xf32>
    %93 = tpu.concatenate %91, %92 in 0 : vector<27x64xf32>, vector<27x64xf32> -> vector<54x64xf32>
    %94 = vector.extract_strided_slice %82 {offsets = [3, 0], sizes = [27, 64], strides = [1, 1]} : vector<60x64xf32> to vector<27x64xf32>
    %95 = vector.extract_strided_slice %82 {offsets = [33, 0], sizes = [27, 64], strides = [1, 1]} : vector<60x64xf32> to vector<27x64xf32>
    %96 = tpu.concatenate %94, %95 in 0 : vector<27x64xf32>, vector<27x64xf32> -> vector<54x64xf32>
    %97 = tpu.concatenate %87, %90, %93, %96 in 1 : vector<54x64xf32>, vector<54x64xf32>, vector<54x64xf32>, vector<54x64xf32> -> vector<54x256xf32>
    %cst_30 = arith.constant dense<0.000000e+00> : vector<54x64xf32>
    %98 = tpu.matmul %97, %83, %cst_30 {dimension_numbers = #tpu.dot_dimension_numbers<[1], [0], [0], [1], [0, 0, 1, 1], [], []>} : vector<54x256xf32>, vector<256x64xf32>, vector<54x64xf32> -> vector<54x64xf32>
    %99 = vector.broadcast %84 : vector<1x64xf32> to vector<54x64xf32>
    %100 = arith.addf %98, %99 : vector<54x64xf32>
    %101 = tpu.iota {dimensions = array<i32: 0>} : vector<14x27xi32>
    %102 = tpu.iota {dimensions = array<i32: 1>} : vector<14x27xi32>
    %c2_i32 = arith.constant 2 : i32
    %103 = vector.broadcast %c2_i32 : i32 to vector<14x27xi32>
    %104 = arith.muli %103, %101 : vector<14x27xi32>
    %105 = arith.cmpi eq, %102, %104 : vector<14x27xi32>
    %106 = arith.extui %105 : vector<14x27xi1> to vector<14x27xi32>
    %107 = arith.sitofp %106 : vector<14x27xi32> to vector<14x27xf32>
    %cst_31 = arith.constant 0.000000e+00 : f32
    %108 = vector.broadcast %cst_31 : f32 to vector<14x27xf32>
    %109 = tpu.concatenate %107, %108 in 1 : vector<14x27xf32>, vector<14x27xf32> -> vector<14x54xf32>
    %110 = tpu.concatenate %108, %107 in 1 : vector<14x27xf32>, vector<14x27xf32> -> vector<14x54xf32>
    %111 = tpu.concatenate %109, %110 in 0 : vector<14x54xf32>, vector<14x54xf32> -> vector<28x54xf32>
    %cst_32 = arith.constant dense<0.000000e+00> : vector<28x64xf32>
    %112 = tpu.matmul %111, %100, %cst_32 {dimension_numbers = #tpu.dot_dimension_numbers<[1], [0], [0], [1], [0, 0, 1, 1], [], []>} : vector<28x54xf32>, vector<54x64xf32>, vector<28x64xf32> -> vector<28x64xf32>
    %c7 = arith.constant 7 : index
    %c0_33 = arith.constant 0 : index
    %113 = vector.load %arg2[%c7, %c0_33] : memref<32x256xf32, #tpu.memory_space<vmem>>, vector<1x64xf32>
    %c8 = arith.constant 8 : index
    %c0_34 = arith.constant 0 : index
    %114 = vector.load %arg2[%c8, %c0_34] : memref<32x256xf32, #tpu.memory_space<vmem>>, vector<1x64xf32>
    %cst_35 = arith.constant dense<0.000000e+00> : vector<64xf32>
    %115 = vector.multi_reduction <add>, %112, %cst_35 [0] : vector<28x64xf32> to vector<64xf32>
    %116 = vector.shape_cast %115 : vector<64xf32> to vector<1x64xf32>
    %cst_36 = arith.constant 2.800000e+01 : f32
    %117 = vector.broadcast %cst_36 : f32 to vector<1x64xf32>
    %118 = arith.divf %116, %117 : vector<1x64xf32>
    %119 = vector.broadcast %118 : vector<1x64xf32> to vector<28x64xf32>
    %120 = arith.subf %112, %119 : vector<28x64xf32>
    %121 = arith.mulf %120, %120 : vector<28x64xf32>
    %cst_37 = arith.constant dense<0.000000e+00> : vector<64xf32>
    %122 = vector.multi_reduction <add>, %121, %cst_37 [0] : vector<28x64xf32> to vector<64xf32>
    %123 = vector.shape_cast %122 : vector<64xf32> to vector<1x64xf32>
    %cst_38 = arith.constant 2.800000e+01 : f32
    %124 = vector.broadcast %cst_38 : f32 to vector<1x64xf32>
    %125 = arith.divf %123, %124 : vector<1x64xf32>
    %cst_39 = arith.constant 9.99999974E-6 : f32
    %126 = vector.broadcast %cst_39 : f32 to vector<1x64xf32>
    %127 = arith.addf %125, %126 : vector<1x64xf32>
    %128 = math.rsqrt %127 : vector<1x64xf32>
    %129 = arith.mulf %113, %128 : vector<1x64xf32>
    %130 = vector.broadcast %129 : vector<1x64xf32> to vector<28x64xf32>
    %131 = arith.mulf %120, %130 : vector<28x64xf32>
    %132 = vector.broadcast %114 : vector<1x64xf32> to vector<28x64xf32>
    %133 = arith.addf %131, %132 : vector<28x64xf32>
    %cst_40 = arith.constant 2.000000e-01 : f32
    %134 = vector.broadcast %cst_40 : f32 to vector<28x64xf32>
    %135 = arith.mulf %134, %133 : vector<28x64xf32>
    %136 = arith.maximumf %133, %135 : vector<28x64xf32>
    %c400 = arith.constant 400 : index
    %c0_41 = arith.constant 0 : index
    %137 = vector.load %arg1[%c400, %c0_41] : memref<1824x256xf32, #tpu.memory_space<vmem>>, vector<192x32xf32>
    %c9 = arith.constant 9 : index
    %c0_42 = arith.constant 0 : index
    %138 = vector.load %arg2[%c9, %c0_42] : memref<32x256xf32, #tpu.memory_space<vmem>>, vector<1x32xf32>
    %139 = vector.extract_strided_slice %136 {offsets = [0, 0], sizes = [12, 64], strides = [1, 1]} : vector<28x64xf32> to vector<12x64xf32>
    %140 = vector.extract_strided_slice %136 {offsets = [14, 0], sizes = [12, 64], strides = [1, 1]} : vector<28x64xf32> to vector<12x64xf32>
    %141 = tpu.concatenate %139, %140 in 0 : vector<12x64xf32>, vector<12x64xf32> -> vector<24x64xf32>
    %142 = vector.extract_strided_slice %136 {offsets = [1, 0], sizes = [12, 64], strides = [1, 1]} : vector<28x64xf32> to vector<12x64xf32>
    %143 = vector.extract_strided_slice %136 {offsets = [15, 0], sizes = [12, 64], strides = [1, 1]} : vector<28x64xf32> to vector<12x64xf32>
    %144 = tpu.concatenate %142, %143 in 0 : vector<12x64xf32>, vector<12x64xf32> -> vector<24x64xf32>
    %145 = vector.extract_strided_slice %136 {offsets = [2, 0], sizes = [12, 64], strides = [1, 1]} : vector<28x64xf32> to vector<12x64xf32>
    %146 = vector.extract_strided_slice %136 {offsets = [16, 0], sizes = [12, 64], strides = [1, 1]} : vector<28x64xf32> to vector<12x64xf32>
    %147 = tpu.concatenate %145, %146 in 0 : vector<12x64xf32>, vector<12x64xf32> -> vector<24x64xf32>
    %148 = tpu.concatenate %141, %144, %147 in 1 : vector<24x64xf32>, vector<24x64xf32>, vector<24x64xf32> -> vector<24x192xf32>
    %cst_43 = arith.constant dense<0.000000e+00> : vector<24x32xf32>
    %149 = tpu.matmul %148, %137, %cst_43 {dimension_numbers = #tpu.dot_dimension_numbers<[1], [0], [0], [1], [0, 0, 1, 1], [], []>} : vector<24x192xf32>, vector<192x32xf32>, vector<24x32xf32> -> vector<24x32xf32>
    %150 = vector.broadcast %138 : vector<1x32xf32> to vector<24x32xf32>
    %151 = arith.addf %149, %150 : vector<24x32xf32>
    %152 = vector.extract_strided_slice %151 {offsets = [0, 0], sizes = [1, 32], strides = [1, 1]} : vector<24x32xf32> to vector<1x32xf32>
    %153 = vector.extract_strided_slice %151 {offsets = [1, 0], sizes = [1, 32], strides = [1, 1]} : vector<24x32xf32> to vector<1x32xf32>
    %154 = vector.extract_strided_slice %151 {offsets = [2, 0], sizes = [1, 32], strides = [1, 1]} : vector<24x32xf32> to vector<1x32xf32>
    %155 = vector.extract_strided_slice %151 {offsets = [3, 0], sizes = [1, 32], strides = [1, 1]} : vector<24x32xf32> to vector<1x32xf32>
    %156 = vector.extract_strided_slice %151 {offsets = [4, 0], sizes = [1, 32], strides = [1, 1]} : vector<24x32xf32> to vector<1x32xf32>
    %157 = vector.extract_strided_slice %151 {offsets = [5, 0], sizes = [1, 32], strides = [1, 1]} : vector<24x32xf32> to vector<1x32xf32>
    %158 = vector.extract_strided_slice %151 {offsets = [6, 0], sizes = [1, 32], strides = [1, 1]} : vector<24x32xf32> to vector<1x32xf32>
    %159 = vector.extract_strided_slice %151 {offsets = [7, 0], sizes = [1, 32], strides = [1, 1]} : vector<24x32xf32> to vector<1x32xf32>
    %160 = vector.extract_strided_slice %151 {offsets = [8, 0], sizes = [1, 32], strides = [1, 1]} : vector<24x32xf32> to vector<1x32xf32>
    %161 = vector.extract_strided_slice %151 {offsets = [9, 0], sizes = [1, 32], strides = [1, 1]} : vector<24x32xf32> to vector<1x32xf32>
    %162 = vector.extract_strided_slice %151 {offsets = [10, 0], sizes = [1, 32], strides = [1, 1]} : vector<24x32xf32> to vector<1x32xf32>
    %163 = vector.extract_strided_slice %151 {offsets = [11, 0], sizes = [1, 32], strides = [1, 1]} : vector<24x32xf32> to vector<1x32xf32>
    %164 = tpu.concatenate %152, %153, %154, %155, %156, %157, %158, %159, %160, %161, %162, %163 in 1 : vector<1x32xf32>, vector<1x32xf32>, vector<1x32xf32>, vector<1x32xf32>, vector<1x32xf32>, vector<1x32xf32>, vector<1x32xf32>, vector<1x32xf32>, vector<1x32xf32>, vector<1x32xf32>, vector<1x32xf32>, vector<1x32xf32> -> vector<1x384xf32>
    %165 = vector.extract_strided_slice %151 {offsets = [12, 0], sizes = [1, 32], strides = [1, 1]} : vector<24x32xf32> to vector<1x32xf32>
    %166 = vector.extract_strided_slice %151 {offsets = [13, 0], sizes = [1, 32], strides = [1, 1]} : vector<24x32xf32> to vector<1x32xf32>
    %167 = vector.extract_strided_slice %151 {offsets = [14, 0], sizes = [1, 32], strides = [1, 1]} : vector<24x32xf32> to vector<1x32xf32>
    %168 = vector.extract_strided_slice %151 {offsets = [15, 0], sizes = [1, 32], strides = [1, 1]} : vector<24x32xf32> to vector<1x32xf32>
    %169 = vector.extract_strided_slice %151 {offsets = [16, 0], sizes = [1, 32], strides = [1, 1]} : vector<24x32xf32> to vector<1x32xf32>
    %170 = vector.extract_strided_slice %151 {offsets = [17, 0], sizes = [1, 32], strides = [1, 1]} : vector<24x32xf32> to vector<1x32xf32>
    %171 = vector.extract_strided_slice %151 {offsets = [18, 0], sizes = [1, 32], strides = [1, 1]} : vector<24x32xf32> to vector<1x32xf32>
    %172 = vector.extract_strided_slice %151 {offsets = [19, 0], sizes = [1, 32], strides = [1, 1]} : vector<24x32xf32> to vector<1x32xf32>
    %173 = vector.extract_strided_slice %151 {offsets = [20, 0], sizes = [1, 32], strides = [1, 1]} : vector<24x32xf32> to vector<1x32xf32>
    %174 = vector.extract_strided_slice %151 {offsets = [21, 0], sizes = [1, 32], strides = [1, 1]} : vector<24x32xf32> to vector<1x32xf32>
    %175 = vector.extract_strided_slice %151 {offsets = [22, 0], sizes = [1, 32], strides = [1, 1]} : vector<24x32xf32> to vector<1x32xf32>
    %176 = vector.extract_strided_slice %151 {offsets = [23, 0], sizes = [1, 32], strides = [1, 1]} : vector<24x32xf32> to vector<1x32xf32>
    %177 = tpu.concatenate %165, %166, %167, %168, %169, %170, %171, %172, %173, %174, %175, %176 in 1 : vector<1x32xf32>, vector<1x32xf32>, vector<1x32xf32>, vector<1x32xf32>, vector<1x32xf32>, vector<1x32xf32>, vector<1x32xf32>, vector<1x32xf32>, vector<1x32xf32>, vector<1x32xf32>, vector<1x32xf32>, vector<1x32xf32> -> vector<1x384xf32>
    %178 = tpu.concatenate %164, %177 in 0 : vector<1x384xf32>, vector<1x384xf32> -> vector<2x384xf32>
    %c592 = arith.constant 592 : index
    %c0_44 = arith.constant 0 : index
    %179 = vector.load %arg1[%c592, %c0_44] : memref<1824x256xf32, #tpu.memory_space<vmem>>, vector<384x256xf32>
    %cst_45 = arith.constant dense<0.000000e+00> : vector<2x256xf32>
    %180 = tpu.matmul %178, %179, %cst_45 {dimension_numbers = #tpu.dot_dimension_numbers<[1], [0], [0], [1], [0, 0, 1, 1], [], []>} : vector<2x384xf32>, vector<384x256xf32>, vector<2x256xf32> -> vector<2x256xf32>
    %c10 = arith.constant 10 : index
    %c0_46 = arith.constant 0 : index
    %181 = vector.load %arg2[%c10, %c0_46] : memref<32x256xf32, #tpu.memory_space<vmem>>, vector<1x256xf32>
    %182 = vector.broadcast %181 : vector<1x256xf32> to vector<2x256xf32>
    %183 = arith.addf %180, %182 : vector<2x256xf32>
    %c11 = arith.constant 11 : index
    %c0_47 = arith.constant 0 : index
    %184 = vector.load %arg2[%c11, %c0_47] : memref<32x256xf32, #tpu.memory_space<vmem>>, vector<1x256xf32>
    %c12 = arith.constant 12 : index
    %c0_48 = arith.constant 0 : index
    %185 = vector.load %arg2[%c12, %c0_48] : memref<32x256xf32, #tpu.memory_space<vmem>>, vector<1x256xf32>
    %cst_49 = arith.constant dense<0.000000e+00> : vector<256xf32>
    %186 = vector.multi_reduction <add>, %183, %cst_49 [0] : vector<2x256xf32> to vector<256xf32>
    %187 = vector.shape_cast %186 : vector<256xf32> to vector<1x256xf32>
    %cst_50 = arith.constant 2.000000e+00 : f32
    %188 = vector.broadcast %cst_50 : f32 to vector<1x256xf32>
    %189 = arith.divf %187, %188 : vector<1x256xf32>
    %190 = vector.broadcast %189 : vector<1x256xf32> to vector<2x256xf32>
    %191 = arith.subf %183, %190 : vector<2x256xf32>
    %192 = arith.mulf %191, %191 : vector<2x256xf32>
    %cst_51 = arith.constant dense<0.000000e+00> : vector<256xf32>
    %193 = vector.multi_reduction <add>, %192, %cst_51 [0] : vector<2x256xf32> to vector<256xf32>
    %194 = vector.shape_cast %193 : vector<256xf32> to vector<1x256xf32>
    %cst_52 = arith.constant 2.000000e+00 : f32
    %195 = vector.broadcast %cst_52 : f32 to vector<1x256xf32>
    %196 = arith.divf %194, %195 : vector<1x256xf32>
    %cst_53 = arith.constant 9.99999974E-6 : f32
    %197 = vector.broadcast %cst_53 : f32 to vector<1x256xf32>
    %198 = arith.addf %196, %197 : vector<1x256xf32>
    %199 = math.rsqrt %198 : vector<1x256xf32>
    %200 = arith.mulf %184, %199 : vector<1x256xf32>
    %201 = vector.broadcast %200 : vector<1x256xf32> to vector<2x256xf32>
    %202 = arith.mulf %191, %201 : vector<2x256xf32>
    %203 = vector.broadcast %185 : vector<1x256xf32> to vector<2x256xf32>
    %204 = arith.addf %202, %203 : vector<2x256xf32>
    %c976 = arith.constant 976 : index
    %c0_54 = arith.constant 0 : index
    %205 = vector.load %arg1[%c976, %c0_54] : memref<1824x256xf32, #tpu.memory_space<vmem>>, vector<256x128xf32>
    %cst_55 = arith.constant dense<0.000000e+00> : vector<2x128xf32>
    %206 = tpu.matmul %204, %205, %cst_55 {dimension_numbers = #tpu.dot_dimension_numbers<[1], [0], [0], [1], [0, 0, 1, 1], [], []>} : vector<2x256xf32>, vector<256x128xf32>, vector<2x128xf32> -> vector<2x128xf32>
    %c13 = arith.constant 13 : index
    %c0_56 = arith.constant 0 : index
    %207 = vector.load %arg2[%c13, %c0_56] : memref<32x256xf32, #tpu.memory_space<vmem>>, vector<1x128xf32>
    %208 = vector.broadcast %207 : vector<1x128xf32> to vector<2x128xf32>
    %209 = arith.addf %206, %208 : vector<2x128xf32>
    %c14 = arith.constant 14 : index
    %c0_57 = arith.constant 0 : index
    %210 = vector.load %arg2[%c14, %c0_57] : memref<32x256xf32, #tpu.memory_space<vmem>>, vector<1x128xf32>
    %c15 = arith.constant 15 : index
    %c0_58 = arith.constant 0 : index
    %211 = vector.load %arg2[%c15, %c0_58] : memref<32x256xf32, #tpu.memory_space<vmem>>, vector<1x128xf32>
    %cst_59 = arith.constant dense<0.000000e+00> : vector<128xf32>
    %212 = vector.multi_reduction <add>, %209, %cst_59 [0] : vector<2x128xf32> to vector<128xf32>
    %213 = vector.shape_cast %212 : vector<128xf32> to vector<1x128xf32>
    %cst_60 = arith.constant 2.000000e+00 : f32
    %214 = vector.broadcast %cst_60 : f32 to vector<1x128xf32>
    %215 = arith.divf %213, %214 : vector<1x128xf32>
    %216 = vector.broadcast %215 : vector<1x128xf32> to vector<2x128xf32>
    %217 = arith.subf %209, %216 : vector<2x128xf32>
    %218 = arith.mulf %217, %217 : vector<2x128xf32>
    %cst_61 = arith.constant dense<0.000000e+00> : vector<128xf32>
    %219 = vector.multi_reduction <add>, %218, %cst_61 [0] : vector<2x128xf32> to vector<128xf32>
    %220 = vector.shape_cast %219 : vector<128xf32> to vector<1x128xf32>
    %cst_62 = arith.constant 2.000000e+00 : f32
    %221 = vector.broadcast %cst_62 : f32 to vector<1x128xf32>
    %222 = arith.divf %220, %221 : vector<1x128xf32>
    %cst_63 = arith.constant 9.99999974E-6 : f32
    %223 = vector.broadcast %cst_63 : f32 to vector<1x128xf32>
    %224 = arith.addf %222, %223 : vector<1x128xf32>
    %225 = math.rsqrt %224 : vector<1x128xf32>
    %226 = arith.mulf %210, %225 : vector<1x128xf32>
    %227 = vector.broadcast %226 : vector<1x128xf32> to vector<2x128xf32>
    %228 = arith.mulf %217, %227 : vector<2x128xf32>
    %229 = vector.broadcast %211 : vector<1x128xf32> to vector<2x128xf32>
    %230 = arith.addf %228, %229 : vector<2x128xf32>
    %c1232 = arith.constant 1232 : index
    %c0_64 = arith.constant 0 : index
    %231 = vector.load %arg1[%c1232, %c0_64] : memref<1824x256xf32, #tpu.memory_space<vmem>>, vector<128x32xf32>
    %cst_65 = arith.constant dense<0.000000e+00> : vector<2x32xf32>
    %232 = tpu.matmul %230, %231, %cst_65 {dimension_numbers = #tpu.dot_dimension_numbers<[1], [0], [0], [1], [0, 0, 1, 1], [], []>} : vector<2x128xf32>, vector<128x32xf32>, vector<2x32xf32> -> vector<2x32xf32>
    %c16 = arith.constant 16 : index
    %c0_66 = arith.constant 0 : index
    %233 = vector.load %arg2[%c16, %c0_66] : memref<32x256xf32, #tpu.memory_space<vmem>>, vector<1x32xf32>
    %234 = vector.broadcast %233 : vector<1x32xf32> to vector<2x32xf32>
    %235 = arith.addf %232, %234 : vector<2x32xf32>
    %c1360 = arith.constant 1360 : index
    %c0_67 = arith.constant 0 : index
    %236 = vector.load %arg1[%c1360, %c0_67] : memref<1824x256xf32, #tpu.memory_space<vmem>>, vector<32x32xf32>
    %cst_68 = arith.constant dense<0.000000e+00> : vector<2x32xf32>
    %237 = tpu.matmul %235, %236, %cst_68 {dimension_numbers = #tpu.dot_dimension_numbers<[1], [0], [0], [1], [0, 0, 1, 1], [], []>} : vector<2x32xf32>, vector<32x32xf32>, vector<2x32xf32> -> vector<2x32xf32>
    %c17 = arith.constant 17 : index
    %c0_69 = arith.constant 0 : index
    %238 = vector.load %arg2[%c17, %c0_69] : memref<32x256xf32, #tpu.memory_space<vmem>>, vector<1x32xf32>
    %239 = vector.broadcast %238 : vector<1x32xf32> to vector<2x32xf32>
    %240 = arith.addf %237, %239 : vector<2x32xf32>
    %c1392 = arith.constant 1392 : index
    %c0_70 = arith.constant 0 : index
    %241 = vector.load %arg1[%c1392, %c0_70] : memref<1824x256xf32, #tpu.memory_space<vmem>>, vector<32x32xf32>
    %cst_71 = arith.constant dense<0.000000e+00> : vector<2x32xf32>
    %242 = tpu.matmul %235, %241, %cst_71 {dimension_numbers = #tpu.dot_dimension_numbers<[1], [0], [0], [1], [0, 0, 1, 1], [], []>} : vector<2x32xf32>, vector<32x32xf32>, vector<2x32xf32> -> vector<2x32xf32>
    %c18 = arith.constant 18 : index
    %c0_72 = arith.constant 0 : index
    %243 = vector.load %arg2[%c18, %c0_72] : memref<32x256xf32, #tpu.memory_space<vmem>>, vector<1x32xf32>
    %244 = vector.broadcast %243 : vector<1x32xf32> to vector<2x32xf32>
    %245 = arith.addf %242, %244 : vector<2x32xf32>
    %c0_73 = arith.constant 0 : index
    %c0_74 = arith.constant 0 : index
    %246 = vector.load %arg4[%c0_73, %c0_74] : memref<2x32xf32, #tpu.memory_space<vmem>>, vector<2x32xf32>
    tpu.vector_store %arg4[%c0_73, %c0_74], %240 {strides = array<i32>} : memref<2x32xf32, #tpu.memory_space<vmem>>, vector<2x32xf32>,
    %c0_75 = arith.constant 0 : index
    %c0_76 = arith.constant 0 : index
    %247 = vector.load %arg5[%c0_75, %c0_76] : memref<2x32xf32, #tpu.memory_space<vmem>>, vector<2x32xf32>
    tpu.vector_store %arg5[%c0_75, %c0_76], %240 {strides = array<i32>} : memref<2x32xf32, #tpu.memory_space<vmem>>, vector<2x32xf32>,
    %c0_77 = arith.constant 0 : index
    %c0_78 = arith.constant 0 : index
    %248 = vector.load %arg6[%c0_77, %c0_78] : memref<2x32xf32, #tpu.memory_space<vmem>>, vector<2x32xf32>
    tpu.vector_store %arg6[%c0_77, %c0_78], %245 {strides = array<i32>} : memref<2x32xf32, #tpu.memory_space<vmem>>, vector<2x32xf32>,
    %c1424 = arith.constant 1424 : index
    %c0_79 = arith.constant 0 : index
    %249 = vector.load %arg1[%c1424, %c0_79] : memref<1824x256xf32, #tpu.memory_space<vmem>>, vector<32x64xf32>
    %cst_80 = arith.constant dense<0.000000e+00> : vector<2x64xf32>
    %250 = tpu.matmul %240, %249, %cst_80 {dimension_numbers = #tpu.dot_dimension_numbers<[1], [0], [0], [1], [0, 0, 1, 1], [], []>} : vector<2x32xf32>, vector<32x64xf32>, vector<2x64xf32> -> vector<2x64xf32>
    %c19 = arith.constant 19 : index
    %c0_81 = arith.constant 0 : index
    %251 = vector.load %arg2[%c19, %c0_81] : memref<32x256xf32, #tpu.memory_space<vmem>>, vector<1x64xf32>
    %252 = vector.broadcast %251 : vector<1x64xf32> to vector<2x64xf32>
    %253 = arith.addf %250, %252 : vector<2x64xf32>
    %c20 = arith.constant 20 : index
    %c0_82 = arith.constant 0 : index
    %254 = vector.load %arg2[%c20, %c0_82] : memref<32x256xf32, #tpu.memory_space<vmem>>, vector<1x64xf32>
    %c21 = arith.constant 21 : index
    %c0_83 = arith.constant 0 : index
    %255 = vector.load %arg2[%c21, %c0_83] : memref<32x256xf32, #tpu.memory_space<vmem>>, vector<1x64xf32>
    %cst_84 = arith.constant dense<0.000000e+00> : vector<64xf32>
    %256 = vector.multi_reduction <add>, %253, %cst_84 [0] : vector<2x64xf32> to vector<64xf32>
    %257 = vector.shape_cast %256 : vector<64xf32> to vector<1x64xf32>
    %cst_85 = arith.constant 2.000000e+00 : f32
    %258 = vector.broadcast %cst_85 : f32 to vector<1x64xf32>
    %259 = arith.divf %257, %258 : vector<1x64xf32>
    %260 = vector.broadcast %259 : vector<1x64xf32> to vector<2x64xf32>
    %261 = arith.subf %253, %260 : vector<2x64xf32>
    %262 = arith.mulf %261, %261 : vector<2x64xf32>
    %cst_86 = arith.constant dense<0.000000e+00> : vector<64xf32>
    %263 = vector.multi_reduction <add>, %262, %cst_86 [0] : vector<2x64xf32> to vector<64xf32>
    %264 = vector.shape_cast %263 : vector<64xf32> to vector<1x64xf32>
    %cst_87 = arith.constant 2.000000e+00 : f32
    %265 = vector.broadcast %cst_87 : f32 to vector<1x64xf32>
    %266 = arith.divf %264, %265 : vector<1x64xf32>
    %cst_88 = arith.constant 9.99999974E-6 : f32
    %267 = vector.broadcast %cst_88 : f32 to vector<1x64xf32>
    %268 = arith.addf %266, %267 : vector<1x64xf32>
    %269 = math.rsqrt %268 : vector<1x64xf32>
    %270 = arith.mulf %254, %269 : vector<1x64xf32>
    %271 = vector.broadcast %270 : vector<1x64xf32> to vector<2x64xf32>
    %272 = arith.mulf %261, %271 : vector<2x64xf32>
    %273 = vector.broadcast %255 : vector<1x64xf32> to vector<2x64xf32>
    %274 = arith.addf %272, %273 : vector<2x64xf32>
    %c1456 = arith.constant 1456 : index
    %c0_89 = arith.constant 0 : index
    %275 = vector.load %arg1[%c1456, %c0_89] : memref<1824x256xf32, #tpu.memory_space<vmem>>, vector<64x136xf32>
    %cst_90 = arith.constant dense<0.000000e+00> : vector<2x136xf32>
    %276 = tpu.matmul %274, %275, %cst_90 {dimension_numbers = #tpu.dot_dimension_numbers<[1], [0], [0], [1], [0, 0, 1, 1], [], []>} : vector<2x64xf32>, vector<64x136xf32>, vector<2x136xf32> -> vector<2x136xf32>
    %c22 = arith.constant 22 : index
    %c0_91 = arith.constant 0 : index
    %277 = vector.load %arg2[%c22, %c0_91] : memref<32x256xf32, #tpu.memory_space<vmem>>, vector<1x136xf32>
    %278 = vector.broadcast %277 : vector<1x136xf32> to vector<2x136xf32>
    %279 = arith.addf %276, %278 : vector<2x136xf32>
    %280 = vector.extract_strided_slice %279 {offsets = [0, 0], sizes = [1, 34], strides = [1, 1]} : vector<2x136xf32> to vector<1x34xf32>
    %281 = vector.extract_strided_slice %279 {offsets = [1, 0], sizes = [1, 34], strides = [1, 1]} : vector<2x136xf32> to vector<1x34xf32>
    %282 = tpu.concatenate %280, %281 in 1 : vector<1x34xf32>, vector<1x34xf32> -> vector<1x68xf32>
    %283 = vector.extract_strided_slice %279 {offsets = [0, 34], sizes = [1, 34], strides = [1, 1]} : vector<2x136xf32> to vector<1x34xf32>
    %284 = vector.extract_strided_slice %279 {offsets = [1, 34], sizes = [1, 34], strides = [1, 1]} : vector<2x136xf32> to vector<1x34xf32>
    %285 = tpu.concatenate %283, %284 in 1 : vector<1x34xf32>, vector<1x34xf32> -> vector<1x68xf32>
    %286 = vector.extract_strided_slice %279 {offsets = [0, 68], sizes = [1, 34], strides = [1, 1]} : vector<2x136xf32> to vector<1x34xf32>
    %287 = vector.extract_strided_slice %279 {offsets = [1, 68], sizes = [1, 34], strides = [1, 1]} : vector<2x136xf32> to vector<1x34xf32>
    %288 = tpu.concatenate %286, %287 in 1 : vector<1x34xf32>, vector<1x34xf32> -> vector<1x68xf32>
    %289 = vector.extract_strided_slice %279 {offsets = [0, 102], sizes = [1, 34], strides = [1, 1]} : vector<2x136xf32> to vector<1x34xf32>
    %290 = vector.extract_strided_slice %279 {offsets = [1, 102], sizes = [1, 34], strides = [1, 1]} : vector<2x136xf32> to vector<1x34xf32>
    %291 = tpu.concatenate %289, %290 in 1 : vector<1x34xf32>, vector<1x34xf32> -> vector<1x68xf32>
    %292 = tpu.concatenate %282, %285, %288, %291 in 0 : vector<1x68xf32>, vector<1x68xf32>, vector<1x68xf32>, vector<1x68xf32> -> vector<4x68xf32>
    %293 = tpu.transpose %292, [1, 0] : vector<4x68xf32> -> vector<68x4xf32>
    %cst_92 = arith.constant 0.000000e+00 : f32
    %294 = vector.broadcast %cst_92 : f32 to vector<2x4xf32>
    %295 = vector.extract_strided_slice %293 {offsets = [0, 0], sizes = [34, 4], strides = [1, 1]} : vector<68x4xf32> to vector<34x4xf32>
    %296 = vector.extract_strided_slice %293 {offsets = [34, 0], sizes = [34, 4], strides = [1, 1]} : vector<68x4xf32> to vector<34x4xf32>
    %297 = tpu.concatenate %294, %295, %294, %294, %296, %294 in 0 : vector<2x4xf32>, vector<34x4xf32>, vector<2x4xf32>, vector<2x4xf32>, vector<34x4xf32>, vector<2x4xf32> -> vector<76x4xf32>
    %c1520 = arith.constant 1520 : index
    %c0_93 = arith.constant 0 : index
    %298 = vector.load %arg1[%c1520, %c0_93] : memref<1824x256xf32, #tpu.memory_space<vmem>>, vector<12x32xf32>
    %c23 = arith.constant 23 : index
    %c0_94 = arith.constant 0 : index
    %299 = vector.load %arg2[%c23, %c0_94] : memref<32x256xf32, #tpu.memory_space<vmem>>, vector<1x32xf32>
    %300 = vector.extract_strided_slice %297 {offsets = [0, 0], sizes = [36, 4], strides = [1, 1]} : vector<76x4xf32> to vector<36x4xf32>
    %301 = vector.extract_strided_slice %297 {offsets = [38, 0], sizes = [36, 4], strides = [1, 1]} : vector<76x4xf32> to vector<36x4xf32>
    %302 = tpu.concatenate %300, %301 in 0 : vector<36x4xf32>, vector<36x4xf32> -> vector<72x4xf32>
    %303 = vector.extract_strided_slice %297 {offsets = [1, 0], sizes = [36, 4], strides = [1, 1]} : vector<76x4xf32> to vector<36x4xf32>
    %304 = vector.extract_strided_slice %297 {offsets = [39, 0], sizes = [36, 4], strides = [1, 1]} : vector<76x4xf32> to vector<36x4xf32>
    %305 = tpu.concatenate %303, %304 in 0 : vector<36x4xf32>, vector<36x4xf32> -> vector<72x4xf32>
    %306 = vector.extract_strided_slice %297 {offsets = [2, 0], sizes = [36, 4], strides = [1, 1]} : vector<76x4xf32> to vector<36x4xf32>
    %307 = vector.extract_strided_slice %297 {offsets = [40, 0], sizes = [36, 4], strides = [1, 1]} : vector<76x4xf32> to vector<36x4xf32>
    %308 = tpu.concatenate %306, %307 in 0 : vector<36x4xf32>, vector<36x4xf32> -> vector<72x4xf32>
    %309 = tpu.concatenate %302, %305, %308 in 1 : vector<72x4xf32>, vector<72x4xf32>, vector<72x4xf32> -> vector<72x12xf32>
    %cst_95 = arith.constant dense<0.000000e+00> : vector<72x32xf32>
    %310 = tpu.matmul %309, %298, %cst_95 {dimension_numbers = #tpu.dot_dimension_numbers<[1], [0], [0], [1], [0, 0, 1, 1], [], []>} : vector<72x12xf32>, vector<12x32xf32>, vector<72x32xf32> -> vector<72x32xf32>
    %311 = vector.broadcast %299 : vector<1x32xf32> to vector<72x32xf32>
    %312 = arith.addf %310, %311 : vector<72x32xf32>
    %c24 = arith.constant 24 : index
    %c0_96 = arith.constant 0 : index
    %313 = vector.load %arg2[%c24, %c0_96] : memref<32x256xf32, #tpu.memory_space<vmem>>, vector<1x32xf32>
    %c25 = arith.constant 25 : index
    %c0_97 = arith.constant 0 : index
    %314 = vector.load %arg2[%c25, %c0_97] : memref<32x256xf32, #tpu.memory_space<vmem>>, vector<1x32xf32>
    %cst_98 = arith.constant dense<0.000000e+00> : vector<32xf32>
    %315 = vector.multi_reduction <add>, %312, %cst_98 [0] : vector<72x32xf32> to vector<32xf32>
    %316 = vector.shape_cast %315 : vector<32xf32> to vector<1x32xf32>
    %cst_99 = arith.constant 7.200000e+01 : f32
    %317 = vector.broadcast %cst_99 : f32 to vector<1x32xf32>
    %318 = arith.divf %316, %317 : vector<1x32xf32>
    %319 = vector.broadcast %318 : vector<1x32xf32> to vector<72x32xf32>
    %320 = arith.subf %312, %319 : vector<72x32xf32>
    %321 = arith.mulf %320, %320 : vector<72x32xf32>
    %cst_100 = arith.constant dense<0.000000e+00> : vector<32xf32>
    %322 = vector.multi_reduction <add>, %321, %cst_100 [0] : vector<72x32xf32> to vector<32xf32>
    %323 = vector.shape_cast %322 : vector<32xf32> to vector<1x32xf32>
    %cst_101 = arith.constant 7.200000e+01 : f32
    %324 = vector.broadcast %cst_101 : f32 to vector<1x32xf32>
    %325 = arith.divf %323, %324 : vector<1x32xf32>
    %cst_102 = arith.constant 9.99999974E-6 : f32
    %326 = vector.broadcast %cst_102 : f32 to vector<1x32xf32>
    %327 = arith.addf %325, %326 : vector<1x32xf32>
    %328 = math.rsqrt %327 : vector<1x32xf32>
    %329 = arith.mulf %313, %328 : vector<1x32xf32>
    %330 = vector.broadcast %329 : vector<1x32xf32> to vector<72x32xf32>
    %331 = arith.mulf %320, %330 : vector<72x32xf32>
    %332 = vector.broadcast %314 : vector<1x32xf32> to vector<72x32xf32>
    %333 = arith.addf %331, %332 : vector<72x32xf32>
    %cst_103 = arith.constant 2.000000e-01 : f32
    %334 = vector.broadcast %cst_103 : f32 to vector<72x32xf32>
    %335 = arith.mulf %334, %333 : vector<72x32xf32>
    %336 = arith.maximumf %333, %335 : vector<72x32xf32>
    %cst_104 = arith.constant 0.000000e+00 : f32
    %337 = vector.broadcast %cst_104 : f32 to vector<2x32xf32>
    %338 = vector.extract_strided_slice %336 {offsets = [0, 0], sizes = [36, 32], strides = [1, 1]} : vector<72x32xf32> to vector<36x32xf32>
    %339 = vector.extract_strided_slice %336 {offsets = [36, 0], sizes = [36, 32], strides = [1, 1]} : vector<72x32xf32> to vector<36x32xf32>
    %340 = tpu.concatenate %337, %338, %337, %337, %339, %337 in 0 : vector<2x32xf32>, vector<36x32xf32>, vector<2x32xf32>, vector<2x32xf32>, vector<36x32xf32>, vector<2x32xf32> -> vector<80x32xf32>
    %c1536 = arith.constant 1536 : index
    %c0_105 = arith.constant 0 : index
    %341 = vector.load %arg1[%c1536, %c0_105] : memref<1824x256xf32, #tpu.memory_space<vmem>>, vector<96x32xf32>
    %c26 = arith.constant 26 : index
    %c0_106 = arith.constant 0 : index
    %342 = vector.load %arg2[%c26, %c0_106] : memref<32x256xf32, #tpu.memory_space<vmem>>, vector<1x32xf32>
    %343 = vector.extract_strided_slice %340 {offsets = [0, 0], sizes = [38, 32], strides = [1, 1]} : vector<80x32xf32> to vector<38x32xf32>
    %344 = vector.extract_strided_slice %340 {offsets = [40, 0], sizes = [38, 32], strides = [1, 1]} : vector<80x32xf32> to vector<38x32xf32>
    %345 = tpu.concatenate %343, %344 in 0 : vector<38x32xf32>, vector<38x32xf32> -> vector<76x32xf32>
    %346 = vector.extract_strided_slice %340 {offsets = [1, 0], sizes = [38, 32], strides = [1, 1]} : vector<80x32xf32> to vector<38x32xf32>
    %347 = vector.extract_strided_slice %340 {offsets = [41, 0], sizes = [38, 32], strides = [1, 1]} : vector<80x32xf32> to vector<38x32xf32>
    %348 = tpu.concatenate %346, %347 in 0 : vector<38x32xf32>, vector<38x32xf32> -> vector<76x32xf32>
    %349 = vector.extract_strided_slice %340 {offsets = [2, 0], sizes = [38, 32], strides = [1, 1]} : vector<80x32xf32> to vector<38x32xf32>
    %350 = vector.extract_strided_slice %340 {offsets = [42, 0], sizes = [38, 32], strides = [1, 1]} : vector<80x32xf32> to vector<38x32xf32>
    %351 = tpu.concatenate %349, %350 in 0 : vector<38x32xf32>, vector<38x32xf32> -> vector<76x32xf32>
    %352 = tpu.concatenate %345, %348, %351 in 1 : vector<76x32xf32>, vector<76x32xf32>, vector<76x32xf32> -> vector<76x96xf32>
    %cst_107 = arith.constant dense<0.000000e+00> : vector<76x32xf32>
    %353 = tpu.matmul %352, %341, %cst_107 {dimension_numbers = #tpu.dot_dimension_numbers<[1], [0], [0], [1], [0, 0, 1, 1], [], []>} : vector<76x96xf32>, vector<96x32xf32>, vector<76x32xf32> -> vector<76x32xf32>
    %354 = vector.broadcast %342 : vector<1x32xf32> to vector<76x32xf32>
    %355 = arith.addf %353, %354 : vector<76x32xf32>
    %c27 = arith.constant 27 : index
    %c0_108 = arith.constant 0 : index
    %356 = vector.load %arg2[%c27, %c0_108] : memref<32x256xf32, #tpu.memory_space<vmem>>, vector<1x32xf32>
    %c28 = arith.constant 28 : index
    %c0_109 = arith.constant 0 : index
    %357 = vector.load %arg2[%c28, %c0_109] : memref<32x256xf32, #tpu.memory_space<vmem>>, vector<1x32xf32>
    %cst_110 = arith.constant dense<0.000000e+00> : vector<32xf32>
    %358 = vector.multi_reduction <add>, %355, %cst_110 [0] : vector<76x32xf32> to vector<32xf32>
    %359 = vector.shape_cast %358 : vector<32xf32> to vector<1x32xf32>
    %cst_111 = arith.constant 7.600000e+01 : f32
    %360 = vector.broadcast %cst_111 : f32 to vector<1x32xf32>
    %361 = arith.divf %359, %360 : vector<1x32xf32>
    %362 = vector.broadcast %361 : vector<1x32xf32> to vector<76x32xf32>
    %363 = arith.subf %355, %362 : vector<76x32xf32>
    %364 = arith.mulf %363, %363 : vector<76x32xf32>
    %cst_112 = arith.constant dense<0.000000e+00> : vector<32xf32>
    %365 = vector.multi_reduction <add>, %364, %cst_112 [0] : vector<76x32xf32> to vector<32xf32>
    %366 = vector.shape_cast %365 : vector<32xf32> to vector<1x32xf32>
    %cst_113 = arith.constant 7.600000e+01 : f32
    %367 = vector.broadcast %cst_113 : f32 to vector<1x32xf32>
    %368 = arith.divf %366, %367 : vector<1x32xf32>
    %cst_114 = arith.constant 9.99999974E-6 : f32
    %369 = vector.broadcast %cst_114 : f32 to vector<1x32xf32>
    %370 = arith.addf %368, %369 : vector<1x32xf32>
    %371 = math.rsqrt %370 : vector<1x32xf32>
    %372 = arith.mulf %356, %371 : vector<1x32xf32>
    %373 = vector.broadcast %372 : vector<1x32xf32> to vector<76x32xf32>
    %374 = arith.mulf %363, %373 : vector<76x32xf32>
    %375 = vector.broadcast %357 : vector<1x32xf32> to vector<76x32xf32>
    %376 = arith.addf %374, %375 : vector<76x32xf32>
    %cst_115 = arith.constant 2.000000e-01 : f32
    %377 = vector.broadcast %cst_115 : f32 to vector<76x32xf32>
    %378 = arith.mulf %377, %376 : vector<76x32xf32>
    %379 = arith.maximumf %376, %378 : vector<76x32xf32>
    %c1632 = arith.constant 1632 : index
    %c0_116 = arith.constant 0 : index
    %380 = vector.load %arg1[%c1632, %c0_116] : memref<1824x256xf32, #tpu.memory_space<vmem>>, vector<96x32xf32>
    %c29 = arith.constant 29 : index
    %c0_117 = arith.constant 0 : index
    %381 = vector.load %arg2[%c29, %c0_117] : memref<32x256xf32, #tpu.memory_space<vmem>>, vector<1x32xf32>
    %382 = vector.extract_strided_slice %379 {offsets = [0, 0], sizes = [36, 32], strides = [1, 1]} : vector<76x32xf32> to vector<36x32xf32>
    %383 = vector.extract_strided_slice %379 {offsets = [38, 0], sizes = [36, 32], strides = [1, 1]} : vector<76x32xf32> to vector<36x32xf32>
    %384 = tpu.concatenate %382, %383 in 0 : vector<36x32xf32>, vector<36x32xf32> -> vector<72x32xf32>
    %385 = vector.extract_strided_slice %379 {offsets = [1, 0], sizes = [36, 32], strides = [1, 1]} : vector<76x32xf32> to vector<36x32xf32>
    %386 = vector.extract_strided_slice %379 {offsets = [39, 0], sizes = [36, 32], strides = [1, 1]} : vector<76x32xf32> to vector<36x32xf32>
    %387 = tpu.concatenate %385, %386 in 0 : vector<36x32xf32>, vector<36x32xf32> -> vector<72x32xf32>
    %388 = vector.extract_strided_slice %379 {offsets = [2, 0], sizes = [36, 32], strides = [1, 1]} : vector<76x32xf32> to vector<36x32xf32>
    %389 = vector.extract_strided_slice %379 {offsets = [40, 0], sizes = [36, 32], strides = [1, 1]} : vector<76x32xf32> to vector<36x32xf32>
    %390 = tpu.concatenate %388, %389 in 0 : vector<36x32xf32>, vector<36x32xf32> -> vector<72x32xf32>
    %391 = tpu.concatenate %384, %387, %390 in 1 : vector<72x32xf32>, vector<72x32xf32>, vector<72x32xf32> -> vector<72x96xf32>
    %cst_118 = arith.constant dense<0.000000e+00> : vector<72x32xf32>
    %392 = tpu.matmul %391, %380, %cst_118 {dimension_numbers = #tpu.dot_dimension_numbers<[1], [0], [0], [1], [0, 0, 1, 1], [], []>} : vector<72x96xf32>, vector<96x32xf32>, vector<72x32xf32> -> vector<72x32xf32>
    %393 = vector.broadcast %381 : vector<1x32xf32> to vector<72x32xf32>
    %394 = arith.addf %392, %393 : vector<72x32xf32>
    %c1728 = arith.constant 1728 : index
    %c0_119 = arith.constant 0 : index
    %395 = vector.load %arg1[%c1728, %c0_119] : memref<1824x256xf32, #tpu.memory_space<vmem>>, vector<96x16xf32>
    %c30 = arith.constant 30 : index
    %c0_120 = arith.constant 0 : index
    %396 = vector.load %arg2[%c30, %c0_120] : memref<32x256xf32, #tpu.memory_space<vmem>>, vector<1x16xf32>
    %397 = vector.extract_strided_slice %394 {offsets = [0, 0], sizes = [34, 32], strides = [1, 1]} : vector<72x32xf32> to vector<34x32xf32>
    %398 = vector.extract_strided_slice %394 {offsets = [36, 0], sizes = [34, 32], strides = [1, 1]} : vector<72x32xf32> to vector<34x32xf32>
    %399 = tpu.concatenate %397, %398 in 0 : vector<34x32xf32>, vector<34x32xf32> -> vector<68x32xf32>
    %400 = vector.extract_strided_slice %394 {offsets = [1, 0], sizes = [34, 32], strides = [1, 1]} : vector<72x32xf32> to vector<34x32xf32>
    %401 = vector.extract_strided_slice %394 {offsets = [37, 0], sizes = [34, 32], strides = [1, 1]} : vector<72x32xf32> to vector<34x32xf32>
    %402 = tpu.concatenate %400, %401 in 0 : vector<34x32xf32>, vector<34x32xf32> -> vector<68x32xf32>
    %403 = vector.extract_strided_slice %394 {offsets = [2, 0], sizes = [34, 32], strides = [1, 1]} : vector<72x32xf32> to vector<34x32xf32>
    %404 = vector.extract_strided_slice %394 {offsets = [38, 0], sizes = [34, 32], strides = [1, 1]} : vector<72x32xf32> to vector<34x32xf32>
    %405 = tpu.concatenate %403, %404 in 0 : vector<34x32xf32>, vector<34x32xf32> -> vector<68x32xf32>
    %406 = tpu.concatenate %399, %402, %405 in 1 : vector<68x32xf32>, vector<68x32xf32>, vector<68x32xf32> -> vector<68x96xf32>
    %cst_121 = arith.constant dense<0.000000e+00> : vector<68x16xf32>
    %407 = tpu.matmul %406, %395, %cst_121 {dimension_numbers = #tpu.dot_dimension_numbers<[1], [0], [0], [1], [0, 0, 1, 1], [], []>} : vector<68x96xf32>, vector<96x16xf32>, vector<68x16xf32> -> vector<68x16xf32>
    %408 = vector.broadcast %396 : vector<1x16xf32> to vector<68x16xf32>
    %409 = arith.addf %407, %408 : vector<68x16xf32>
    %410 = vector.extract_strided_slice %409 {offsets = [0, 0], sizes = [34, 16], strides = [1, 1]} : vector<68x16xf32> to vector<34x16xf32>
    %c0_122 = arith.constant 0 : index
    %c0_123 = arith.constant 0 : index
    %c0_124 = arith.constant 0 : index
    %411 = vector.load %arg3[%c0_122, %c0_123, %c0_124] : memref<2x34x16xf32, #tpu.memory_space<vmem>>, vector<1x34x16xf32>
    %412 = vector.shape_cast %411 : vector<1x34x16xf32> to vector<34x16xf32>
    %413 = vector.shape_cast %410 : vector<34x16xf32> to vector<1x34x16xf32>
    tpu.vector_store %arg3[%c0_122, %c0_123, %c0_124], %413 {strides = array<i32>} : memref<2x34x16xf32, #tpu.memory_space<vmem>>, vector<1x34x16xf32>,
    %414 = vector.extract_strided_slice %409 {offsets = [34, 0], sizes = [34, 16], strides = [1, 1]} : vector<68x16xf32> to vector<34x16xf32>
    %c1_125 = arith.constant 1 : index
    %c0_126 = arith.constant 0 : index
    %c0_127 = arith.constant 0 : index
    %415 = vector.load %arg3[%c1_125, %c0_126, %c0_127] : memref<2x34x16xf32, #tpu.memory_space<vmem>>, vector<1x34x16xf32>
    %416 = vector.shape_cast %415 : vector<1x34x16xf32> to vector<34x16xf32>
    %417 = vector.shape_cast %414 : vector<34x16xf32> to vector<1x34x16xf32>
    tpu.vector_store %arg3[%c1_125, %c0_126, %c0_127], %417 {strides = array<i32>} : memref<2x34x16xf32, #tpu.memory_space<vmem>>, vector<1x34x16xf32>,
    return
  }
}

</mosaic_0001>

<llo_original>
// kernel: forward.1
$region0: #{forward.1}
  #allocation0 [shape = 'u32[]', space=smem, size = 0x4, offset = 0x4, fixed_abs, tag = 'smem constant byte address 0x4 - core index']
  #allocation1 [shape = 'u32[144,128]{1,0:T(1,128)}', space=vmem, size = 0x12000, scoped, tag = 'internal scratch']
  %s0 = inlined_call_operand.vmem [shape: f32[2,34,16], index: 0, kind: input, shape index: {}]
  %s1 = inlined_call_operand.hbm [shape: f32[1824,256], index: 1, kind: input, shape index: {}]
  %s2 = inlined_call_operand.hbm [shape: f32[32,256], index: 2, kind: input, shape index: {}]
  %s3 = inlined_call_operand.vmem [shape: f32[2,34,16], index: 3, kind: output, shape index: {0}]
  %s4 = inlined_call_operand.hbm [shape: f32[2,32], index: 4, kind: output, shape index: {1}]
  %s5 = inlined_call_operand.hbm [shape: f32[2,32], index: 5, kind: output, shape index: {2}]
  %s6 = inlined_call_operand.hbm [shape: f32[2,32], index: 6, kind: output, shape index: {3}]
  %7 = xla_tuple %s3, %s4, %s5, %s6
  %s8 = sld [smem:[#allocation0]]
  $region54: #{forward.1} parent=0
    _
  %s10 = ssub.s32 1, %s8
  %s11 = scalar_select 0, %s10, %s8
  $region1: #{forward.1} parent=0
    #allocation2 [shape = 'u8[1867776]{0}', space=vmem, size = 0x1c8000, scoped, tag = 'input window, operand 1, single buffered']
    #allocation3 [shape = 's32[1]{0}', space=sflag, size = 0x4, scoped, tag = 'scoped memory for forward.1']
    #allocation4 [shape = 's32[1]{0}', space=sflag, size = 0x4, scoped, tag = 'scoped memory for forward.1']
    #allocation5 [shape = 'u8[32768]{0}', space=vmem, size = 0x8000, scoped, tag = 'input window, operand 2, single buffered']
    #allocation6 [shape = 's32[1]{0}', space=sflag, size = 0x4, scoped, tag = 'scoped memory for forward.1']
    #allocation7 [shape = 'u8[1024]{0}', space=vmem, size = 0x400, scoped, tag = 'output window, operand 1, single buffered']
    #allocation8 [shape = 'u8[1024]{0}', space=vmem, size = 0x400, scoped, tag = 'output window, operand 2, single buffered']
    #allocation9 [shape = 's32[1]{0}', space=sflag, size = 0x4, scoped, tag = 'scoped memory for forward.1']
    #allocation10 [shape = 'u8[1024]{0}', space=vmem, size = 0x400, scoped, tag = 'output window, operand 3, single buffered']
    %12 = vsyncpa [#allocation3], 0
    %13 = vsyncpa [#allocation6], 0
    %14 = vsyncpa [#allocation4], 0
    %15 = vsyncpa [#allocation9], 0
    // Predicated region
    $region2: #{forward.1} parent=1 // pred_check
      _
    $region3: #{forward.1} parent=1 // pred_check_branch
      %17 = sbr.rel (0) target = $region5
    $region4: #{forward.1} parent=1 // pred_region
      _
    $region5: #{forward.1} parent=1 // pred_fallthru
      _
    // Predicated region
    $region6: #{forward.1} parent=1 // pred_check
      _
    $region7: #{forward.1} parent=1 // pred_check_branch
      %19 = sbr.rel (0) target = $region9
    $region8: #{forward.1} parent=1 // pred_region
      %s21 = ssub.s32 58368, 58368
      %22 = vsyncadd [#allocation3], %s21
      %s23 = sshll.u32 [#allocation2], 4
      %s24 = int_to_ptr.vmem [resolvable:$true] %s23
      %29 = dma.hbm_to_vmem [thread:$0]  %s1, 58368, %s24, [#allocation3], 256, 256, 16
    $region9: #{forward.1} parent=1 // pred_fallthru
      _
    // Predicated region
    $region10: #{forward.1} parent=1 // pred_check
      _
    $region11: #{forward.1} parent=1 // pred_check_branch
      %31 = sbr.rel (0) target = $region13
    $region12: #{forward.1} parent=1 // pred_region
      %s33 = ssub.s32 1024, 1024
      %34 = vsyncadd [#allocation6], %s33
      %s35 = sshll.u32 [#allocation5], 4
      %s36 = int_to_ptr.vmem [resolvable:$true] %s35
      %41 = dma.hbm_to_vmem [thread:$0]  %s2, 1024, %s36, [#allocation6], 256, 256, 16
    $region13: #{forward.1} parent=1 // pred_fallthru
      _
    // Predicated region
    $region14: #{forward.1} parent=1 // pred_check
      _
    $region15: #{forward.1} parent=1 // pred_check_branch
      %43 = sbr.rel (0) target = $region17
    $region16: #{forward.1} parent=1 // pred_region
      %44 = dma.done [#allocation3], 58368
    $region17: #{forward.1} parent=1 // pred_fallthru
      _
    // Predicated region
    $region18: #{forward.1} parent=1 // pred_check
      _
    $region19: #{forward.1} parent=1 // pred_check_branch
      %46 = sbr.rel (0) target = $region21
    $region20: #{forward.1} parent=1 // pred_region
      %47 = dma.done [#allocation6], 1024
    $region21: #{forward.1} parent=1 // pred_fallthru
      _
    %v48 = vld [vmem:[%s0] sm:$0xff]
    %v49 = vld [vmem:[%s0 + $0x8] sm:$0xff]
    %v50 = vld [vmem:[%s0 + $0x10] sm:$0xff]
    %v51 = vld [vmem:[%s0 + $0x18] sm:$0xff]
    %v52 = vld [vmem:[%s0 + $0x20] sm:$0x3]
    %s53 = scalar_lea.vmem %s0, 40
    %v54 = vld [vmem:[%s53] sm:$0xff]
    %v55 = vld [vmem:[%s53 + $0x8] sm:$0xff]
    %v56 = vld [vmem:[%s53 + $0x10] sm:$0xff]
    %v57 = vld [vmem:[%s53 + $0x18] sm:$0xff]
    %v58 = vld [vmem:[%s53 + $0x20] sm:$0x3]
    %vm64 = vcmask 1041408
    %v65 = vrot.slane %v54, 6
    %v66 = vrot.slane %v55, 6
    %v67 = vsel %vm64, %v65, %v66
    %v68 = vrot.slane %v56, 6
    %v69 = vsel %vm64, %v66, %v68
    %v70 = vrot.slane %v57, 6
    %v71 = vsel %vm64, %v68, %v70
    %v72 = vrot.slane %v58, 6
    %v73 = vsel %vm64, %v70, %v72
    %v75 = vsel %vm64, %v52, %v65
    %v76 = vld [vmem:[#allocation2] sm:$0xff]
    %v77 = vld [vmem:[#allocation2 + $0x10] sm:$0xff]
    %v78 = vld [vmem:[#allocation2 + $0x20] sm:$0xff]
    %v79 = vld [vmem:[#allocation2 + $0x30] sm:$0xff]
    %v80 = vld [vmem:[#allocation2 + $0x40] sm:$0xff]
    %v81 = vld [vmem:[#allocation2 + $0x50] sm:$0xff]
    %v82 = vld [vmem:[#allocation5] ss:$0 sm:$0xff]
    %vm84 = vcmask 1045504
    %v85 = vrot.slane %v75, 2
    %v86 = vrot.slane %v67, 2
    %v87 = vsel %vm84, %v85, %v86
    %v88 = vrot.slane %v69, 2
    %v89 = vsel %vm84, %v86, %v88
    %v90 = vrot.slane %v71, 2
    %v91 = vsel %vm84, %v88, %v90
    %v92 = vrot.slane %v73, 2
    %v93 = vsel %vm84, %v90, %v92
    %vm102 = vcmask 1046528
    %v103 = vrot.slane %v48, 1
    %v104 = vrot.slane %v49, 1
    %v105 = vsel %vm102, %v103, %v104
    %v106 = vrot.slane %v50, 1
    %v107 = vsel %vm102, %v104, %v106
    %v108 = vrot.slane %v51, 1
    %v109 = vsel %vm102, %v106, %v108
    %v110 = vrot.slane %v75, 1
    %v111 = vsel %vm102, %v108, %v110
    %vm112 = vcmask 1044480
    %v113 = vrot.slane %v75, 3
    %v114 = vrot.slane %v67, 3
    %v115 = vsel %vm112, %v113, %v114
    %v116 = vrot.slane %v69, 3
    %v117 = vsel %vm112, %v114, %v116
    %v118 = vrot.slane %v71, 3
    %v119 = vsel %vm112, %v116, %v118
    %v120 = vrot.slane %v73, 3
    %v121 = vsel %vm112, %v118, %v120
    %v122 = vrot.slane %v48, 2
    %v123 = vrot.slane %v49, 2
    %v124 = vsel %vm84, %v122, %v123
    %v125 = vrot.slane %v50, 2
    %v126 = vsel %vm84, %v123, %v125
    %v127 = vrot.slane %v51, 2
    %v128 = vsel %vm84, %v125, %v127
    %v129 = vsel %vm84, %v127, %v85
    %vm130 = vcmask 1043456
    %v131 = vrot.slane %v75, 4
    %v132 = vrot.slane %v67, 4
    %v133 = vsel %vm130, %v131, %v132
    %v134 = vrot.slane %v69, 4
    %v135 = vsel %vm130, %v132, %v134
    %v136 = vrot.slane %v71, 4
    %v137 = vsel %vm130, %v134, %v136
    %v138 = vrot.slane %v73, 4
    %v139 = vsel %vm130, %v136, %v138
    %140 = vrot.lane.b32.xlu0 %v105, 16
    %v141 = vpop.permute.xlu0 %140
    %142 = vrot.lane.b32.xlu0 %v107, 16
    %v143 = vpop.permute.xlu0 %142
    %144 = vrot.lane.b32.xlu0 %v109, 16
    %v145 = vpop.permute.xlu0 %144
    %146 = vrot.lane.b32.xlu0 %v111, 16
    %v147 = vpop.permute.xlu0 %146
    %148 = vrot.lane.b32.xlu0 %v115, 16
    %v149 = vpop.permute.xlu0 %148
    %150 = vrot.lane.b32.xlu0 %v117, 16
    %v151 = vpop.permute.xlu0 %150
    %152 = vrot.lane.b32.xlu0 %v119, 16
    %v153 = vpop.permute.xlu0 %152
    %154 = vrot.lane.b32.xlu0 %v121, 16
    %v155 = vpop.permute.xlu0 %154
    %164 = vrot.lane.b32.xlu0 %v124, 32
    %v165 = vpop.permute.xlu0 %164
    %166 = vrot.lane.b32.xlu0 %v126, 32
    %v167 = vpop.permute.xlu0 %166
    %168 = vrot.lane.b32.xlu0 %v128, 32
    %v169 = vpop.permute.xlu0 %168
    %170 = vrot.lane.b32.xlu0 %v129, 32
    %v171 = vpop.permute.xlu0 %170
    %172 = vrot.lane.b32.xlu0 %v133, 32
    %v173 = vpop.permute.xlu0 %172
    %174 = vrot.lane.b32.xlu0 %v135, 32
    %v175 = vpop.permute.xlu0 %174
    %176 = vrot.lane.b32.xlu0 %v137, 32
    %v177 = vpop.permute.xlu0 %176
    %178 = vrot.lane.b32.xlu0 %v139, 32
    %v179 = vpop.permute.xlu0 %178
    %vm188 = vcmask 130048
    %v189 = vsel %vm188, %v48, %v141
    %v190 = vsel %vm188, %v49, %v143
    %v191 = vsel %vm188, %v50, %v145
    %v192 = vsel %vm188, %v51, %v147
    %v193 = vsel %vm188, %v87, %v149
    %v194 = vsel %vm188, %v89, %v151
    %v195 = vsel %vm188, %v91, %v153
    %v196 = vsel %vm188, %v93, %v155
    %vm197 = vcmask 261120
    %v198 = vsel %vm197, %v189, %v165
    %v199 = vsel %vm197, %v190, %v167
    %v200 = vsel %vm197, %v191, %v169
    %v201 = vsel %vm197, %v192, %v171
    %v202 = vsel %vm197, %v193, %v173
    %v203 = vsel %vm197, %v194, %v175
    %v204 = vsel %vm197, %v195, %v177
    %v205 = vsel %vm197, %v196, %v179
    %vm206 = vcmask 392192
    %v208 = vsel %vm206, %v198, 0
    %v211 = vsel %vm206, %v199, 0
    %v214 = vsel %vm206, %v200, 0
    %v217 = vsel %vm206, %v201, 0
    %v220 = vsel %vm206, %v202, 0
    %v223 = vsel %vm206, %v203, 0
    %v226 = vsel %vm206, %v204, 0
    %v229 = vsel %vm206, %v205, 0
    %231 = vmatprep.subr.mxu0 0.0
    %232 = vmatpush1.msra.mxu0 %v76
    %233 = vmatprep.subr.mxu0 0.0
    %234 = vmatpush1.msra.mxu0 %v77
    %235 = vmatprep.subr.mxu0 0.0
    %236 = vmatpush1.msra.mxu0 %v78
    %237 = vmatprep.subr.mxu0 0.0
    %238 = vmatpush1.msra.mxu0 %v79
    %239 = vmatprep.subr.mxu0 0.0
    %240 = vmatpush1.msra.mxu0 %v80
    %241 = vmatprep.subr.mxu0 0.0
    %242 = vmatpush1.msra.mxu0 %v81
    %243 = vmatprep.subr.mxu0 0.0
    %244 = vmatpush1.msra.mxu0 0.0
    %245 = vmatprep.subr.mxu0 0.0
    %246 = vmatpush1.msra.mxu0 0.0
    %247 = vmatprep.subr.mxu0 0.0
    %248 = vmatpush1.msra.mxu0 0.0
    %249 = vmatprep.subr.mxu0 0.0
    %250 = vmatpush1.msra.mxu0 0.0
    %251 = vmatprep.subr.mxu0 0.0
    %252 = vmatpush1.msra.mxu0 0.0
    %253 = vmatprep.subr.mxu0 0.0
    %254 = vmatpush1.msra.mxu0 0.0
    %255 = vmatprep.subr.mxu0 0.0
    %256 = vmatpush1.msra.mxu0 0.0
    %257 = vmatprep.subr.mxu0 0.0
    %258 = vmatpush1.msra.mxu0 0.0
    %259 = vmatprep.subr.mxu0 0.0
    %260 = vmatpush1.msra.mxu0 0.0
    %261 = vmatprep.subr.mxu0 0.0
    %262 = vmatpush1.msra.mxu0 0.0
    %263 = vmatprep.subr.mxu0 0.0
    %264 = vmatpush1.msra.mxu0 0.0
    %265 = vmatprep.subr.mxu0 0.0
    %266 = vmatpush1.msra.mxu0 0.0
    %267 = vmatprep.subr.mxu0 0.0
    %268 = vmatpush1.msra.mxu0 0.0
    %269 = vmatprep.subr.mxu0 0.0
    %270 = vmatpush1.msra.mxu0 0.0
    %271 = vmatprep.subr.mxu0 0.0
    %272 = vmatpush1.msra.mxu0 0.0
    %273 = vmatprep.subr.mxu0 0.0
    %274 = vmatpush1.msra.mxu0 0.0
    %275 = vmatprep.subr.mxu0 0.0
    %276 = vmatpush1.msra.mxu0 0.0
    %277 = vmatprep.subr.mxu0 0.0
    %278 = vmatpush1.msra.mxu0 0.0
    %279 = vmatprep.subr.mxu0 0.0
    %280 = vmatpush1.msra.mxu0 0.0
    %281 = vmatprep.subr.mxu0 0.0
    %282 = vmatpush1.msra.mxu0 0.0
    %283 = vmatprep.subr.mxu0 0.0
    %284 = vmatpush1.msra.mxu0 0.0
    %285 = vmatprep.subr.mxu0 0.0
    %286 = vmatpush1.msra.mxu0 0.0
    %287 = vmatprep.subr.mxu0 0.0
    %288 = vmatpush1.msra.mxu0 0.0
    %289 = vmatprep.subr.mxu0 0.0
    %290 = vmatpush1.msra.mxu0 0.0
    %291 = vmatprep.subr.mxu0 0.0
    %292 = vmatpush1.msra.mxu0 0.0
    %293 = vmatprep.subr.mxu0 0.0
    %294 = vmatpush1.msra.mxu0 0.0
    %295 = vmatprep.mubr.f32.mxu0 0.0
    %296 = vmatmul.mubr.f32.gmra.mrb[0].mxu0 %v208
    %v297 = vpop.f32.mrb[0].mxu0
    %v298 = vadd.f32 %v82, %v297
    %v299 = vpop.f32.mrb[0].mxu0
    %300 = vmatprep.mubr.f32.mxu0 0.0
    %301 = vmatmul.mubr.f32.gmra.mrb[0].mxu0 %v211
    %v302 = vpop.f32.mrb[0].mxu0
    %v303 = vadd.f32 %v82, %v302
    %v304 = vpop.f32.mrb[0].mxu0
    %305 = vmatprep.mubr.f32.mxu0 0.0
    %306 = vmatmul.mubr.f32.gmra.mrb[0].mxu0 %v214
    %v307 = vpop.f32.mrb[0].mxu0
    %v308 = vadd.f32 %v82, %v307
    %v309 = vpop.f32.mrb[0].mxu0
    %310 = vmatprep.mubr.f32.mxu0 0.0
    %311 = vmatmul.mubr.f32.gmra.mrb[0].mxu0 %v217
    %v312 = vpop.f32.mrb[0].mxu0
    %v313 = vadd.f32 %v82, %v312
    %v314 = vpop.f32.mrb[0].mxu0
    %315 = vmatprep.mubr.f32.mxu0 0.0
    %316 = vmatmul.mubr.f32.gmra.mrb[0].mxu0 %v220
    %v317 = vpop.f32.mrb[0].mxu0
    %v318 = vadd.f32 %v82, %v317
    %v319 = vpop.f32.mrb[0].mxu0
    %320 = vmatprep.mubr.f32.mxu0 0.0
    %321 = vmatmul.mubr.f32.gmra.mrb[0].mxu0 %v223
    %v322 = vpop.f32.mrb[0].mxu0
    %v323 = vadd.f32 %v82, %v322
    %v324 = vpop.f32.mrb[0].mxu0
    %325 = vmatprep.mubr.f32.mxu0 0.0
    %326 = vmatmul.mubr.f32.gmra.mrb[0].mxu0 %v226
    %v327 = vpop.f32.mrb[0].mxu0
    %v328 = vadd.f32 %v82, %v327
    %v329 = vpop.f32.mrb[0].mxu0
    %330 = vmatprep.mubr.f32.mxu0 0.0
    %331 = vmatmul.mubr.f32.gmra.mrb[0].mxu0 %v229
    %v332 = vpop.f32.mrb[0].mxu0
    %v333 = vadd.f32 %v82, %v332
    %v334 = vpop.f32.mrb[0].mxu0
    %335 = vdwg.mxu0
    %v336 = vld [vmem:[#allocation5 + $0x1] ss:$0 sm:$0xff]
    %v337 = vld [vmem:[#allocation5 + $0x2] ss:$0 sm:$0xff]
    %v338 = vsel %vm197, %v298, 0.0
    %v339 = vsel %vm197, %v303, 0.0
    %v340 = vadd.f32 %v338, %v339
    %v341 = vsel %vm197, %v308, 0.0
    %v342 = vadd.f32 %v340, %v341
    %v343 = vsel %vm197, %v313, 0.0
    %v344 = vadd.f32 %v342, %v343
    %v345 = vsel %vm197, %v318, 0.0
    %v346 = vadd.f32 %v344, %v345
    %v347 = vsel %vm197, %v323, 0.0
    %v348 = vadd.f32 %v346, %v347
    %v349 = vsel %vm197, %v328, 0.0
    %v350 = vadd.f32 %v348, %v349
    %v351 = vsel %vm197, %v333, 0.0
    %v352 = vadd.f32 %v350, %v351
    %v353 = vrot.slane %v352, 4
    %v354 = vadd.f32 %v352, %v353
    %v355 = vrot.slane %v354, 2
    %v356 = vadd.f32 %v354, %v355
    %v357 = vrot.slane %v356, 1
    %v358 = vadd.f32 %v356, %v357
    %v359 = vrcp.pop 64.0
    %v360 = vmul.f32 %v358, %v359
    %v361 = vsub.f32 %v298, %v360
    %v362 = vsub.f32 %v303, %v360
    %v363 = vsub.f32 %v308, %v360
    %v364 = vsub.f32 %v313, %v360
    %v365 = vsub.f32 %v318, %v360
    %v366 = vsub.f32 %v323, %v360
    %v367 = vsub.f32 %v328, %v360
    %v368 = vsub.f32 %v333, %v360
    %v369 = vmul.f32 %v361, %v361
    %v370 = vmul.f32 %v362, %v362
    %v371 = vmul.f32 %v363, %v363
    %v372 = vmul.f32 %v364, %v364
    %v373 = vmul.f32 %v365, %v365
    %v374 = vmul.f32 %v366, %v366
    %v375 = vmul.f32 %v367, %v367
    %v376 = vmul.f32 %v368, %v368
    %v377 = vsel %vm197, %v369, 0.0
    %v378 = vsel %vm197, %v370, 0.0
    %v379 = vadd.f32 %v377, %v378
    %v380 = vsel %vm197, %v371, 0.0
    %v381 = vadd.f32 %v379, %v380
    %v382 = vsel %vm197, %v372, 0.0
    %v383 = vadd.f32 %v381, %v382
    %v384 = vsel %vm197, %v373, 0.0
    %v385 = vadd.f32 %v383, %v384
    %v386 = vsel %vm197, %v374, 0.0
    %v387 = vadd.f32 %v385, %v386
    %v388 = vsel %vm197, %v375, 0.0
    %v389 = vadd.f32 %v387, %v388
    %v390 = vsel %vm197, %v376, 0.0
    %v391 = vadd.f32 %v389, %v390
    %v392 = vrot.slane %v391, 4
    %v393 = vadd.f32 %v391, %v392
    %v394 = vrot.slane %v393, 2
    %v395 = vadd.f32 %v393, %v394
    %v396 = vrot.slane %v395, 1
    %v397 = vadd.f32 %v395, %v396
    %v398 = vmul.f32 %v397, %v359
    %v399 = vadd.f32 %v398, 1e-05
    %v400 = vrsqrt.pop %v399
    %v401 = vmul.f32 %v336, %v400
    %v402 = vmul.f32 %v361, %v401
    %v403 = vmul.f32 %v362, %v401
    %v404 = vmul.f32 %v363, %v401
    %v405 = vmul.f32 %v364, %v401
    %v406 = vmul.f32 %v365, %v401
    %v407 = vmul.f32 %v366, %v401
    %v408 = vmul.f32 %v367, %v401
    %v409 = vmul.f32 %v368, %v401
    %v410 = vadd.f32 %v402, %v337
    %v411 = vadd.f32 %v403, %v337
    %v412 = vadd.f32 %v404, %v337
    %v413 = vadd.f32 %v405, %v337
    %v414 = vadd.f32 %v406, %v337
    %v415 = vadd.f32 %v407, %v337
    %v416 = vadd.f32 %v408, %v337
    %v417 = vadd.f32 %v409, %v337
    %v418 = vmul.f32 %v410, 0.2
    %v419 = vmul.f32 %v411, 0.2
    %v420 = vmul.f32 %v412, 0.2
    %v421 = vmul.f32 %v413, 0.2
    %v422 = vmul.f32 %v414, 0.2
    %v423 = vmul.f32 %v415, 0.2
    %v424 = vmul.f32 %v416, 0.2
    %v425 = vmul.f32 %v417, 0.2
    %v426 = vmax.f32 %v410, %v418
    %v427 = vmax.f32 %v411, %v419
    %v428 = vmax.f32 %v412, %v420
    %v429 = vmax.f32 %v413, %v421
    %v430 = vmax.f32 %v414, %v422
    %v431 = vmax.f32 %v415, %v423
    %v432 = vmax.f32 %v416, %v424
    %v433 = vmax.f32 %v417, %v425
    %v434 = vld [vmem:[#allocation2 + $0x60] sm:$0xff]
    %v435 = vld [vmem:[#allocation2 + $0x70] sm:$0xff]
    %v436 = vld [vmem:[#allocation2 + $0x80] sm:$0xff]
    %v437 = vld [vmem:[#allocation2 + $0x90] sm:$0xff]
    %v438 = vld [vmem:[#allocation2 + $0xa0] sm:$0xff]
    %v439 = vld [vmem:[#allocation2 + $0xb0] sm:$0xff]
    %v440 = vld [vmem:[#allocation2 + $0xc0] sm:$0xff]
    %v441 = vld [vmem:[#allocation2 + $0xd0] sm:$0xff]
    %v442 = vld [vmem:[#allocation2 + $0xe0] sm:$0xff]
    %v443 = vld [vmem:[#allocation2 + $0xf0] sm:$0xff]
    %v444 = vld [vmem:[#allocation2 + $0x100] sm:$0xff]
    %v445 = vld [vmem:[#allocation2 + $0x110] sm:$0xff]
    %v446 = vld [vmem:[#allocation5 + $0x3] ss:$0 sm:$0xff]
    %v451 = vrot.slane %v430, 2
    %v452 = vrot.slane %v431, 2
    %v453 = vsel %vm84, %v451, %v452
    %v454 = vrot.slane %v432, 2
    %v455 = vsel %vm84, %v452, %v454
    %v456 = vrot.slane %v433, 2
    %v457 = vsel %vm84, %v454, %v456
    %v463 = vsel %vm84, %v429, %v451
    %v468 = vrot.slane %v426, 1
    %v469 = vrot.slane %v427, 1
    %v470 = vsel %vm102, %v468, %v469
    %v471 = vrot.slane %v428, 1
    %v472 = vsel %vm102, %v469, %v471
    %v473 = vrot.slane %v429, 1
    %v474 = vsel %vm102, %v471, %v473
    %v476 = vrot.slane %v430, 3
    %v477 = vrot.slane %v431, 3
    %v478 = vsel %vm112, %v476, %v477
    %v479 = vrot.slane %v432, 3
    %v480 = vsel %vm112, %v477, %v479
    %v481 = vrot.slane %v433, 3
    %v482 = vsel %vm112, %v479, %v481
    %v484 = vsel %vm84, %v473, %v476
    %v485 = vrot.slane %v426, 2
    %v486 = vrot.slane %v427, 2
    %v487 = vsel %vm84, %v485, %v486
    %v488 = vrot.slane %v428, 2
    %v489 = vsel %vm84, %v486, %v488
    %v490 = vrot.slane %v429, 2
    %v491 = vsel %vm84, %v488, %v490
    %v493 = vrot.slane %v430, 4
    %v494 = vrot.slane %v431, 4
    %v495 = vsel %vm130, %v493, %v494
    %v496 = vrot.slane %v432, 4
    %v497 = vsel %vm130, %v494, %v496
    %v498 = vrot.slane %v433, 4
    %v499 = vsel %vm130, %v496, %v498
    %v501 = vsel %vm84, %v490, %v493
    %503 = vrot.lane.b32.xlu0 %v470, 32
    %v504 = vpop.permute.xlu0 %503
    %505 = vrot.lane.b32.xlu0 %v472, 32
    %v506 = vpop.permute.xlu0 %505
    %507 = vrot.lane.b32.xlu0 %v474, 32
    %v508 = vpop.permute.xlu0 %507
    %509 = vrot.lane.b32.xlu0 %v484, 32
    %v510 = vpop.permute.xlu0 %509
    %511 = vrot.lane.b32.xlu0 %v478, 32
    %v512 = vpop.permute.xlu0 %511
    %513 = vrot.lane.b32.xlu0 %v480, 32
    %v514 = vpop.permute.xlu0 %513
    %515 = vrot.lane.b32.xlu0 %v482, 32
    %v516 = vpop.permute.xlu0 %515
    %517 = vrot.lane.b32.xlu0 %v481, 32
    %v518 = vpop.permute.xlu0 %517
    %528 = vrot.lane.b32.xlu0 %v487, 64
    %v529 = vpop.permute.xlu0 %528
    %530 = vrot.lane.b32.xlu0 %v489, 64
    %v531 = vpop.permute.xlu0 %530
    %532 = vrot.lane.b32.xlu0 %v491, 64
    %v533 = vpop.permute.xlu0 %532
    %534 = vrot.lane.b32.xlu0 %v501, 64
    %v535 = vpop.permute.xlu0 %534
    %536 = vrot.lane.b32.xlu0 %v495, 64
    %v537 = vpop.permute.xlu0 %536
    %538 = vrot.lane.b32.xlu0 %v497, 64
    %v539 = vpop.permute.xlu0 %538
    %540 = vrot.lane.b32.xlu0 %v499, 64
    %v541 = vpop.permute.xlu0 %540
    %542 = vrot.lane.b32.xlu0 %v498, 64
    %v543 = vpop.permute.xlu0 %542
    %v552 = vsel %vm197, %v426, %v504
    %v553 = vsel %vm197, %v427, %v506
    %v554 = vsel %vm197, %v428, %v508
    %v555 = vsel %vm197, %v463, %v510
    %v556 = vsel %vm197, %v453, %v512
    %v557 = vsel %vm197, %v455, %v514
    %v558 = vsel %vm197, %v457, %v516
    %v559 = vsel %vm197, %v456, %v518
    %vm560 = vcmask 523264
    %v561 = vsel %vm560, %v552, %v529
    %v562 = vsel %vm560, %v553, %v531
    %v563 = vsel %vm560, %v554, %v533
    %v564 = vsel %vm560, %v555, %v535
    %v565 = vsel %vm560, %v556, %v537
    %v566 = vsel %vm560, %v557, %v539
    %v567 = vsel %vm560, %v558, %v541
    %v568 = vsel %vm560, %v559, %v543
    %vm569 = vcmask 785408
    %v571 = vsel %vm569, %v561, 0
    %v574 = vsel %vm569, %v562, 0
    %v577 = vsel %vm569, %v563, 0
    %v580 = vsel %vm569, %v564, 0
    %v583 = vsel %vm569, %v565, 0
    %v586 = vsel %vm569, %v566, 0
    %v589 = vsel %vm569, %v567, 0
    %v592 = vsel %vm569, %v568, 0
    %594 = vmatprep.subr.mxu0 0.0
    %595 = vmatpush1.msra.mxu0 %v434
    %596 = vmatprep.subr.mxu0 0.0
    %597 = vmatpush1.msra.mxu0 %v435
    %598 = vmatprep.subr.mxu0 0.0
    %599 = vmatpush1.msra.mxu0 %v436
    %600 = vmatprep.subr.mxu0 0.0
    %601 = vmatpush1.msra.mxu0 %v437
    %602 = vmatprep.subr.mxu0 0.0
    %603 = vmatpush1.msra.mxu0 %v438
    %604 = vmatprep.subr.mxu0 0.0
    %605 = vmatpush1.msra.mxu0 %v439
    %606 = vmatprep.subr.mxu0 0.0
    %607 = vmatpush1.msra.mxu0 %v440
    %608 = vmatprep.subr.mxu0 0.0
    %609 = vmatpush1.msra.mxu0 %v441
    %610 = vmatprep.subr.mxu0 0.0
    %611 = vmatpush1.msra.mxu0 %v442
    %612 = vmatprep.subr.mxu0 0.0
    %613 = vmatpush1.msra.mxu0 %v443
    %614 = vmatprep.subr.mxu0 0.0
    %615 = vmatpush1.msra.mxu0 %v444
    %616 = vmatprep.subr.mxu0 0.0
    %617 = vmatpush1.msra.mxu0 %v445
    %618 = vmatprep.subr.mxu0 0.0
    %619 = vmatpush1.msra.mxu0 0.0
    %620 = vmatprep.subr.mxu0 0.0
    %621 = vmatpush1.msra.mxu0 0.0
    %622 = vmatprep.subr.mxu0 0.0
    %623 = vmatpush1.msra.mxu0 0.0
    %624 = vmatprep.subr.mxu0 0.0
    %625 = vmatpush1.msra.mxu0 0.0
    %626 = vmatprep.subr.mxu0 0.0
    %627 = vmatpush1.msra.mxu0 0.0
    %628 = vmatprep.subr.mxu0 0.0
    %629 = vmatpush1.msra.mxu0 0.0
    %630 = vmatprep.subr.mxu0 0.0
    %631 = vmatpush1.msra.mxu0 0.0
    %632 = vmatprep.subr.mxu0 0.0
    %633 = vmatpush1.msra.mxu0 0.0
    %634 = vmatprep.subr.mxu0 0.0
    %635 = vmatpush1.msra.mxu0 0.0
    %636 = vmatprep.subr.mxu0 0.0
    %637 = vmatpush1.msra.mxu0 0.0
    %638 = vmatprep.subr.mxu0 0.0
    %639 = vmatpush1.msra.mxu0 0.0
    %640 = vmatprep.subr.mxu0 0.0
    %641 = vmatpush1.msra.mxu0 0.0
    %642 = vmatprep.subr.mxu0 0.0
    %643 = vmatpush1.msra.mxu0 0.0
    %644 = vmatprep.subr.mxu0 0.0
    %645 = vmatpush1.msra.mxu0 0.0
    %646 = vmatprep.subr.mxu0 0.0
    %647 = vmatpush1.msra.mxu0 0.0
    %648 = vmatprep.subr.mxu0 0.0
    %649 = vmatpush1.msra.mxu0 0.0
    %650 = vmatprep.subr.mxu0 0.0
    %651 = vmatpush1.msra.mxu0 0.0
    %652 = vmatprep.subr.mxu0 0.0
    %653 = vmatpush1.msra.mxu0 0.0
    %654 = vmatprep.subr.mxu0 0.0
    %655 = vmatpush1.msra.mxu0 0.0
    %656 = vmatprep.subr.mxu0 0.0
    %657 = vmatpush1.msra.mxu0 0.0
    %658 = vmatprep.mubr.f32.mxu0 0.0
    %659 = vmatmul.mubr.f32.gmra.mrb[0].mxu0 %v571
    %v660 = vpop.f32.mrb[0].mxu0
    %v661 = vadd.f32 %v446, %v660
    %v662 = vpop.f32.mrb[0].mxu0
    %663 = vmatprep.mubr.f32.mxu0 0.0
    %664 = vmatmul.mubr.f32.gmra.mrb[0].mxu0 %v574
    %v665 = vpop.f32.mrb[0].mxu0
    %v666 = vadd.f32 %v446, %v665
    %v667 = vpop.f32.mrb[0].mxu0
    %668 = vmatprep.mubr.f32.mxu0 0.0
    %669 = vmatmul.mubr.f32.gmra.mrb[0].mxu0 %v577
    %v670 = vpop.f32.mrb[0].mxu0
    %v671 = vadd.f32 %v446, %v670
    %v672 = vpop.f32.mrb[0].mxu0
    %673 = vmatprep.mubr.f32.mxu0 0.0
    %674 = vmatmul.mubr.f32.gmra.mrb[0].mxu0 %v580
    %v675 = vpop.f32.mrb[0].mxu0
    %v676 = vadd.f32 %v446, %v675
    %v677 = vpop.f32.mrb[0].mxu0
    %678 = vmatprep.mubr.f32.mxu0 0.0
    %679 = vmatmul.mubr.f32.gmra.mrb[0].mxu0 %v583
    %v680 = vpop.f32.mrb[0].mxu0
    %v681 = vadd.f32 %v446, %v680
    %v682 = vpop.f32.mrb[0].mxu0
    %683 = vmatprep.mubr.f32.mxu0 0.0
    %684 = vmatmul.mubr.f32.gmra.mrb[0].mxu0 %v586
    %v685 = vpop.f32.mrb[0].mxu0
    %v686 = vadd.f32 %v446, %v685
    %v687 = vpop.f32.mrb[0].mxu0
    %688 = vmatprep.mubr.f32.mxu0 0.0
    %689 = vmatmul.mubr.f32.gmra.mrb[0].mxu0 %v589
    %v690 = vpop.f32.mrb[0].mxu0
    %v691 = vadd.f32 %v446, %v690
    %v692 = vpop.f32.mrb[0].mxu0
    %693 = vmatprep.mubr.f32.mxu0 0.0
    %694 = vmatmul.mubr.f32.gmra.mrb[0].mxu0 %v592
    %v695 = vpop.f32.mrb[0].mxu0
    %v696 = vadd.f32 %v446, %v695
    %v697 = vpop.f32.mrb[0].mxu0
    %698 = vdwg.mxu0
    %v699 = vld [vmem:[#allocation5 + $0x4] ss:$0 sm:$0xff]
    %v700 = vld [vmem:[#allocation5 + $0x5] ss:$0 sm:$0xff]
    %v701 = vsel %vm560, %v661, 0.0
    %v702 = vsel %vm560, %v666, 0.0
    %v703 = vadd.f32 %v701, %v702
    %v704 = vsel %vm560, %v671, 0.0
    %v705 = vadd.f32 %v703, %v704
    %v706 = vsel %vm560, %v676, 0.0
    %v707 = vadd.f32 %v705, %v706
    %v708 = vsel %vm560, %v681, 0.0
    %v709 = vadd.f32 %v707, %v708
    %v710 = vsel %vm560, %v686, 0.0
    %v711 = vadd.f32 %v709, %v710
    %v712 = vsel %vm560, %v691, 0.0
    %v713 = vadd.f32 %v711, %v712
    %vm714 = vcmask 519168
    %v715 = vsel %vm714, %v696, 0.0
    %v716 = vadd.f32 %v713, %v715
    %v717 = vrot.slane %v716, 4
    %v718 = vadd.f32 %v716, %v717
    %v719 = vrot.slane %v718, 2
    %v720 = vadd.f32 %v718, %v719
    %v721 = vrot.slane %v720, 1
    %v722 = vadd.f32 %v720, %v721
    %v723 = vrcp.pop 60.0
    %v724 = vmul.f32 %v722, %v723
    %v725 = vsub.f32 %v661, %v724
    %v726 = vsub.f32 %v666, %v724
    %v727 = vsub.f32 %v671, %v724
    %v728 = vsub.f32 %v676, %v724
    %v729 = vsub.f32 %v681, %v724
    %v730 = vsub.f32 %v686, %v724
    %v731 = vsub.f32 %v691, %v724
    %v732 = vsub.f32 %v696, %v724
    %v733 = vmul.f32 %v725, %v725
    %v734 = vmul.f32 %v726, %v726
    %v735 = vmul.f32 %v727, %v727
    %v736 = vmul.f32 %v728, %v728
    %v737 = vmul.f32 %v729, %v729
    %v738 = vmul.f32 %v730, %v730
    %v739 = vmul.f32 %v731, %v731
    %v740 = vmul.f32 %v732, %v732
    %v741 = vsel %vm560, %v733, 0.0
    %v742 = vsel %vm560, %v734, 0.0
    %v743 = vadd.f32 %v741, %v742
    %v744 = vsel %vm560, %v735, 0.0
    %v745 = vadd.f32 %v743, %v744
    %v746 = vsel %vm560, %v736, 0.0
    %v747 = vadd.f32 %v745, %v746
    %v748 = vsel %vm560, %v737, 0.0
    %v749 = vadd.f32 %v747, %v748
    %v750 = vsel %vm560, %v738, 0.0
    %v751 = vadd.f32 %v749, %v750
    %v752 = vsel %vm560, %v739, 0.0
    %v753 = vadd.f32 %v751, %v752
    %v754 = vsel %vm714, %v740, 0.0
    %v755 = vadd.f32 %v753, %v754
    %v756 = vrot.slane %v755, 4
    %v757 = vadd.f32 %v755, %v756
    %v758 = vrot.slane %v757, 2
    %v759 = vadd.f32 %v757, %v758
    %v760 = vrot.slane %v759, 1
    %v761 = vadd.f32 %v759, %v760
    %v762 = vmul.f32 %v761, %v723
    %v763 = vadd.f32 %v762, 1e-05
    %v764 = vrsqrt.pop %v763
    %v765 = vmul.f32 %v699, %v764
    %v766 = vmul.f32 %v725, %v765
    %v767 = vmul.f32 %v726, %v765
    %v768 = vmul.f32 %v727, %v765
    %v769 = vmul.f32 %v728, %v765
    %v770 = vmul.f32 %v729, %v765
    %v771 = vmul.f32 %v730, %v765
    %v772 = vmul.f32 %v731, %v765
    %v773 = vmul.f32 %v732, %v765
    %v774 = vadd.f32 %v766, %v700
    %v775 = vadd.f32 %v767, %v700
    %v776 = vadd.f32 %v768, %v700
    %v777 = vadd.f32 %v769, %v700
    %v778 = vadd.f32 %v770, %v700
    %v779 = vadd.f32 %v771, %v700
    %v780 = vadd.f32 %v772, %v700
    %v781 = vadd.f32 %v773, %v700
    %v782 = vmul.f32 %v774, 0.2
    %v783 = vmul.f32 %v775, 0.2
    %v784 = vmul.f32 %v776, 0.2
    %v785 = vmul.f32 %v777, 0.2
    %v786 = vmul.f32 %v778, 0.2
    %v787 = vmul.f32 %v779, 0.2
    %v788 = vmul.f32 %v780, 0.2
    %v789 = vmul.f32 %v781, 0.2
    %v790 = vmax.f32 %v774, %v782
    %v791 = vmax.f32 %v775, %v783
    %v792 = vmax.f32 %v776, %v784
    %v793 = vmax.f32 %v777, %v785
    %v794 = vmax.f32 %v778, %v786
    %v795 = vmax.f32 %v779, %v787
    %v796 = vmax.f32 %v780, %v788
    %v797 = vmax.f32 %v781, %v789
    %v798 = vld [vmem:[#allocation2 + $0x120] sm:$0xff]
    %v799 = vld [vmem:[#allocation2 + $0x130] sm:$0xff]
    %v800 = vld [vmem:[#allocation2 + $0x140] sm:$0xff]
    %v801 = vld [vmem:[#allocation2 + $0x150] sm:$0xff]
    %v802 = vld [vmem:[#allocation2 + $0x160] sm:$0xff]
    %v803 = vld [vmem:[#allocation2 + $0x170] sm:$0xff]
    %v804 = vld [vmem:[#allocation2 + $0x180] sm:$0xff]
    %v805 = vld [vmem:[#allocation2 + $0x190] sm:$0xff]
    %v806 = vld [vmem:[#allocation2 + $0x1a0] sm:$0xff]
    %v807 = vld [vmem:[#allocation2 + $0x1b0] sm:$0xff]
    %v808 = vld [vmem:[#allocation2 + $0x1c0] sm:$0xff]
    %v809 = vld [vmem:[#allocation2 + $0x1d0] sm:$0xff]
    %v810 = vld [vmem:[#allocation2 + $0x1e0] sm:$0xff]
    %v811 = vld [vmem:[#allocation2 + $0x1f0] sm:$0xff]
    %v812 = vld [vmem:[#allocation2 + $0x200] sm:$0xff]
    %v813 = vld [vmem:[#allocation2 + $0x210] sm:$0xff]
    %v814 = vld [vmem:[#allocation2 + $0x220] sm:$0xff]
    %v815 = vld [vmem:[#allocation2 + $0x230] sm:$0xff]
    %v816 = vld [vmem:[#allocation2 + $0x240] sm:$0xff]
    %v817 = vld [vmem:[#allocation2 + $0x250] sm:$0xff]
    %v818 = vld [vmem:[#allocation2 + $0x260] sm:$0xff]
    %v819 = vld [vmem:[#allocation2 + $0x270] sm:$0xff]
    %v820 = vld [vmem:[#allocation2 + $0x280] sm:$0xff]
    %v821 = vld [vmem:[#allocation2 + $0x290] sm:$0xff]
    %v822 = vld [vmem:[#allocation2 + $0x2a0] sm:$0xff]
    %v823 = vld [vmem:[#allocation2 + $0x2b0] sm:$0xff]
    %v824 = vld [vmem:[#allocation2 + $0x2c0] sm:$0xff]
    %v825 = vld [vmem:[#allocation2 + $0x2d0] sm:$0xff]
    %v826 = vld [vmem:[#allocation2 + $0x2e0] sm:$0xff]
    %v827 = vld [vmem:[#allocation2 + $0x2f0] sm:$0xff]
    %v828 = vld [vmem:[#allocation2 + $0x300] sm:$0xff]
    %v829 = vld [vmem:[#allocation2 + $0x310] sm:$0xff]
    %v830 = vld [vmem:[#allocation5 + $0x6] ss:$0 sm:$0xff]
    %v836 = vrot.slane %v793, 3
    %v837 = vrot.slane %v794, 3
    %v838 = vsel %vm112, %v836, %v837
    %v839 = vrot.slane %v795, 3
    %v840 = vsel %vm112, %v837, %v839
    %v841 = vrot.slane %v796, 3
    %v842 = vsel %vm112, %v839, %v841
    %v843 = vrot.slane %v797, 3
    %v844 = vsel %vm112, %v841, %v843
    %vm849 = vcmask 1042432
    %v850 = vsel %vm849, %v793, %v838
    %v854 = vrot.slane %v790, 1
    %v855 = vrot.slane %v791, 1
    %v856 = vsel %vm102, %v854, %v855
    %v857 = vrot.slane %v792, 1
    %v858 = vsel %vm102, %v855, %v857
    %v859 = vrot.slane %v793, 1
    %v860 = vsel %vm102, %v857, %v859
    %v862 = vrot.slane %v793, 4
    %v863 = vrot.slane %v794, 4
    %v864 = vsel %vm130, %v862, %v863
    %v865 = vrot.slane %v795, 4
    %v866 = vsel %vm130, %v863, %v865
    %v867 = vrot.slane %v796, 4
    %v868 = vsel %vm130, %v865, %v867
    %v869 = vrot.slane %v797, 4
    %v870 = vsel %vm130, %v867, %v869
    %v872 = vsel %vm849, %v859, %v864
    %v873 = vrot.slane %v790, 2
    %v874 = vrot.slane %v791, 2
    %v875 = vsel %vm84, %v873, %v874
    %v876 = vrot.slane %v792, 2
    %v877 = vsel %vm84, %v874, %v876
    %v878 = vrot.slane %v793, 2
    %v879 = vsel %vm84, %v876, %v878
    %v884 = vrot.slane %v794, 5
    %v885 = vrot.slane %v795, 5
    %v886 = vsel %vm849, %v884, %v885
    %v887 = vrot.slane %v796, 5
    %v888 = vsel %vm849, %v885, %v887
    %v889 = vrot.slane %v797, 5
    %v890 = vsel %vm849, %v887, %v889
    %v895 = vsel %vm849, %v878, %v884
    %v896 = vrot.slane %v790, 3
    %v897 = vrot.slane %v791, 3
    %v898 = vsel %vm112, %v896, %v897
    %v899 = vrot.slane %v792, 3
    %v900 = vsel %vm112, %v897, %v899
    %v901 = vsel %vm112, %v899, %v836
    %v903 = vrot.slane %v794, 6
    %v904 = vrot.slane %v795, 6
    %v905 = vsel %vm64, %v903, %v904
    %v906 = vrot.slane %v796, 6
    %v907 = vsel %vm64, %v904, %v906
    %v908 = vrot.slane %v797, 6
    %v909 = vsel %vm64, %v906, %v908
    %v911 = vsel %vm849, %v836, %v903
    %913 = vrot.lane.b32.xlu0 %v856, 64
    %v914 = vpop.permute.xlu0 %913
    %915 = vrot.lane.b32.xlu0 %v858, 64
    %v916 = vpop.permute.xlu0 %915
    %917 = vrot.lane.b32.xlu0 %v860, 64
    %v918 = vpop.permute.xlu0 %917
    %919 = vrot.lane.b32.xlu0 %v872, 64
    %v920 = vpop.permute.xlu0 %919
    %921 = vrot.lane.b32.xlu0 %v866, 64
    %v922 = vpop.permute.xlu0 %921
    %923 = vrot.lane.b32.xlu0 %v868, 64
    %v924 = vpop.permute.xlu0 %923
    %925 = vrot.lane.b32.xlu0 %v870, 64
    %v926 = vpop.permute.xlu0 %925
    %935 = vrot.lane.b32.xlu0 %v898, 64
    %v936 = vpop.permute.xlu0 %935
    %937 = vrot.lane.b32.xlu0 %v900, 64
    %v938 = vpop.permute.xlu0 %937
    %939 = vrot.lane.b32.xlu0 %v901, 64
    %v940 = vpop.permute.xlu0 %939
    %941 = vrot.lane.b32.xlu0 %v911, 64
    %v942 = vpop.permute.xlu0 %941
    %943 = vrot.lane.b32.xlu0 %v905, 64
    %v944 = vpop.permute.xlu0 %943
    %945 = vrot.lane.b32.xlu0 %v907, 64
    %v946 = vpop.permute.xlu0 %945
    %947 = vrot.lane.b32.xlu0 %v909, 64
    %v948 = vpop.permute.xlu0 %947
    %v956 = vsel %vm560, %v790, %v914
    %v957 = vsel %vm560, %v791, %v916
    %v958 = vsel %vm560, %v792, %v918
    %v959 = vsel %vm560, %v850, %v920
    %v960 = vsel %vm560, %v840, %v922
    %v961 = vsel %vm560, %v842, %v924
    %v962 = vsel %vm560, %v844, %v926
    %v963 = vsel %vm560, %v875, %v936
    %v964 = vsel %vm560, %v877, %v938
    %v965 = vsel %vm560, %v879, %v940
    %v966 = vsel %vm560, %v895, %v942
    %v967 = vsel %vm560, %v886, %v944
    %v968 = vsel %vm560, %v888, %v946
    %v969 = vsel %vm560, %v890, %v948
    %970 = vmatprep.subr.mxu0 0.0
    %971 = vmatpush1.msra.mxu0 %v798
    %972 = vmatprep.subr.mxu0 0.0
    %973 = vmatpush1.msra.mxu0 %v799
    %974 = vmatprep.subr.mxu0 0.0
    %975 = vmatpush1.msra.mxu0 %v800
    %976 = vmatprep.subr.mxu0 0.0
    %977 = vmatpush1.msra.mxu0 %v801
    %978 = vmatprep.subr.mxu0 0.0
    %979 = vmatpush1.msra.mxu0 %v802
    %980 = vmatprep.subr.mxu0 0.0
    %981 = vmatpush1.msra.mxu0 %v803
    %982 = vmatprep.subr.mxu0 0.0
    %983 = vmatpush1.msra.mxu0 %v804
    %984 = vmatprep.subr.mxu0 0.0
    %985 = vmatpush1.msra.mxu0 %v805
    %986 = vmatprep.subr.mxu0 0.0
    %987 = vmatpush1.msra.mxu0 %v806
    %988 = vmatprep.subr.mxu0 0.0
    %989 = vmatpush1.msra.mxu0 %v807
    %990 = vmatprep.subr.mxu0 0.0
    %991 = vmatpush1.msra.mxu0 %v808
    %992 = vmatprep.subr.mxu0 0.0
    %993 = vmatpush1.msra.mxu0 %v809
    %994 = vmatprep.subr.mxu0 0.0
    %995 = vmatpush1.msra.mxu0 %v810
    %996 = vmatprep.subr.mxu0 0.0
    %997 = vmatpush1.msra.mxu0 %v811
    %998 = vmatprep.subr.mxu0 0.0
    %999 = vmatpush1.msra.mxu0 %v812
    %1000 = vmatprep.subr.mxu0 0.0
    %1001 = vmatpush1.msra.mxu0 %v813
    %1002 = vmatprep.subr.mxu0 0.0
    %1003 = vmatpush1.msra.mxu0 %v814
    %1004 = vmatprep.subr.mxu0 0.0
    %1005 = vmatpush1.msra.mxu0 %v815
    %1006 = vmatprep.subr.mxu0 0.0
    %1007 = vmatpush1.msra.mxu0 %v816
    %1008 = vmatprep.subr.mxu0 0.0
    %1009 = vmatpush1.msra.mxu0 %v817
    %1010 = vmatprep.subr.mxu0 0.0
    %1011 = vmatpush1.msra.mxu0 %v818
    %1012 = vmatprep.subr.mxu0 0.0
    %1013 = vmatpush1.msra.mxu0 %v819
    %1014 = vmatprep.subr.mxu0 0.0
    %1015 = vmatpush1.msra.mxu0 %v820
    %1016 = vmatprep.subr.mxu0 0.0
    %1017 = vmatpush1.msra.mxu0 %v821
    %1018 = vmatprep.subr.mxu0 0.0
    %1019 = vmatpush1.msra.mxu0 %v822
    %1020 = vmatprep.subr.mxu0 0.0
    %1021 = vmatpush1.msra.mxu0 %v823
    %1022 = vmatprep.subr.mxu0 0.0
    %1023 = vmatpush1.msra.mxu0 %v824
    %1024 = vmatprep.subr.mxu0 0.0
    %1025 = vmatpush1.msra.mxu0 %v825
    %1026 = vmatprep.subr.mxu0 0.0
    %1027 = vmatpush1.msra.mxu0 %v826
    %1028 = vmatprep.subr.mxu0 0.0
    %1029 = vmatpush1.msra.mxu0 %v827
    %1030 = vmatprep.subr.mxu0 0.0
    %1031 = vmatpush1.msra.mxu0 %v828
    %1032 = vmatprep.subr.mxu0 0.0
    %1033 = vmatpush1.msra.mxu0 %v829
    %1034 = vmatprep.mubr.f32.mxu0 %v963
    %1035 = vmatmul.mubr.f32.gmra.mrb[0].mxu0 %v956
    %v1036 = vpop.f32.mrb[0].mxu0
    %v1037 = vadd.f32 %v830, %v1036
    %v1038 = vpop.f32.mrb[0].mxu0
    %1039 = vmatprep.mubr.f32.mxu0 %v964
    %1040 = vmatmul.mubr.f32.gmra.mrb[0].mxu0 %v957
    %v1041 = vpop.f32.mrb[0].mxu0
    %v1042 = vadd.f32 %v830, %v1041
    %v1043 = vpop.f32.mrb[0].mxu0
    %1044 = vmatprep.mubr.f32.mxu0 %v965
    %1045 = vmatmul.mubr.f32.gmra.mrb[0].mxu0 %v958
    %v1046 = vpop.f32.mrb[0].mxu0
    %v1047 = vadd.f32 %v830, %v1046
    %v1048 = vpop.f32.mrb[0].mxu0
    %1049 = vmatprep.mubr.f32.mxu0 %v966
    %1050 = vmatmul.mubr.f32.gmra.mrb[0].mxu0 %v959
    %v1051 = vpop.f32.mrb[0].mxu0
    %v1052 = vadd.f32 %v830, %v1051
    %v1053 = vpop.f32.mrb[0].mxu0
    %1054 = vmatprep.mubr.f32.mxu0 %v967
    %1055 = vmatmul.mubr.f32.gmra.mrb[0].mxu0 %v960
    %v1056 = vpop.f32.mrb[0].mxu0
    %v1057 = vadd.f32 %v830, %v1056
    %v1058 = vpop.f32.mrb[0].mxu0
    %1059 = vmatprep.mubr.f32.mxu0 %v968
    %1060 = vmatmul.mubr.f32.gmra.mrb[0].mxu0 %v961
    %v1061 = vpop.f32.mrb[0].mxu0
    %v1062 = vadd.f32 %v830, %v1061
    %v1063 = vpop.f32.mrb[0].mxu0
    %1064 = vmatprep.mubr.f32.mxu0 %v969
    %1065 = vmatmul.mubr.f32.gmra.mrb[0].mxu0 %v962
    %v1066 = vpop.f32.mrb[0].mxu0
    %v1067 = vadd.f32 %v830, %v1066
    %v1068 = vpop.f32.mrb[0].mxu0
    %1069 = vdwg.mxu0
    %v1070 = vlaneseq
    %v1071 = vshrl.u32 %v1070, 7
    %v1072 = vadd.s32 %v1071, 8
    %v1073 = vlaneseq
    %v1074 = vand.u32 %v1073, 127
    %v1075 = vmul.u32 %v1071, 2
    %v1076 = vmul.u32 %v1072, 2
    %vm1077 = vcmp.eq.s32.totalorder %v1074, %v1075
    %vm1078 = vcmp.eq.s32.totalorder %v1074, %v1076
    %v1079 = vsel %vm1077, 1, 0
    %v1080 = vsel %vm1078, 1, 0
    %v1081 = vcvt.s32.f32 %v1079
    %v1082 = vcvt.s32.f32 %v1080
    %vm1083 = vcmask 220160
    %v1084 = vsel %vm1083, %v1081, 0.0
    %v1085 = vsel %vm1083, %v1082, 0.0
    %1088 = vrot.lane.b32.xlu0 %v1081, 27
    %v1089 = vpop.permute.xlu0 %1088
    %1090 = vrot.lane.b32.xlu0 %v1082, 27
    %v1091 = vpop.permute.xlu0 %1090
    %v1094 = vsel %vm1083, 0.0, %v1089
    %v1095 = vsel %vm1083, 0.0, %v1091
    %v1098 = vrot.slane %v1094, 2
    %v1099 = vrot.slane %v1095, 2
    %v1100 = vsel %vm84, %v1098, %v1099
    %v1102 = vsel %vm84, %v1085, %v1098
    %vm1103 = vcmask 441344
    %v1105 = vsel %vm1103, %v1084, 0
    %v1108 = vsel %vm1103, %v1102, 0
    %v1110 = vsel %vm1103, %v1100, 0
    %v1112 = vsel %vm1103, %v1099, 0
    %v1115 = vsel %vm84, %v1067, 0
    %1117 = vmatprep.subr.mxu0 0.0
    %1118 = vmatpush1.msra.mxu0 %v1037
    %1119 = vmatprep.subr.mxu0 0.0
    %1120 = vmatpush1.msra.mxu0 %v1042
    %1121 = vmatprep.subr.mxu0 0.0
    %1122 = vmatpush1.msra.mxu0 %v1047
    %1123 = vmatprep.subr.mxu0 0.0
    %1124 = vmatpush1.msra.mxu0 %v1052
    %1125 = vmatprep.subr.mxu0 0.0
    %1126 = vmatpush1.msra.mxu0 %v1057
    %1127 = vmatprep.subr.mxu0 0.0
    %1128 = vmatpush1.msra.mxu0 %v1062
    %1129 = vmatprep.subr.mxu0 0.0
    %1130 = vmatpush1.msra.mxu0 %v1115
    %1131 = vmatprep.subr.mxu0 0.0
    %1132 = vmatpush1.msra.mxu0 0.0
    %1133 = vmatprep.subr.mxu0 0.0
    %1134 = vmatpush1.msra.mxu0 0.0
    %1135 = vmatprep.subr.mxu0 0.0
    %1136 = vmatpush1.msra.mxu0 0.0
    %1137 = vmatprep.subr.mxu0 0.0
    %1138 = vmatpush1.msra.mxu0 0.0
    %1139 = vmatprep.subr.mxu0 0.0
    %1140 = vmatpush1.msra.mxu0 0.0
    %1141 = vmatprep.subr.mxu0 0.0
    %1142 = vmatpush1.msra.mxu0 0.0
    %1143 = vmatprep.subr.mxu0 0.0
    %1144 = vmatpush1.msra.mxu0 0.0
    %1145 = vmatprep.subr.mxu0 0.0
    %1146 = vmatpush1.msra.mxu0 0.0
    %1147 = vmatprep.subr.mxu0 0.0
    %1148 = vmatpush1.msra.mxu0 0.0
    %1149 = vmatprep.subr.mxu0 0.0
    %1150 = vmatpush1.msra.mxu0 0.0
    %1151 = vmatprep.subr.mxu0 0.0
    %1152 = vmatpush1.msra.mxu0 0.0
    %1153 = vmatprep.subr.mxu0 0.0
    %1154 = vmatpush1.msra.mxu0 0.0
    %1155 = vmatprep.subr.mxu0 0.0
    %1156 = vmatpush1.msra.mxu0 0.0
    %1157 = vmatprep.subr.mxu0 0.0
    %1158 = vmatpush1.msra.mxu0 0.0
    %1159 = vmatprep.subr.mxu0 0.0
    %1160 = vmatpush1.msra.mxu0 0.0
    %1161 = vmatprep.subr.mxu0 0.0
    %1162 = vmatpush1.msra.mxu0 0.0
    %1163 = vmatprep.subr.mxu0 0.0
    %1164 = vmatpush1.msra.mxu0 0.0
    %1165 = vmatprep.subr.mxu0 0.0
    %1166 = vmatpush1.msra.mxu0 0.0
    %1167 = vmatprep.subr.mxu0 0.0
    %1168 = vmatpush1.msra.mxu0 0.0
    %1169 = vmatprep.subr.mxu0 0.0
    %1170 = vmatpush1.msra.mxu0 0.0
    %1171 = vmatprep.subr.mxu0 0.0
    %1172 = vmatpush1.msra.mxu0 0.0
    %1173 = vmatprep.subr.mxu0 0.0
    %1174 = vmatpush1.msra.mxu0 0.0
    %1175 = vmatprep.subr.mxu0 0.0
    %1176 = vmatpush1.msra.mxu0 0.0
    %1177 = vmatprep.subr.mxu0 0.0
    %1178 = vmatpush1.msra.mxu0 0.0
    %1179 = vmatprep.subr.mxu0 0.0
    %1180 = vmatpush1.msra.mxu0 0.0
    %1181 = vmatprep.mubr.f32.mxu0 0.0
    %1182 = vmatmul.mubr.f32.gmra.mrb[0].mxu0 %v1105
    %v1183 = vpop.f32.mrb[0].mxu0
    %v1184 = vadd.f32 0.0, %v1183
    %v1185 = vpop.f32.mrb[0].mxu0
    %1186 = vmatprep.mubr.f32.mxu0 0.0
    %1187 = vmatmul.mubr.f32.gmra.mrb[0].mxu0 %v1108
    %v1188 = vpop.f32.mrb[0].mxu0
    %v1189 = vadd.f32 0.0, %v1188
    %v1190 = vpop.f32.mrb[0].mxu0
    %1191 = vmatprep.mubr.f32.mxu0 0.0
    %1192 = vmatmul.mubr.f32.gmra.mrb[0].mxu0 %v1110
    %v1193 = vpop.f32.mrb[0].mxu0
    %v1194 = vadd.f32 0.0, %v1193
    %v1195 = vpop.f32.mrb[0].mxu0
    %1196 = vmatprep.mubr.f32.mxu0 0.0
    %1197 = vmatmul.mubr.f32.gmra.mrb[0].mxu0 %v1112
    %v1198 = vpop.f32.mrb[0].mxu0
    %v1199 = vadd.f32 0.0, %v1198
    %v1200 = vpop.f32.mrb[0].mxu0
    %1201 = vdwg.mxu0
    %v1202 = vld [vmem:[#allocation5 + $0x7] ss:$0 sm:$0xff]
    %v1203 = vld [vmem:[#allocation5 + $0x10] ss:$0 sm:$0xff]
    %v1204 = vsel %vm560, %v1184, 0.0
    %v1205 = vsel %vm560, %v1189, 0.0
    %v1206 = vadd.f32 %v1204, %v1205
    %v1207 = vsel %vm560, %v1194, 0.0
    %v1208 = vadd.f32 %v1206, %v1207
    %v1209 = vsel %vm714, %v1199, 0.0
    %v1210 = vadd.f32 %v1208, %v1209
    %v1211 = vrot.slane %v1210, 4
    %v1212 = vadd.f32 %v1210, %v1211
    %v1213 = vrot.slane %v1212, 2
    %v1214 = vadd.f32 %v1212, %v1213
    %v1215 = vrot.slane %v1214, 1
    %v1216 = vadd.f32 %v1214, %v1215
    %v1217 = vrcp.pop 28.0
    %v1218 = vmul.f32 %v1216, %v1217
    %v1219 = vsub.f32 %v1184, %v1218
    %v1220 = vsub.f32 %v1189, %v1218
    %v1221 = vsub.f32 %v1194, %v1218
    %v1222 = vsub.f32 %v1199, %v1218
    %v1223 = vmul.f32 %v1219, %v1219
    %v1224 = vmul.f32 %v1220, %v1220
    %v1225 = vmul.f32 %v1221, %v1221
    %v1226 = vmul.f32 %v1222, %v1222
    %v1227 = vsel %vm560, %v1223, 0.0
    %v1228 = vsel %vm560, %v1224, 0.0
    %v1229 = vadd.f32 %v1227, %v1228
    %v1230 = vsel %vm560, %v1225, 0.0
    %v1231 = vadd.f32 %v1229, %v1230
    %v1232 = vsel %vm714, %v1226, 0.0
    %v1233 = vadd.f32 %v1231, %v1232
    %v1234 = vrot.slane %v1233, 4
    %v1235 = vadd.f32 %v1233, %v1234
    %v1236 = vrot.slane %v1235, 2
    %v1237 = vadd.f32 %v1235, %v1236
    %v1238 = vrot.slane %v1237, 1
    %v1239 = vadd.f32 %v1237, %v1238
    %v1240 = vmul.f32 %v1239, %v1217
    %v1241 = vadd.f32 %v1240, 1e-05
    %v1242 = vrsqrt.pop %v1241
    %v1243 = vmul.f32 %v1202, %v1242
    %v1244 = vmul.f32 %v1219, %v1243
    %v1245 = vmul.f32 %v1220, %v1243
    %v1246 = vmul.f32 %v1221, %v1243
    %v1247 = vmul.f32 %v1222, %v1243
    %v1248 = vadd.f32 %v1244, %v1203
    %v1249 = vadd.f32 %v1245, %v1203
    %v1250 = vadd.f32 %v1246, %v1203
    %v1251 = vadd.f32 %v1247, %v1203
    %v1252 = vmul.f32 %v1248, 0.2
    %v1253 = vmul.f32 %v1249, 0.2
    %v1254 = vmul.f32 %v1250, 0.2
    %v1255 = vmul.f32 %v1251, 0.2
    %v1256 = vmax.f32 %v1248, %v1252
    %v1257 = vmax.f32 %v1249, %v1253
    %v1258 = vmax.f32 %v1250, %v1254
    %v1259 = vmax.f32 %v1251, %v1255
    %v1260 = vld [vmem:[#allocation2 + $0x320] sm:$0xff]
    %v1261 = vld [vmem:[#allocation2 + $0x330] sm:$0xff]
    %v1262 = vld [vmem:[#allocation2 + $0x340] sm:$0xff]
    %v1263 = vld [vmem:[#allocation2 + $0x350] sm:$0xff]
    %v1264 = vld [vmem:[#allocation2 + $0x360] sm:$0xff]
    %v1265 = vld [vmem:[#allocation2 + $0x370] sm:$0xff]
    %v1266 = vld [vmem:[#allocation2 + $0x380] sm:$0xff]
    %v1267 = vld [vmem:[#allocation2 + $0x390] sm:$0xff]
    %v1268 = vld [vmem:[#allocation2 + $0x3a0] sm:$0xff]
    %v1269 = vld [vmem:[#allocation2 + $0x3b0] sm:$0xff]
    %v1270 = vld [vmem:[#allocation2 + $0x3c0] sm:$0xff]
    %v1271 = vld [vmem:[#allocation2 + $0x3d0] sm:$0xff]
    %v1272 = vld [vmem:[#allocation2 + $0x3e0] sm:$0xff]
    %v1273 = vld [vmem:[#allocation2 + $0x3f0] sm:$0xff]
    %v1274 = vld [vmem:[#allocation2 + $0x400] sm:$0xff]
    %v1275 = vld [vmem:[#allocation2 + $0x410] sm:$0xff]
    %v1276 = vld [vmem:[#allocation2 + $0x420] sm:$0xff]
    %v1277 = vld [vmem:[#allocation2 + $0x430] sm:$0xff]
    %v1278 = vld [vmem:[#allocation2 + $0x440] sm:$0xff]
    %v1279 = vld [vmem:[#allocation2 + $0x450] sm:$0xff]
    %v1280 = vld [vmem:[#allocation2 + $0x460] sm:$0xff]
    %v1281 = vld [vmem:[#allocation2 + $0x470] sm:$0xff]
    %v1282 = vld [vmem:[#allocation2 + $0x480] sm:$0xff]
    %v1283 = vld [vmem:[#allocation2 + $0x490] sm:$0xff]
    %v1284 = vld [vmem:[#allocation5 + $0x11] ss:$0 sm:$0xff]
    %v1288 = vrot.slane %v1257, 2
    %v1289 = vrot.slane %v1258, 2
    %v1290 = vsel %vm84, %v1288, %v1289
    %v1291 = vrot.slane %v1259, 2
    %v1292 = vsel %vm84, %v1289, %v1291
    %v1295 = vsel %vm130, %v1257, %v1290
    %v1297 = vrot.slane %v1256, 1
    %v1298 = vrot.slane %v1257, 1
    %v1299 = vsel %vm102, %v1297, %v1298
    %v1301 = vrot.slane %v1257, 3
    %v1302 = vrot.slane %v1258, 3
    %v1303 = vsel %vm112, %v1301, %v1302
    %v1304 = vrot.slane %v1259, 3
    %v1305 = vsel %vm112, %v1302, %v1304
    %v1307 = vsel %vm130, %v1298, %v1303
    %v1308 = vrot.slane %v1256, 2
    %v1309 = vsel %vm84, %v1308, %v1288
    %v1311 = vrot.slane %v1258, 4
    %v1312 = vrot.slane %v1259, 4
    %v1313 = vsel %vm130, %v1311, %v1312
    %v1315 = vsel %vm130, %v1288, %v1311
    %1317 = vrot.lane.b32.xlu0 %v1299, 64
    %v1318 = vpop.permute.xlu0 %1317
    %1319 = vrot.lane.b32.xlu0 %v1307, 64
    %v1320 = vpop.permute.xlu0 %1319
    %1321 = vrot.lane.b32.xlu0 %v1305, 64
    %v1322 = vpop.permute.xlu0 %1321
    %v1326 = vsel %vm560, %v1256, %v1318
    %v1327 = vsel %vm560, %v1295, %v1320
    %v1328 = vsel %vm560, %v1292, %v1322
    %v1329 = vsel %vm560, %v1309, 0
    %v1332 = vsel %vm560, %v1315, 0
    %v1334 = vsel %vm560, %v1313, 0
    %1336 = vmatprep.subr.mxu0 0.0
    %1337 = vmatpush1.msra.mxu0 %v1260
    %1338 = vmatprep.subr.mxu0 0.0
    %1339 = vmatpush1.msra.mxu0 %v1261
    %1340 = vmatprep.subr.mxu0 0.0
    %1341 = vmatpush1.msra.mxu0 %v1262
    %1342 = vmatprep.subr.mxu0 0.0
    %1343 = vmatpush1.msra.mxu0 %v1263
    %1344 = vmatprep.subr.mxu0 0.0
    %1345 = vmatpush1.msra.mxu0 %v1264
    %1346 = vmatprep.subr.mxu0 0.0
    %1347 = vmatpush1.msra.mxu0 %v1265
    %1348 = vmatprep.subr.mxu0 0.0
    %1349 = vmatpush1.msra.mxu0 %v1266
    %1350 = vmatprep.subr.mxu0 0.0
    %1351 = vmatpush1.msra.mxu0 %v1267
    %1352 = vmatprep.subr.mxu0 0.0
    %1353 = vmatpush1.msra.mxu0 %v1268
    %1354 = vmatprep.subr.mxu0 0.0
    %1355 = vmatpush1.msra.mxu0 %v1269
    %1356 = vmatprep.subr.mxu0 0.0
    %1357 = vmatpush1.msra.mxu0 %v1270
    %1358 = vmatprep.subr.mxu0 0.0
    %1359 = vmatpush1.msra.mxu0 %v1271
    %1360 = vmatprep.subr.mxu0 0.0
    %1361 = vmatpush1.msra.mxu0 %v1272
    %1362 = vmatprep.subr.mxu0 0.0
    %1363 = vmatpush1.msra.mxu0 %v1273
    %1364 = vmatprep.subr.mxu0 0.0
    %1365 = vmatpush1.msra.mxu0 %v1274
    %1366 = vmatprep.subr.mxu0 0.0
    %1367 = vmatpush1.msra.mxu0 %v1275
    %1368 = vmatprep.subr.mxu0 0.0
    %1369 = vmatpush1.msra.mxu0 %v1276
    %1370 = vmatprep.subr.mxu0 0.0
    %1371 = vmatpush1.msra.mxu0 %v1277
    %1372 = vmatprep.subr.mxu0 0.0
    %1373 = vmatpush1.msra.mxu0 %v1278
    %1374 = vmatprep.subr.mxu0 0.0
    %1375 = vmatpush1.msra.mxu0 %v1279
    %1376 = vmatprep.subr.mxu0 0.0
    %1377 = vmatpush1.msra.mxu0 %v1280
    %1378 = vmatprep.subr.mxu0 0.0
    %1379 = vmatpush1.msra.mxu0 %v1281
    %1380 = vmatprep.subr.mxu0 0.0
    %1381 = vmatpush1.msra.mxu0 %v1282
    %1382 = vmatprep.subr.mxu0 0.0
    %1383 = vmatpush1.msra.mxu0 %v1283
    %1384 = vmatprep.subr.mxu0 0.0
    %1385 = vmatpush1.msra.mxu0 0.0
    %1386 = vmatprep.subr.mxu0 0.0
    %1387 = vmatpush1.msra.mxu0 0.0
    %1388 = vmatprep.subr.mxu0 0.0
    %1389 = vmatpush1.msra.mxu0 0.0
    %1390 = vmatprep.subr.mxu0 0.0
    %1391 = vmatpush1.msra.mxu0 0.0
    %1392 = vmatprep.subr.mxu0 0.0
    %1393 = vmatpush1.msra.mxu0 0.0
    %1394 = vmatprep.subr.mxu0 0.0
    %1395 = vmatpush1.msra.mxu0 0.0
    %1396 = vmatprep.subr.mxu0 0.0
    %1397 = vmatpush1.msra.mxu0 0.0
    %1398 = vmatprep.subr.mxu0 0.0
    %1399 = vmatpush1.msra.mxu0 0.0
    %1400 = vmatprep.mubr.f32.mxu0 %v1329
    %1401 = vmatmul.mubr.f32.gmra.mrb[0].mxu0 %v1326
    %v1402 = vpop.f32.mrb[0].mxu0
    %v1403 = vadd.f32 %v1284, %v1402
    %v1404 = vpop.f32.mrb[0].mxu0
    %1405 = vmatprep.mubr.f32.mxu0 %v1332
    %1406 = vmatmul.mubr.f32.gmra.mrb[0].mxu0 %v1327
    %v1407 = vpop.f32.mrb[0].mxu0
    %v1408 = vadd.f32 %v1284, %v1407
    %v1409 = vpop.f32.mrb[0].mxu0
    %1410 = vmatprep.mubr.f32.mxu0 %v1334
    %1411 = vmatmul.mubr.f32.gmra.mrb[0].mxu0 %v1328
    %v1412 = vpop.f32.mrb[0].mxu0
    %v1413 = vadd.f32 %v1284, %v1412
    %v1414 = vpop.f32.mrb[0].mxu0
    %1415 = vdwg.mxu0
    %v1417 = vrot.slane %v1403, 1
    %1418 = vrot.lane.b32.xlu0 %v1417, 32
    %v1419 = vpop.permute.xlu0 %1418
    %v1421 = vrot.slane %v1403, 2
    %1422 = vrot.lane.b32.xlu0 %v1421, 64
    %v1423 = vpop.permute.xlu0 %1422
    %v1425 = vrot.slane %v1403, 3
    %1426 = vrot.lane.b32.xlu0 %v1425, 96
    %v1427 = vpop.permute.xlu0 %1426
    %v1429 = vrot.slane %v1403, 4
    %v1431 = vrot.slane %v1403, 5
    %1432 = vrot.lane.b32.xlu0 %v1431, 32
    %v1433 = vpop.permute.xlu0 %1432
    %v1435 = vrot.slane %v1403, 6
    %1436 = vrot.lane.b32.xlu0 %v1435, 64
    %v1437 = vpop.permute.xlu0 %1436
    %v1439 = vrot.slane %v1403, 7
    %1440 = vrot.lane.b32.xlu0 %v1439, 96
    %v1441 = vpop.permute.xlu0 %1440
    %v1444 = vrot.slane %v1408, 1
    %1445 = vrot.lane.b32.xlu0 %v1444, 32
    %v1446 = vpop.permute.xlu0 %1445
    %v1448 = vrot.slane %v1408, 2
    %1449 = vrot.lane.b32.xlu0 %v1448, 64
    %v1450 = vpop.permute.xlu0 %1449
    %v1452 = vrot.slane %v1408, 3
    %1453 = vrot.lane.b32.xlu0 %v1452, 96
    %v1454 = vpop.permute.xlu0 %1453
    %v1456 = vsel %vm197, %v1403, %v1419
    %v1457 = vsel %vm560, %v1456, %v1423
    %v1458 = vsel %vm569, %v1457, %v1427
    %v1459 = vsel %vm197, %v1429, %v1433
    %v1460 = vsel %vm560, %v1459, %v1437
    %v1461 = vsel %vm569, %v1460, %v1441
    %v1462 = vsel %vm197, %v1408, %v1446
    %v1463 = vsel %vm560, %v1462, %v1450
    %v1464 = vsel %vm569, %v1463, %v1454
    %v1466 = vrot.slane %v1413, 4
    %v1468 = vrot.slane %v1413, 5
    %1469 = vrot.lane.b32.xlu0 %v1468, 32
    %v1470 = vpop.permute.xlu0 %1469
    %v1472 = vrot.slane %v1413, 6
    %1473 = vrot.lane.b32.xlu0 %v1472, 64
    %v1474 = vpop.permute.xlu0 %1473
    %v1476 = vrot.slane %v1413, 7
    %1477 = vrot.lane.b32.xlu0 %v1476, 96
    %v1478 = vpop.permute.xlu0 %1477
    %v1480 = vrot.slane %v1413, 1
    %1481 = vrot.lane.b32.xlu0 %v1480, 32
    %v1482 = vpop.permute.xlu0 %1481
    %v1484 = vrot.slane %v1413, 2
    %1485 = vrot.lane.b32.xlu0 %v1484, 64
    %v1486 = vpop.permute.xlu0 %1485
    %v1488 = vrot.slane %v1413, 3
    %1489 = vrot.lane.b32.xlu0 %v1488, 96
    %v1490 = vpop.permute.xlu0 %1489
    %v1492 = vsel %vm197, %v1466, %v1470
    %v1493 = vsel %vm560, %v1492, %v1474
    %v1494 = vsel %vm569, %v1493, %v1478
    %v1495 = vsel %vm197, %v1413, %v1482
    %v1496 = vsel %vm560, %v1495, %v1486
    %v1497 = vsel %vm569, %v1496, %v1490
    %v1501 = vrot.slane %v1464, 3
    %v1502 = vrot.slane %v1494, 3
    %v1503 = vrot.slane %v1497, 3
    %vm1507 = vcmask 1040384
    %v1508 = vsel %vm1507, %v1458, %v1501
    %v1509 = vsel %vm1507, %v1461, %v1502
    %v1510 = vsel %vm1507, %v1464, %v1503
    %v1511 = vld [vmem:[#allocation2 + $0x4a0] sm:$0xff]
    %v1512 = vld [vmem:[#allocation2 + $0x4a8] sm:$0xff]
    %v1513 = vld [vmem:[#allocation2 + $0x4b0] sm:$0xff]
    %v1514 = vld [vmem:[#allocation2 + $0x4b8] sm:$0xff]
    %v1515 = vld [vmem:[#allocation2 + $0x4c0] sm:$0xff]
    %v1516 = vld [vmem:[#allocation2 + $0x4c8] sm:$0xff]
    %v1517 = vld [vmem:[#allocation2 + $0x4d0] sm:$0xff]
    %v1518 = vld [vmem:[#allocation2 + $0x4d8] sm:$0xff]
    %v1519 = vld [vmem:[#allocation2 + $0x4e0] sm:$0xff]
    %v1520 = vld [vmem:[#allocation2 + $0x4e8] sm:$0xff]
    %v1521 = vld [vmem:[#allocation2 + $0x4f0] sm:$0xff]
    %v1522 = vld [vmem:[#allocation2 + $0x4f8] sm:$0xff]
    %v1523 = vld [vmem:[#allocation2 + $0x500] sm:$0xff]
    %v1524 = vld [vmem:[#allocation2 + $0x508] sm:$0xff]
    %v1525 = vld [vmem:[#allocation2 + $0x510] sm:$0xff]
    %v1526 = vld [vmem:[#allocation2 + $0x518] sm:$0xff]
    %v1527 = vld [vmem:[#allocation2 + $0x520] sm:$0xff]
    %v1528 = vld [vmem:[#allocation2 + $0x528] sm:$0xff]
    %v1529 = vld [vmem:[#allocation2 + $0x530] sm:$0xff]
    %v1530 = vld [vmem:[#allocation2 + $0x538] sm:$0xff]
    %v1531 = vld [vmem:[#allocation2 + $0x540] sm:$0xff]
    %v1532 = vld [vmem:[#allocation2 + $0x548] sm:$0xff]
    %v1533 = vld [vmem:[#allocation2 + $0x550] sm:$0xff]
    %v1534 = vld [vmem:[#allocation2 + $0x558] sm:$0xff]
    %v1535 = vld [vmem:[#allocation2 + $0x560] sm:$0xff]
    %v1536 = vld [vmem:[#allocation2 + $0x568] sm:$0xff]
    %v1537 = vld [vmem:[#allocation2 + $0x570] sm:$0xff]
    %v1538 = vld [vmem:[#allocation2 + $0x578] sm:$0xff]
    %v1539 = vld [vmem:[#allocation2 + $0x580] sm:$0xff]
    %v1540 = vld [vmem:[#allocation2 + $0x588] sm:$0xff]
    %v1541 = vld [vmem:[#allocation2 + $0x590] sm:$0xff]
    %v1542 = vld [vmem:[#allocation2 + $0x598] sm:$0xff]
    %v1543 = vld [vmem:[#allocation2 + $0x5a0] sm:$0xff]
    %v1544 = vld [vmem:[#allocation2 + $0x5a8] sm:$0xff]
    %v1545 = vld [vmem:[#allocation2 + $0x5b0] sm:$0xff]
    %v1546 = vld [vmem:[#allocation2 + $0x5b8] sm:$0xff]
    %v1547 = vld [vmem:[#allocation2 + $0x5c0] sm:$0xff]
    %v1548 = vld [vmem:[#allocation2 + $0x5c8] sm:$0xff]
    %v1549 = vld [vmem:[#allocation2 + $0x5d0] sm:$0xff]
    %v1550 = vld [vmem:[#allocation2 + $0x5d8] sm:$0xff]
    %v1551 = vld [vmem:[#allocation2 + $0x5e0] sm:$0xff]
    %v1552 = vld [vmem:[#allocation2 + $0x5e8] sm:$0xff]
    %v1553 = vld [vmem:[#allocation2 + $0x5f0] sm:$0xff]
    %v1554 = vld [vmem:[#allocation2 + $0x5f8] sm:$0xff]
    %v1555 = vld [vmem:[#allocation2 + $0x600] sm:$0xff]
    %v1556 = vld [vmem:[#allocation2 + $0x608] sm:$0xff]
    %v1557 = vld [vmem:[#allocation2 + $0x610] sm:$0xff]
    %v1558 = vld [vmem:[#allocation2 + $0x618] sm:$0xff]
    %v1559 = vld [vmem:[#allocation2 + $0x620] sm:$0xff]
    %v1560 = vld [vmem:[#allocation2 + $0x628] sm:$0xff]
    %v1561 = vld [vmem:[#allocation2 + $0x630] sm:$0xff]
    %v1562 = vld [vmem:[#allocation2 + $0x638] sm:$0xff]
    %v1563 = vld [vmem:[#allocation2 + $0x640] sm:$0xff]
    %v1564 = vld [vmem:[#allocation2 + $0x648] sm:$0xff]
    %v1565 = vld [vmem:[#allocation2 + $0x650] sm:$0xff]
    %v1566 = vld [vmem:[#allocation2 + $0x658] sm:$0xff]
    %v1567 = vld [vmem:[#allocation2 + $0x660] sm:$0xff]
    %v1568 = vld [vmem:[#allocation2 + $0x668] sm:$0xff]
    %v1569 = vld [vmem:[#allocation2 + $0x670] sm:$0xff]
    %v1570 = vld [vmem:[#allocation2 + $0x678] sm:$0xff]
    %v1571 = vld [vmem:[#allocation2 + $0x680] sm:$0xff]
    %v1572 = vld [vmem:[#allocation2 + $0x688] sm:$0xff]
    %v1573 = vld [vmem:[#allocation2 + $0x690] sm:$0xff]
    %v1574 = vld [vmem:[#allocation2 + $0x698] sm:$0xff]
    %v1575 = vld [vmem:[#allocation2 + $0x6a0] sm:$0xff]
    %v1576 = vld [vmem:[#allocation2 + $0x6a8] sm:$0xff]
    %v1577 = vld [vmem:[#allocation2 + $0x6b0] sm:$0xff]
    %v1578 = vld [vmem:[#allocation2 + $0x6b8] sm:$0xff]
    %v1579 = vld [vmem:[#allocation2 + $0x6c0] sm:$0xff]
    %v1580 = vld [vmem:[#allocation2 + $0x6c8] sm:$0xff]
    %v1581 = vld [vmem:[#allocation2 + $0x6d0] sm:$0xff]
    %v1582 = vld [vmem:[#allocation2 + $0x6d8] sm:$0xff]
    %v1583 = vld [vmem:[#allocation2 + $0x6e0] sm:$0xff]
    %v1584 = vld [vmem:[#allocation2 + $0x6e8] sm:$0xff]
    %v1585 = vld [vmem:[#allocation2 + $0x6f0] sm:$0xff]
    %v1586 = vld [vmem:[#allocation2 + $0x6f8] sm:$0xff]
    %v1587 = vld [vmem:[#allocation2 + $0x700] sm:$0xff]
    %v1588 = vld [vmem:[#allocation2 + $0x708] sm:$0xff]
    %v1589 = vld [vmem:[#allocation2 + $0x710] sm:$0xff]
    %v1590 = vld [vmem:[#allocation2 + $0x718] sm:$0xff]
    %v1591 = vld [vmem:[#allocation2 + $0x720] sm:$0xff]
    %v1592 = vld [vmem:[#allocation2 + $0x728] sm:$0xff]
    %v1593 = vld [vmem:[#allocation2 + $0x730] sm:$0xff]
    %v1594 = vld [vmem:[#allocation2 + $0x738] sm:$0xff]
    %v1595 = vld [vmem:[#allocation2 + $0x740] sm:$0xff]
    %v1596 = vld [vmem:[#allocation2 + $0x748] sm:$0xff]
    %v1597 = vld [vmem:[#allocation2 + $0x750] sm:$0xff]
    %v1598 = vld [vmem:[#allocation2 + $0x758] sm:$0xff]
    %v1599 = vld [vmem:[#allocation2 + $0x760] sm:$0xff]
    %v1600 = vld [vmem:[#allocation2 + $0x768] sm:$0xff]
    %v1601 = vld [vmem:[#allocation2 + $0x770] sm:$0xff]
    %v1602 = vld [vmem:[#allocation2 + $0x778] sm:$0xff]
    %v1603 = vld [vmem:[#allocation2 + $0x780] sm:$0xff]
    %v1604 = vld [vmem:[#allocation2 + $0x788] sm:$0xff]
    %v1605 = vld [vmem:[#allocation2 + $0x790] sm:$0xff]
    %v1606 = vld [vmem:[#allocation2 + $0x798] sm:$0xff]
    %s1607 = scalar_lea.vmem [#allocation5], 18
    %v1608 = vld [vmem:[%s1607] ss:$8 sm:$0x3]
    %v1610 = vlaneseq
    %v1611 = vshrl.u32 %v1610, 7
    %v1612 = vsub.s32 0, %v1611
    %v1613 = vrot.slane %v1608, %v1612
    %v1614 = vlaneseq
    %v1615 = vshrl.u32 %v1614, 7
    %v1616 = vsub.s32 1, %v1615
    %v1617 = vrot.slane %v1608, %v1616
    %1620 = vmatprep.subr.mxu0 %v1512
    %1621 = vmatpush1.msra.mxu0 %v1511
    %1622 = vmatprep.subr.mxu0 %v1514
    %1623 = vmatpush1.msra.mxu0 %v1513
    %1624 = vmatprep.subr.mxu0 %v1516
    %1625 = vmatpush1.msra.mxu0 %v1515
    %1626 = vmatprep.subr.mxu0 %v1518
    %1627 = vmatpush1.msra.mxu0 %v1517
    %1628 = vmatprep.subr.mxu0 %v1520
    %1629 = vmatpush1.msra.mxu0 %v1519
    %1630 = vmatprep.subr.mxu0 %v1522
    %1631 = vmatpush1.msra.mxu0 %v1521
    %1632 = vmatprep.subr.mxu0 %v1524
    %1633 = vmatpush1.msra.mxu0 %v1523
    %1634 = vmatprep.subr.mxu0 %v1526
    %1635 = vmatpush1.msra.mxu0 %v1525
    %1636 = vmatprep.subr.mxu0 %v1528
    %1637 = vmatpush1.msra.mxu0 %v1527
    %1638 = vmatprep.subr.mxu0 %v1530
    %1639 = vmatpush1.msra.mxu0 %v1529
    %1640 = vmatprep.subr.mxu0 %v1532
    %1641 = vmatpush1.msra.mxu0 %v1531
    %1642 = vmatprep.subr.mxu0 %v1534
    %1643 = vmatpush1.msra.mxu0 %v1533
    %1644 = vmatprep.subr.mxu0 %v1536
    %1645 = vmatpush1.msra.mxu0 %v1535
    %1646 = vmatprep.subr.mxu0 %v1538
    %1647 = vmatpush1.msra.mxu0 %v1537
    %1648 = vmatprep.subr.mxu0 %v1540
    %1649 = vmatpush1.msra.mxu0 %v1539
    %1650 = vmatprep.subr.mxu0 %v1542
    %1651 = vmatpush1.msra.mxu0 %v1541
    %1652 = vmatprep.subr.mxu0 %v1544
    %1653 = vmatpush1.msra.mxu0 %v1543
    %1654 = vmatprep.subr.mxu0 %v1546
    %1655 = vmatpush1.msra.mxu0 %v1545
    %1656 = vmatprep.subr.mxu0 %v1548
    %1657 = vmatpush1.msra.mxu0 %v1547
    %1658 = vmatprep.subr.mxu0 %v1550
    %1659 = vmatpush1.msra.mxu0 %v1549
    %1660 = vmatprep.subr.mxu0 %v1552
    %1661 = vmatpush1.msra.mxu0 %v1551
    %1662 = vmatprep.subr.mxu0 %v1554
    %1663 = vmatpush1.msra.mxu0 %v1553
    %1664 = vmatprep.subr.mxu0 %v1556
    %1665 = vmatpush1.msra.mxu0 %v1555
    %1666 = vmatprep.subr.mxu0 %v1558
    %1667 = vmatpush1.msra.mxu0 %v1557
    %1668 = vmatprep.subr.mxu0 %v1560
    %1669 = vmatpush1.msra.mxu0 %v1559
    %1670 = vmatprep.subr.mxu0 %v1562
    %1671 = vmatpush1.msra.mxu0 %v1561
    %1672 = vmatprep.subr.mxu0 %v1564
    %1673 = vmatpush1.msra.mxu0 %v1563
    %1674 = vmatprep.subr.mxu0 %v1566
    %1675 = vmatpush1.msra.mxu0 %v1565
    %1676 = vmatprep.subr.mxu0 %v1568
    %1677 = vmatpush1.msra.mxu0 %v1567
    %1678 = vmatprep.subr.mxu0 %v1570
    %1679 = vmatpush1.msra.mxu0 %v1569
    %1680 = vmatprep.subr.mxu0 %v1572
    %1681 = vmatpush1.msra.mxu0 %v1571
    %1682 = vmatprep.subr.mxu0 %v1574
    %1683 = vmatpush1.msra.mxu0 %v1573
    %1684 = vmatprep.mubr.f32.mxu0 %v1509
    %1685 = vmatmul.mubr.f32.gmra.mrb[0].mxu0 %v1508
    %v1686 = vpop.f32.mrb[0].mxu0
    %v1687 = vadd.f32 %v1613, %v1686
    %v1688 = vpop.f32.mrb[0].mxu0
    %v1689 = vadd.f32 %v1617, %v1688
    %1690 = vdwg.mxu0
    %1691 = vmatprep.subr.mxu0 %v1576
    %1692 = vmatpush1.msra.mxu0 %v1575
    %1693 = vmatprep.subr.mxu0 %v1578
    %1694 = vmatpush1.msra.mxu0 %v1577
    %1695 = vmatprep.subr.mxu0 %v1580
    %1696 = vmatpush1.msra.mxu0 %v1579
    %1697 = vmatprep.subr.mxu0 %v1582
    %1698 = vmatpush1.msra.mxu0 %v1581
    %1699 = vmatprep.subr.mxu0 %v1584
    %1700 = vmatpush1.msra.mxu0 %v1583
    %1701 = vmatprep.subr.mxu0 %v1586
    %1702 = vmatpush1.msra.mxu0 %v1585
    %1703 = vmatprep.subr.mxu0 %v1588
    %1704 = vmatpush1.msra.mxu0 %v1587
    %1705 = vmatprep.subr.mxu0 %v1590
    %1706 = vmatpush1.msra.mxu0 %v1589
    %1707 = vmatprep.subr.mxu0 %v1592
    %1708 = vmatpush1.msra.mxu0 %v1591
    %1709 = vmatprep.subr.mxu0 %v1594
    %1710 = vmatpush1.msra.mxu0 %v1593
    %1711 = vmatprep.subr.mxu0 %v1596
    %1712 = vmatpush1.msra.mxu0 %v1595
    %1713 = vmatprep.subr.mxu0 %v1598
    %1714 = vmatpush1.msra.mxu0 %v1597
    %1715 = vmatprep.subr.mxu0 %v1600
    %1716 = vmatpush1.msra.mxu0 %v1599
    %1717 = vmatprep.subr.mxu0 %v1602
    %1718 = vmatpush1.msra.mxu0 %v1601
    %1719 = vmatprep.subr.mxu0 %v1604
    %1720 = vmatpush1.msra.mxu0 %v1603
    %1721 = vmatprep.subr.mxu0 %v1606
    %1722 = vmatpush1.msra.mxu0 %v1605
    %1723 = vmatprep.subr.mxu0 0.0
    %1724 = vmatpush1.msra.mxu0 0.0
    %1725 = vmatprep.subr.mxu0 0.0
    %1726 = vmatpush1.msra.mxu0 0.0
    %1727 = vmatprep.subr.mxu0 0.0
    %1728 = vmatpush1.msra.mxu0 0.0
    %1729 = vmatprep.subr.mxu0 0.0
    %1730 = vmatpush1.msra.mxu0 0.0
    %1731 = vmatprep.subr.mxu0 0.0
    %1732 = vmatpush1.msra.mxu0 0.0
    %1733 = vmatprep.subr.mxu0 0.0
    %1734 = vmatpush1.msra.mxu0 0.0
    %1735 = vmatprep.subr.mxu0 0.0
    %1736 = vmatpush1.msra.mxu0 0.0
    %1737 = vmatprep.subr.mxu0 0.0
    %1738 = vmatpush1.msra.mxu0 0.0
    %1739 = vmatprep.subr.mxu0 0.0
    %1740 = vmatpush1.msra.mxu0 0.0
    %1741 = vmatprep.subr.mxu0 0.0
    %1742 = vmatpush1.msra.mxu0 0.0
    %1743 = vmatprep.subr.mxu0 0.0
    %1744 = vmatpush1.msra.mxu0 0.0
    %1745 = vmatprep.subr.mxu0 0.0
    %1746 = vmatpush1.msra.mxu0 0.0
    %1747 = vmatprep.subr.mxu0 0.0
    %1748 = vmatpush1.msra.mxu0 0.0
    %1749 = vmatprep.subr.mxu0 0.0
    %1750 = vmatpush1.msra.mxu0 0.0
    %1751 = vmatprep.subr.mxu0 0.0
    %1752 = vmatpush1.msra.mxu0 0.0
    %1753 = vmatprep.subr.mxu0 0.0
    %1754 = vmatpush1.msra.mxu0 0.0
    %1755 = vmatprep.mubr.f32.mxu0 0.0
    %1756 = vmatmul.mubr.f32.gmra.mrb[0].mxu0 %v1510
    %v1757 = vpop.f32.mrb[0].mxu0
    %v1758 = vadd.f32 %v1687, %v1757
    %v1759 = vpop.f32.mrb[0].mxu0
    %v1760 = vadd.f32 %v1689, %v1759
    %1761 = vdwg.mxu0
    %s1762 = scalar_lea.vmem [#allocation5], 19
    %v1763 = vld [vmem:[%s1762] ss:$8 sm:$0x3]
    %s1764 = scalar_lea.vmem [#allocation5], 20
    %v1765 = vld [vmem:[%s1764] ss:$8 sm:$0x3]
    %v1766 = vsel %vm64, %v1758, 0.0
    %v1767 = vrot.slane %v1766, 4
    %v1768 = vadd.f32 %v1766, %v1767
    %v1769 = vrot.slane %v1768, 2
    %v1770 = vadd.f32 %v1768, %v1769
    %v1771 = vrot.slane %v1770, 1
    %v1772 = vadd.f32 %v1770, %v1771
    %v1773 = vsel %vm64, %v1760, 0.0
    %v1774 = vrot.slane %v1773, 4
    %v1775 = vadd.f32 %v1773, %v1774
    %v1776 = vrot.slane %v1775, 2
    %v1777 = vadd.f32 %v1775, %v1776
    %v1778 = vrot.slane %v1777, 1
    %v1779 = vadd.f32 %v1777, %v1778
    %v1780 = vrcp.pop 2.0
    %v1781 = vmul.f32 %v1772, %v1780
    %v1782 = vmul.f32 %v1779, %v1780
    %v1783 = vsub.f32 %v1758, %v1781
    %v1784 = vsub.f32 %v1760, %v1782
    %v1785 = vmul.f32 %v1783, %v1783
    %v1786 = vmul.f32 %v1784, %v1784
    %v1787 = vsel %vm64, %v1785, 0.0
    %v1788 = vrot.slane %v1787, 4
    %v1789 = vadd.f32 %v1787, %v1788
    %v1790 = vrot.slane %v1789, 2
    %v1791 = vadd.f32 %v1789, %v1790
    %v1792 = vrot.slane %v1791, 1
    %v1793 = vadd.f32 %v1791, %v1792
    %v1794 = vsel %vm64, %v1786, 0.0
    %v1795 = vrot.slane %v1794, 4
    %v1796 = vadd.f32 %v1794, %v1795
    %v1797 = vrot.slane %v1796, 2
    %v1798 = vadd.f32 %v1796, %v1797
    %v1799 = vrot.slane %v1798, 1
    %v1800 = vadd.f32 %v1798, %v1799
    %v1801 = vmul.f32 %v1793, %v1780
    %v1802 = vmul.f32 %v1800, %v1780
    %v1803 = vadd.f32 %v1801, 1e-05
    %v1804 = vadd.f32 %v1802, 1e-05
    %v1805 = vrsqrt.pop %v1803
    %v1806 = vrsqrt.pop %v1804
    %v1809 = vcombine.low %v1805, %v1806
    %v1811 = vunpack.c.l.s4 1966171168
    %v1812 = vunpack.c.0.s8 %v1811
    %v1813 = vlaneseq
    %v1814 = vshrl.u32 %v1813, 7
    %v1815 = vsub.s32 %v1812, %v1814
    %v1816 = vrot.slane %v1809, %v1815
    %v1818 = vunpack.c.l.s4 1966171168
    %v1819 = vunpack.c.0.s8 %v1818
    %v1820 = vlaneseq
    %v1821 = vshrl.u32 %v1820, 7
    %v1822 = vsub.s32 %v1819, %v1821
    %v1823 = vrot.slane %v1816, %v1822
    %v1825 = vmul.f32 %v1763, %v1823
    %v1827 = vlaneseq
    %v1828 = vshrl.u32 %v1827, 7
    %v1829 = vsub.s32 0, %v1828
    %v1830 = vrot.slane %v1825, %v1829
    %v1831 = vlaneseq
    %v1832 = vshrl.u32 %v1831, 7
    %v1833 = vsub.s32 1, %v1832
    %v1834 = vrot.slane %v1825, %v1833
    %v1837 = vmul.f32 %v1783, %v1830
    %v1838 = vmul.f32 %v1784, %v1834
    %v1840 = vlaneseq
    %v1841 = vshrl.u32 %v1840, 7
    %v1842 = vsub.s32 0, %v1841
    %v1843 = vrot.slane %v1765, %v1842
    %v1844 = vlaneseq
    %v1845 = vshrl.u32 %v1844, 7
    %v1846 = vsub.s32 1, %v1845
    %v1847 = vrot.slane %v1765, %v1846
    %v1850 = vadd.f32 %v1837, %v1843
    %v1851 = vadd.f32 %v1838, %v1847
    %v1852 = vld [vmem:[#allocation2 + $0x7a0] sm:$0xff]
    %v1853 = vld [vmem:[#allocation2 + $0x7b0] sm:$0xff]
    %v1854 = vld [vmem:[#allocation2 + $0x7c0] sm:$0xff]
    %v1855 = vld [vmem:[#allocation2 + $0x7d0] sm:$0xff]
    %v1856 = vld [vmem:[#allocation2 + $0x7e0] sm:$0xff]
    %v1857 = vld [vmem:[#allocation2 + $0x7f0] sm:$0xff]
    %v1858 = vld [vmem:[#allocation2 + $0x800] sm:$0xff]
    %v1859 = vld [vmem:[#allocation2 + $0x810] sm:$0xff]
    %v1860 = vld [vmem:[#allocation2 + $0x820] sm:$0xff]
    %v1861 = vld [vmem:[#allocation2 + $0x830] sm:$0xff]
    %v1862 = vld [vmem:[#allocation2 + $0x840] sm:$0xff]
    %v1863 = vld [vmem:[#allocation2 + $0x850] sm:$0xff]
    %v1864 = vld [vmem:[#allocation2 + $0x860] sm:$0xff]
    %v1865 = vld [vmem:[#allocation2 + $0x870] sm:$0xff]
    %v1866 = vld [vmem:[#allocation2 + $0x880] sm:$0xff]
    %v1867 = vld [vmem:[#allocation2 + $0x890] sm:$0xff]
    %v1868 = vld [vmem:[#allocation2 + $0x8a0] sm:$0xff]
    %v1869 = vld [vmem:[#allocation2 + $0x8b0] sm:$0xff]
    %v1870 = vld [vmem:[#allocation2 + $0x8c0] sm:$0xff]
    %v1871 = vld [vmem:[#allocation2 + $0x8d0] sm:$0xff]
    %v1872 = vld [vmem:[#allocation2 + $0x8e0] sm:$0xff]
    %v1873 = vld [vmem:[#allocation2 + $0x8f0] sm:$0xff]
    %v1874 = vld [vmem:[#allocation2 + $0x900] sm:$0xff]
    %v1875 = vld [vmem:[#allocation2 + $0x910] sm:$0xff]
    %v1876 = vld [vmem:[#allocation2 + $0x920] sm:$0xff]
    %v1877 = vld [vmem:[#allocation2 + $0x930] sm:$0xff]
    %v1878 = vld [vmem:[#allocation2 + $0x940] sm:$0xff]
    %v1879 = vld [vmem:[#allocation2 + $0x950] sm:$0xff]
    %v1880 = vld [vmem:[#allocation2 + $0x960] sm:$0xff]
    %v1881 = vld [vmem:[#allocation2 + $0x970] sm:$0xff]
    %v1882 = vld [vmem:[#allocation2 + $0x980] sm:$0xff]
    %v1883 = vld [vmem:[#allocation2 + $0x990] sm:$0xff]
    %v1884 = vld [vmem:[#allocation5 + $0x15] ss:$0 sm:$0xff]
    %1885 = vmatprep.subr.mxu0 0.0
    %1886 = vmatpush1.msra.mxu0 %v1852
    %1887 = vmatprep.subr.mxu0 0.0
    %1888 = vmatpush1.msra.mxu0 %v1853
    %1889 = vmatprep.subr.mxu0 0.0
    %1890 = vmatpush1.msra.mxu0 %v1854
    %1891 = vmatprep.subr.mxu0 0.0
    %1892 = vmatpush1.msra.mxu0 %v1855
    %1893 = vmatprep.subr.mxu0 0.0
    %1894 = vmatpush1.msra.mxu0 %v1856
    %1895 = vmatprep.subr.mxu0 0.0
    %1896 = vmatpush1.msra.mxu0 %v1857
    %1897 = vmatprep.subr.mxu0 0.0
    %1898 = vmatpush1.msra.mxu0 %v1858
    %1899 = vmatprep.subr.mxu0 0.0
    %1900 = vmatpush1.msra.mxu0 %v1859
    %1901 = vmatprep.subr.mxu0 0.0
    %1902 = vmatpush1.msra.mxu0 %v1860
    %1903 = vmatprep.subr.mxu0 0.0
    %1904 = vmatpush1.msra.mxu0 %v1861
    %1905 = vmatprep.subr.mxu0 0.0
    %1906 = vmatpush1.msra.mxu0 %v1862
    %1907 = vmatprep.subr.mxu0 0.0
    %1908 = vmatpush1.msra.mxu0 %v1863
    %1909 = vmatprep.subr.mxu0 0.0
    %1910 = vmatpush1.msra.mxu0 %v1864
    %1911 = vmatprep.subr.mxu0 0.0
    %1912 = vmatpush1.msra.mxu0 %v1865
    %1913 = vmatprep.subr.mxu0 0.0
    %1914 = vmatpush1.msra.mxu0 %v1866
    %1915 = vmatprep.subr.mxu0 0.0
    %1916 = vmatpush1.msra.mxu0 %v1867
    %1917 = vmatprep.subr.mxu0 0.0
    %1918 = vmatpush1.msra.mxu0 %v1868
    %1919 = vmatprep.subr.mxu0 0.0
    %1920 = vmatpush1.msra.mxu0 %v1869
    %1921 = vmatprep.subr.mxu0 0.0
    %1922 = vmatpush1.msra.mxu0 %v1870
    %1923 = vmatprep.subr.mxu0 0.0
    %1924 = vmatpush1.msra.mxu0 %v1871
    %1925 = vmatprep.subr.mxu0 0.0
    %1926 = vmatpush1.msra.mxu0 %v1872
    %1927 = vmatprep.subr.mxu0 0.0
    %1928 = vmatpush1.msra.mxu0 %v1873
    %1929 = vmatprep.subr.mxu0 0.0
    %1930 = vmatpush1.msra.mxu0 %v1874
    %1931 = vmatprep.subr.mxu0 0.0
    %1932 = vmatpush1.msra.mxu0 %v1875
    %1933 = vmatprep.subr.mxu0 0.0
    %1934 = vmatpush1.msra.mxu0 %v1876
    %1935 = vmatprep.subr.mxu0 0.0
    %1936 = vmatpush1.msra.mxu0 %v1877
    %1937 = vmatprep.subr.mxu0 0.0
    %1938 = vmatpush1.msra.mxu0 %v1878
    %1939 = vmatprep.subr.mxu0 0.0
    %1940 = vmatpush1.msra.mxu0 %v1879
    %1941 = vmatprep.subr.mxu0 0.0
    %1942 = vmatpush1.msra.mxu0 %v1880
    %1943 = vmatprep.subr.mxu0 0.0
    %1944 = vmatpush1.msra.mxu0 %v1881
    %1945 = vmatprep.subr.mxu0 0.0
    %1946 = vmatpush1.msra.mxu0 %v1882
    %1947 = vmatprep.subr.mxu0 0.0
    %1948 = vmatpush1.msra.mxu0 %v1883
    %1949 = vmatprep.mubr.f32.mxu0 %v1851
    %1950 = vmatmul.mubr.f32.gmra.mrb[0].mxu0 %v1850
    %v1951 = vpop.f32.mrb[0].mxu0
    %v1952 = vadd.f32 %v1884, %v1951
    %v1953 = vpop.f32.mrb[0].mxu0
    %1954 = vdwg.mxu0
    %v1955 = vld [vmem:[#allocation5 + $0x16] ss:$0 sm:$0xff]
    %v1956 = vld [vmem:[#allocation5 + $0x17] ss:$0 sm:$0xff]
    %v1957 = vsel %vm64, %v1952, 0.0
    %v1958 = vrot.slane %v1957, 4
    %v1959 = vadd.f32 %v1957, %v1958
    %v1960 = vrot.slane %v1959, 2
    %v1961 = vadd.f32 %v1959, %v1960
    %v1962 = vrot.slane %v1961, 1
    %v1963 = vadd.f32 %v1961, %v1962
    %v1964 = vmul.f32 %v1963, %v1780
    %v1965 = vsub.f32 %v1952, %v1964
    %v1966 = vmul.f32 %v1965, %v1965
    %v1967 = vsel %vm64, %v1966, 0.0
    %v1968 = vrot.slane %v1967, 4
    %v1969 = vadd.f32 %v1967, %v1968
    %v1970 = vrot.slane %v1969, 2
    %v1971 = vadd.f32 %v1969, %v1970
    %v1972 = vrot.slane %v1971, 1
    %v1973 = vadd.f32 %v1971, %v1972
    %v1974 = vmul.f32 %v1973, %v1780
    %v1975 = vadd.f32 %v1974, 1e-05
    %v1976 = vrsqrt.pop %v1975
    %v1977 = vmul.f32 %v1955, %v1976
    %v1978 = vmul.f32 %v1965, %v1977
    %v1979 = vadd.f32 %v1978, %v1956
    %v1980 = vld [vmem:[#allocation2 + $0x9a0] sm:$0xff]
    %v1981 = vld [vmem:[#allocation2 + $0x9b0] sm:$0xff]
    %v1982 = vld [vmem:[#allocation2 + $0x9c0] sm:$0xff]
    %v1983 = vld [vmem:[#allocation2 + $0x9d0] sm:$0xff]
    %v1984 = vld [vmem:[#allocation2 + $0x9e0] sm:$0xff]
    %v1985 = vld [vmem:[#allocation2 + $0x9f0] sm:$0xff]
    %v1986 = vld [vmem:[#allocation2 + $0xa00] sm:$0xff]
    %v1987 = vld [vmem:[#allocation2 + $0xa10] sm:$0xff]
    %v1988 = vld [vmem:[#allocation2 + $0xa20] sm:$0xff]
    %v1989 = vld [vmem:[#allocation2 + $0xa30] sm:$0xff]
    %v1990 = vld [vmem:[#allocation2 + $0xa40] sm:$0xff]
    %v1991 = vld [vmem:[#allocation2 + $0xa50] sm:$0xff]
    %v1992 = vld [vmem:[#allocation2 + $0xa60] sm:$0xff]
    %v1993 = vld [vmem:[#allocation2 + $0xa70] sm:$0xff]
    %v1994 = vld [vmem:[#allocation2 + $0xa80] sm:$0xff]
    %v1995 = vld [vmem:[#allocation2 + $0xa90] sm:$0xff]
    %v1996 = vld [vmem:[#allocation5 + $0x20] ss:$0 sm:$0xff]
    %1997 = vmatprep.subr.mxu0 0.0
    %1998 = vmatpush1.msra.mxu0 %v1980
    %1999 = vmatprep.subr.mxu0 0.0
    %2000 = vmatpush1.msra.mxu0 %v1981
    %2001 = vmatprep.subr.mxu0 0.0
    %2002 = vmatpush1.msra.mxu0 %v1982
    %2003 = vmatprep.subr.mxu0 0.0
    %2004 = vmatpush1.msra.mxu0 %v1983
    %2005 = vmatprep.subr.mxu0 0.0
    %2006 = vmatpush1.msra.mxu0 %v1984
    %2007 = vmatprep.subr.mxu0 0.0
    %2008 = vmatpush1.msra.mxu0 %v1985
    %2009 = vmatprep.subr.mxu0 0.0
    %2010 = vmatpush1.msra.mxu0 %v1986
    %2011 = vmatprep.subr.mxu0 0.0
    %2012 = vmatpush1.msra.mxu0 %v1987
    %2013 = vmatprep.subr.mxu0 0.0
    %2014 = vmatpush1.msra.mxu0 %v1988
    %2015 = vmatprep.subr.mxu0 0.0
    %2016 = vmatpush1.msra.mxu0 %v1989
    %2017 = vmatprep.subr.mxu0 0.0
    %2018 = vmatpush1.msra.mxu0 %v1990
    %2019 = vmatprep.subr.mxu0 0.0
    %2020 = vmatpush1.msra.mxu0 %v1991
    %2021 = vmatprep.subr.mxu0 0.0
    %2022 = vmatpush1.msra.mxu0 %v1992
    %2023 = vmatprep.subr.mxu0 0.0
    %2024 = vmatpush1.msra.mxu0 %v1993
    %2025 = vmatprep.subr.mxu0 0.0
    %2026 = vmatpush1.msra.mxu0 %v1994
    %2027 = vmatprep.subr.mxu0 0.0
    %2028 = vmatpush1.msra.mxu0 %v1995
    %2029 = vmatprep.subr.mxu0 0.0
    %2030 = vmatpush1.msra.mxu0 0.0
    %2031 = vmatprep.subr.mxu0 0.0
    %2032 = vmatpush1.msra.mxu0 0.0
    %2033 = vmatprep.subr.mxu0 0.0
    %2034 = vmatpush1.msra.mxu0 0.0
    %2035 = vmatprep.subr.mxu0 0.0
    %2036 = vmatpush1.msra.mxu0 0.0
    %2037 = vmatprep.subr.mxu0 0.0
    %2038 = vmatpush1.msra.mxu0 0.0
    %2039 = vmatprep.subr.mxu0 0.0
    %2040 = vmatpush1.msra.mxu0 0.0
    %2041 = vmatprep.subr.mxu0 0.0
    %2042 = vmatpush1.msra.mxu0 0.0
    %2043 = vmatprep.subr.mxu0 0.0
    %2044 = vmatpush1.msra.mxu0 0.0
    %2045 = vmatprep.subr.mxu0 0.0
    %2046 = vmatpush1.msra.mxu0 0.0
    %2047 = vmatprep.subr.mxu0 0.0
    %2048 = vmatpush1.msra.mxu0 0.0
    %2049 = vmatprep.subr.mxu0 0.0
    %2050 = vmatpush1.msra.mxu0 0.0
    %2051 = vmatprep.subr.mxu0 0.0
    %2052 = vmatpush1.msra.mxu0 0.0
    %2053 = vmatprep.subr.mxu0 0.0
    %2054 = vmatpush1.msra.mxu0 0.0
    %2055 = vmatprep.subr.mxu0 0.0
    %2056 = vmatpush1.msra.mxu0 0.0
    %2057 = vmatprep.subr.mxu0 0.0
    %2058 = vmatpush1.msra.mxu0 0.0
    %2059 = vmatprep.subr.mxu0 0.0
    %2060 = vmatpush1.msra.mxu0 0.0
    %2061 = vmatprep.mubr.f32.mxu0 0.0
    %2062 = vmatmul.mubr.f32.gmra.mrb[0].mxu0 %v1979
    %v2063 = vpop.f32.mrb[0].mxu0
    %v2064 = vadd.f32 %v1996, %v2063
    %v2065 = vpop.f32.mrb[0].mxu0
    %2066 = vdwg.mxu0
    %v2067 = vld [vmem:[#allocation2 + $0xaa0] sm:$0xff]
    %v2068 = vld [vmem:[#allocation2 + $0xab0] sm:$0xff]
    %v2069 = vld [vmem:[#allocation2 + $0xac0] sm:$0xff]
    %v2070 = vld [vmem:[#allocation2 + $0xad0] sm:$0xff]
    %v2071 = vld [vmem:[#allocation5 + $0x21] ss:$0 sm:$0xff]
    %v2073 = vsel %vm197, %v2064, 0
    %2075 = vmatprep.subr.mxu0 0.0
    %2076 = vmatpush1.msra.mxu0 %v2067
    %2077 = vmatprep.subr.mxu0 0.0
    %2078 = vmatpush1.msra.mxu0 %v2068
    %2079 = vmatprep.subr.mxu0 0.0
    %2080 = vmatpush1.msra.mxu0 %v2069
    %2081 = vmatprep.subr.mxu0 0.0
    %2082 = vmatpush1.msra.mxu0 %v2070
    %2083 = vmatprep.subr.mxu0 0.0
    %2084 = vmatpush1.msra.mxu0 0.0
    %2085 = vmatprep.subr.mxu0 0.0
    %2086 = vmatpush1.msra.mxu0 0.0
    %2087 = vmatprep.subr.mxu0 0.0
    %2088 = vmatpush1.msra.mxu0 0.0
    %2089 = vmatprep.subr.mxu0 0.0
    %2090 = vmatpush1.msra.mxu0 0.0
    %2091 = vmatprep.subr.mxu0 0.0
    %2092 = vmatpush1.msra.mxu0 0.0
    %2093 = vmatprep.subr.mxu0 0.0
    %2094 = vmatpush1.msra.mxu0 0.0
    %2095 = vmatprep.subr.mxu0 0.0
    %2096 = vmatpush1.msra.mxu0 0.0
    %2097 = vmatprep.subr.mxu0 0.0
    %2098 = vmatpush1.msra.mxu0 0.0
    %2099 = vmatprep.subr.mxu0 0.0
    %2100 = vmatpush1.msra.mxu0 0.0
    %2101 = vmatprep.subr.mxu0 0.0
    %2102 = vmatpush1.msra.mxu0 0.0
    %2103 = vmatprep.subr.mxu0 0.0
    %2104 = vmatpush1.msra.mxu0 0.0
    %2105 = vmatprep.subr.mxu0 0.0
    %2106 = vmatpush1.msra.mxu0 0.0
    %2107 = vmatprep.subr.mxu0 0.0
    %2108 = vmatpush1.msra.mxu0 0.0
    %2109 = vmatprep.subr.mxu0 0.0
    %2110 = vmatpush1.msra.mxu0 0.0
    %2111 = vmatprep.subr.mxu0 0.0
    %2112 = vmatpush1.msra.mxu0 0.0
    %2113 = vmatprep.subr.mxu0 0.0
    %2114 = vmatpush1.msra.mxu0 0.0
    %2115 = vmatprep.subr.mxu0 0.0
    %2116 = vmatpush1.msra.mxu0 0.0
    %2117 = vmatprep.subr.mxu0 0.0
    %2118 = vmatpush1.msra.mxu0 0.0
    %2119 = vmatprep.subr.mxu0 0.0
    %2120 = vmatpush1.msra.mxu0 0.0
    %2121 = vmatprep.subr.mxu0 0.0
    %2122 = vmatpush1.msra.mxu0 0.0
    %2123 = vmatprep.subr.mxu0 0.0
    %2124 = vmatpush1.msra.mxu0 0.0
    %2125 = vmatprep.subr.mxu0 0.0
    %2126 = vmatpush1.msra.mxu0 0.0
    %2127 = vmatprep.subr.mxu0 0.0
    %2128 = vmatpush1.msra.mxu0 0.0
    %2129 = vmatprep.subr.mxu0 0.0
    %2130 = vmatpush1.msra.mxu0 0.0
    %2131 = vmatprep.subr.mxu0 0.0
    %2132 = vmatpush1.msra.mxu0 0.0
    %2133 = vmatprep.subr.mxu0 0.0
    %2134 = vmatpush1.msra.mxu0 0.0
    %2135 = vmatprep.subr.mxu0 0.0
    %2136 = vmatpush1.msra.mxu0 0.0
    %2137 = vmatprep.subr.mxu0 0.0
    %2138 = vmatpush1.msra.mxu0 0.0
    %2139 = vmatprep.mubr.f32.mxu0 0.0
    %2140 = vmatmul.mubr.f32.gmra.mrb[0].mxu0 %v2073
    %v2141 = vpop.f32.mrb[0].mxu0
    %v2142 = vadd.f32 %v2071, %v2141
    %v2143 = vpop.f32.mrb[0].mxu0
    %2144 = vdwg.mxu0
    %v2145 = vld [vmem:[#allocation2 + $0xae0] sm:$0xff]
    %v2146 = vld [vmem:[#allocation2 + $0xaf0] sm:$0xff]
    %v2147 = vld [vmem:[#allocation2 + $0xb00] sm:$0xff]
    %v2148 = vld [vmem:[#allocation2 + $0xb10] sm:$0xff]
    %v2149 = vld [vmem:[#allocation5 + $0x22] ss:$0 sm:$0xff]
    %2150 = vmatprep.subr.mxu0 0.0
    %2151 = vmatpush1.msra.mxu0 %v2145
    %2152 = vmatprep.subr.mxu0 0.0
    %2153 = vmatpush1.msra.mxu0 %v2146
    %2154 = vmatprep.subr.mxu0 0.0
    %2155 = vmatpush1.msra.mxu0 %v2147
    %2156 = vmatprep.subr.mxu0 0.0
    %2157 = vmatpush1.msra.mxu0 %v2148
    %2158 = vmatprep.subr.mxu0 0.0
    %2159 = vmatpush1.msra.mxu0 0.0
    %2160 = vmatprep.subr.mxu0 0.0
    %2161 = vmatpush1.msra.mxu0 0.0
    %2162 = vmatprep.subr.mxu0 0.0
    %2163 = vmatpush1.msra.mxu0 0.0
    %2164 = vmatprep.subr.mxu0 0.0
    %2165 = vmatpush1.msra.mxu0 0.0
    %2166 = vmatprep.subr.mxu0 0.0
    %2167 = vmatpush1.msra.mxu0 0.0
    %2168 = vmatprep.subr.mxu0 0.0
    %2169 = vmatpush1.msra.mxu0 0.0
    %2170 = vmatprep.subr.mxu0 0.0
    %2171 = vmatpush1.msra.mxu0 0.0
    %2172 = vmatprep.subr.mxu0 0.0
    %2173 = vmatpush1.msra.mxu0 0.0
    %2174 = vmatprep.subr.mxu0 0.0
    %2175 = vmatpush1.msra.mxu0 0.0
    %2176 = vmatprep.subr.mxu0 0.0
    %2177 = vmatpush1.msra.mxu0 0.0
    %2178 = vmatprep.subr.mxu0 0.0
    %2179 = vmatpush1.msra.mxu0 0.0
    %2180 = vmatprep.subr.mxu0 0.0
    %2181 = vmatpush1.msra.mxu0 0.0
    %2182 = vmatprep.subr.mxu0 0.0
    %2183 = vmatpush1.msra.mxu0 0.0
    %2184 = vmatprep.subr.mxu0 0.0
    %2185 = vmatpush1.msra.mxu0 0.0
    %2186 = vmatprep.subr.mxu0 0.0
    %2187 = vmatpush1.msra.mxu0 0.0
    %2188 = vmatprep.subr.mxu0 0.0
    %2189 = vmatpush1.msra.mxu0 0.0
    %2190 = vmatprep.subr.mxu0 0.0
    %2191 = vmatpush1.msra.mxu0 0.0
    %2192 = vmatprep.subr.mxu0 0.0
    %2193 = vmatpush1.msra.mxu0 0.0
    %2194 = vmatprep.subr.mxu0 0.0
    %2195 = vmatpush1.msra.mxu0 0.0
    %2196 = vmatprep.subr.mxu0 0.0
    %2197 = vmatpush1.msra.mxu0 0.0
    %2198 = vmatprep.subr.mxu0 0.0
    %2199 = vmatpush1.msra.mxu0 0.0
    %2200 = vmatprep.subr.mxu0 0.0
    %2201 = vmatpush1.msra.mxu0 0.0
    %2202 = vmatprep.subr.mxu0 0.0
    %2203 = vmatpush1.msra.mxu0 0.0
    %2204 = vmatprep.subr.mxu0 0.0
    %2205 = vmatpush1.msra.mxu0 0.0
    %2206 = vmatprep.subr.mxu0 0.0
    %2207 = vmatpush1.msra.mxu0 0.0
    %2208 = vmatprep.subr.mxu0 0.0
    %2209 = vmatpush1.msra.mxu0 0.0
    %2210 = vmatprep.subr.mxu0 0.0
    %2211 = vmatpush1.msra.mxu0 0.0
    %2212 = vmatprep.subr.mxu0 0.0
    %2213 = vmatpush1.msra.mxu0 0.0
    %2214 = vmatprep.mubr.f32.mxu0 0.0
    %2215 = vmatmul.mubr.f32.gmra.mrb[0].mxu0 %v2073
    %v2216 = vpop.f32.mrb[0].mxu0
    %v2217 = vadd.f32 %v2149, %v2216
    %v2218 = vpop.f32.mrb[0].mxu0
    %2219 = vdwg.mxu0
    %vm2220 = vcmask 254976
    %2221 = vst.msk [vmem:[#allocation7] sm:$0x3] %vm2220, %v2142
    %2222 = vst.msk [vmem:[#allocation8] sm:$0x3] %vm2220, %v2142
    %2223 = vst.msk [vmem:[#allocation10] sm:$0x3] %vm2220, %v2217
    %v2224 = vld [vmem:[#allocation2 + $0xb20] sm:$0xff]
    %v2225 = vld [vmem:[#allocation2 + $0xb30] sm:$0xff]
    %v2226 = vld [vmem:[#allocation2 + $0xb40] sm:$0xff]
    %v2227 = vld [vmem:[#allocation2 + $0xb50] sm:$0xff]
    %v2228 = vld [vmem:[#allocation5 + $0x23] ss:$0 sm:$0xff]
    %v2230 = vsel %vm197, %v2142, 0
    %2232 = vmatprep.subr.mxu0 0.0
    %2233 = vmatpush1.msra.mxu0 %v2224
    %2234 = vmatprep.subr.mxu0 0.0
    %2235 = vmatpush1.msra.mxu0 %v2225
    %2236 = vmatprep.subr.mxu0 0.0
    %2237 = vmatpush1.msra.mxu0 %v2226
    %2238 = vmatprep.subr.mxu0 0.0
    %2239 = vmatpush1.msra.mxu0 %v2227
    %2240 = vmatprep.subr.mxu0 0.0
    %2241 = vmatpush1.msra.mxu0 0.0
    %2242 = vmatprep.subr.mxu0 0.0
    %2243 = vmatpush1.msra.mxu0 0.0
    %2244 = vmatprep.subr.mxu0 0.0
    %2245 = vmatpush1.msra.mxu0 0.0
    %2246 = vmatprep.subr.mxu0 0.0
    %2247 = vmatpush1.msra.mxu0 0.0
    %2248 = vmatprep.subr.mxu0 0.0
    %2249 = vmatpush1.msra.mxu0 0.0
    %2250 = vmatprep.subr.mxu0 0.0
    %2251 = vmatpush1.msra.mxu0 0.0
    %2252 = vmatprep.subr.mxu0 0.0
    %2253 = vmatpush1.msra.mxu0 0.0
    %2254 = vmatprep.subr.mxu0 0.0
    %2255 = vmatpush1.msra.mxu0 0.0
    %2256 = vmatprep.subr.mxu0 0.0
    %2257 = vmatpush1.msra.mxu0 0.0
    %2258 = vmatprep.subr.mxu0 0.0
    %2259 = vmatpush1.msra.mxu0 0.0
    %2260 = vmatprep.subr.mxu0 0.0
    %2261 = vmatpush1.msra.mxu0 0.0
    %2262 = vmatprep.subr.mxu0 0.0
    %2263 = vmatpush1.msra.mxu0 0.0
    %2264 = vmatprep.subr.mxu0 0.0
    %2265 = vmatpush1.msra.mxu0 0.0
    %2266 = vmatprep.subr.mxu0 0.0
    %2267 = vmatpush1.msra.mxu0 0.0
    %2268 = vmatprep.subr.mxu0 0.0
    %2269 = vmatpush1.msra.mxu0 0.0
    %2270 = vmatprep.subr.mxu0 0.0
    %2271 = vmatpush1.msra.mxu0 0.0
    %2272 = vmatprep.subr.mxu0 0.0
    %2273 = vmatpush1.msra.mxu0 0.0
    %2274 = vmatprep.subr.mxu0 0.0
    %2275 = vmatpush1.msra.mxu0 0.0
    %2276 = vmatprep.subr.mxu0 0.0
    %2277 = vmatpush1.msra.mxu0 0.0
    %2278 = vmatprep.subr.mxu0 0.0
    %2279 = vmatpush1.msra.mxu0 0.0
    %2280 = vmatprep.subr.mxu0 0.0
    %2281 = vmatpush1.msra.mxu0 0.0
    %2282 = vmatprep.subr.mxu0 0.0
    %2283 = vmatpush1.msra.mxu0 0.0
    %2284 = vmatprep.subr.mxu0 0.0
    %2285 = vmatpush1.msra.mxu0 0.0
    %2286 = vmatprep.subr.mxu0 0.0
    %2287 = vmatpush1.msra.mxu0 0.0
    %2288 = vmatprep.subr.mxu0 0.0
    %2289 = vmatpush1.msra.mxu0 0.0
    %2290 = vmatprep.subr.mxu0 0.0
    %2291 = vmatpush1.msra.mxu0 0.0
    %2292 = vmatprep.subr.mxu0 0.0
    %2293 = vmatpush1.msra.mxu0 0.0
    %2294 = vmatprep.subr.mxu0 0.0
    %2295 = vmatpush1.msra.mxu0 0.0
    %2296 = vmatprep.mubr.f32.mxu0 0.0
    %2297 = vmatmul.mubr.f32.gmra.mrb[0].mxu0 %v2230
    %v2298 = vpop.f32.mrb[0].mxu0
    %v2299 = vadd.f32 %v2228, %v2298
    %v2300 = vpop.f32.mrb[0].mxu0
    %2301 = vdwg.mxu0
    %v2302 = vld [vmem:[#allocation5 + $0x24] ss:$0 sm:$0xff]
    %v2303 = vld [vmem:[#allocation5 + $0x25] ss:$0 sm:$0xff]
    %vm2304 = vcmask 517120
    %v2305 = vsel %vm2304, %v2299, 0.0
    %v2306 = vrot.slane %v2305, 4
    %v2307 = vadd.f32 %v2305, %v2306
    %v2308 = vrot.slane %v2307, 2
    %v2309 = vadd.f32 %v2307, %v2308
    %v2310 = vrot.slane %v2309, 1
    %v2311 = vadd.f32 %v2309, %v2310
    %v2312 = vmul.f32 %v2311, %v1780
    %v2313 = vsub.f32 %v2299, %v2312
    %v2314 = vmul.f32 %v2313, %v2313
    %v2315 = vsel %vm2304, %v2314, 0.0
    %v2316 = vrot.slane %v2315, 4
    %v2317 = vadd.f32 %v2315, %v2316
    %v2318 = vrot.slane %v2317, 2
    %v2319 = vadd.f32 %v2317, %v2318
    %v2320 = vrot.slane %v2319, 1
    %v2321 = vadd.f32 %v2319, %v2320
    %v2322 = vmul.f32 %v2321, %v1780
    %v2323 = vadd.f32 %v2322, 1e-05
    %v2324 = vrsqrt.pop %v2323
    %v2325 = vmul.f32 %v2302, %v2324
    %v2326 = vmul.f32 %v2313, %v2325
    %v2327 = vadd.f32 %v2326, %v2303
    %v2328 = vld [vmem:[#allocation2 + $0xb60] sm:$0xff]
    %v2329 = vld [vmem:[#allocation2 + $0xb68] sm:$0xff]
    %v2330 = vld [vmem:[#allocation2 + $0xb70] sm:$0xff]
    %v2331 = vld [vmem:[#allocation2 + $0xb78] sm:$0xff]
    %v2332 = vld [vmem:[#allocation2 + $0xb80] sm:$0xff]
    %v2333 = vld [vmem:[#allocation2 + $0xb88] sm:$0xff]
    %v2334 = vld [vmem:[#allocation2 + $0xb90] sm:$0xff]
    %v2335 = vld [vmem:[#allocation2 + $0xb98] sm:$0xff]
    %v2336 = vld [vmem:[#allocation2 + $0xba0] sm:$0xff]
    %v2337 = vld [vmem:[#allocation2 + $0xba8] sm:$0xff]
    %v2338 = vld [vmem:[#allocation2 + $0xbb0] sm:$0xff]
    %v2339 = vld [vmem:[#allocation2 + $0xbb8] sm:$0xff]
    %v2340 = vld [vmem:[#allocation2 + $0xbc0] sm:$0xff]
    %v2341 = vld [vmem:[#allocation2 + $0xbc8] sm:$0xff]
    %v2342 = vld [vmem:[#allocation2 + $0xbd0] sm:$0xff]
    %v2343 = vld [vmem:[#allocation2 + $0xbd8] sm:$0xff]
    %s2344 = scalar_lea.vmem [#allocation5], 38
    %v2345 = vld [vmem:[%s2344] ss:$8 sm:$0x3]
    %v2347 = vlaneseq
    %v2348 = vshrl.u32 %v2347, 7
    %v2349 = vsub.s32 0, %v2348
    %v2350 = vrot.slane %v2345, %v2349
    %v2351 = vlaneseq
    %v2352 = vshrl.u32 %v2351, 7
    %v2353 = vsub.s32 1, %v2352
    %v2354 = vrot.slane %v2345, %v2353
    %v2358 = vsel %vm560, %v2327, 0
    %2360 = vmatprep.subr.mxu0 %v2329
    %2361 = vmatpush1.msra.mxu0 %v2328
    %2362 = vmatprep.subr.mxu0 %v2331
    %2363 = vmatpush1.msra.mxu0 %v2330
    %2364 = vmatprep.subr.mxu0 %v2333
    %2365 = vmatpush1.msra.mxu0 %v2332
    %2366 = vmatprep.subr.mxu0 %v2335
    %2367 = vmatpush1.msra.mxu0 %v2334
    %2368 = vmatprep.subr.mxu0 %v2337
    %2369 = vmatpush1.msra.mxu0 %v2336
    %2370 = vmatprep.subr.mxu0 %v2339
    %2371 = vmatpush1.msra.mxu0 %v2338
    %2372 = vmatprep.subr.mxu0 %v2341
    %2373 = vmatpush1.msra.mxu0 %v2340
    %2374 = vmatprep.subr.mxu0 %v2343
    %2375 = vmatpush1.msra.mxu0 %v2342
    %2376 = vmatprep.subr.mxu0 0.0
    %2377 = vmatpush1.msra.mxu0 0.0
    %2378 = vmatprep.subr.mxu0 0.0
    %2379 = vmatpush1.msra.mxu0 0.0
    %2380 = vmatprep.subr.mxu0 0.0
    %2381 = vmatpush1.msra.mxu0 0.0
    %2382 = vmatprep.subr.mxu0 0.0
    %2383 = vmatpush1.msra.mxu0 0.0
    %2384 = vmatprep.subr.mxu0 0.0
    %2385 = vmatpush1.msra.mxu0 0.0
    %2386 = vmatprep.subr.mxu0 0.0
    %2387 = vmatpush1.msra.mxu0 0.0
    %2388 = vmatprep.subr.mxu0 0.0
    %2389 = vmatpush1.msra.mxu0 0.0
    %2390 = vmatprep.subr.mxu0 0.0
    %2391 = vmatpush1.msra.mxu0 0.0
    %2392 = vmatprep.subr.mxu0 0.0
    %2393 = vmatpush1.msra.mxu0 0.0
    %2394 = vmatprep.subr.mxu0 0.0
    %2395 = vmatpush1.msra.mxu0 0.0
    %2396 = vmatprep.subr.mxu0 0.0
    %2397 = vmatpush1.msra.mxu0 0.0
    %2398 = vmatprep.subr.mxu0 0.0
    %2399 = vmatpush1.msra.mxu0 0.0
    %2400 = vmatprep.subr.mxu0 0.0
    %2401 = vmatpush1.msra.mxu0 0.0
    %2402 = vmatprep.subr.mxu0 0.0
    %2403 = vmatpush1.msra.mxu0 0.0
    %2404 = vmatprep.subr.mxu0 0.0
    %2405 = vmatpush1.msra.mxu0 0.0
    %2406 = vmatprep.subr.mxu0 0.0
    %2407 = vmatpush1.msra.mxu0 0.0
    %2408 = vmatprep.subr.mxu0 0.0
    %2409 = vmatpush1.msra.mxu0 0.0
    %2410 = vmatprep.subr.mxu0 0.0
    %2411 = vmatpush1.msra.mxu0 0.0
    %2412 = vmatprep.subr.mxu0 0.0
    %2413 = vmatpush1.msra.mxu0 0.0
    %2414 = vmatprep.subr.mxu0 0.0
    %2415 = vmatpush1.msra.mxu0 0.0
    %2416 = vmatprep.subr.mxu0 0.0
    %2417 = vmatpush1.msra.mxu0 0.0
    %2418 = vmatprep.subr.mxu0 0.0
    %2419 = vmatpush1.msra.mxu0 0.0
    %2420 = vmatprep.subr.mxu0 0.0
    %2421 = vmatpush1.msra.mxu0 0.0
    %2422 = vmatprep.subr.mxu0 0.0
    %2423 = vmatpush1.msra.mxu0 0.0
    %2424 = vmatprep.mubr.f32.mxu0 0.0
    %2425 = vmatmul.mubr.f32.gmra.mrb[0].mxu0 %v2358
    %v2426 = vpop.f32.mrb[0].mxu0
    %v2427 = vadd.f32 %v2350, %v2426
    %v2428 = vpop.f32.mrb[0].mxu0
    %v2429 = vadd.f32 %v2354, %v2428
    %2430 = vdwg.mxu0
    %v2432 = vrot.slane %v2427, 1
    %2433 = vrot.lane.b32.xlu0 %v2432, 34
    %v2434 = vpop.permute.xlu0 %2433
    %vm2436 = vcmask 277504
    %v2437 = vsel %vm2436, %v2427, %v2434
    %2438 = vrot.lane.b32.xlu0 %v2427, 94
    %v2439 = vpop.permute.xlu0 %2438
    %v2442 = vsel %vm2436, %v2439, %v2432
    %2443 = vrot.lane.b32.xlu0 %v2427, 60
    %v2444 = vpop.permute.xlu0 %2443
    %2446 = vrot.lane.b32.xlu0 %v2432, 94
    %v2447 = vpop.permute.xlu0 %2446
    %v2449 = vsel %vm2436, %v2444, %v2447
    %2451 = vrot.lane.b32.xlu0 %v2427, 26
    %v2452 = vpop.permute.xlu0 %2451
    %2453 = vrot.lane.b32.xlu0 %v2429, 26
    %v2454 = vpop.permute.xlu0 %2453
    %vm2455 = vcmask 211968
    %v2456 = vsel %vm2455, %v2452, %v2454
    %v2458 = vrot.slane %v2429, 1
    %2459 = vrot.lane.b32.xlu0 %v2432, 60
    %v2460 = vpop.permute.xlu0 %2459
    %2461 = vrot.lane.b32.xlu0 %v2458, 60
    %v2462 = vpop.permute.xlu0 %2461
    %vm2463 = vcmask 490496
    %v2464 = vsel %vm2463, %v2460, %v2462
    %v2466 = vsel %vm2436, %v2456, %v2464
    %v2468 = vrot.slane %v2442, 7
    %v2471 = vrot.slane %v2449, 6
    %v2474 = vrot.slane %v2466, 5
    %v2476 = vsel %vm1507, %v2437, %v2468
    %v2477 = vsel %vm64, %v2476, %v2471
    %v2478 = vsel %vm849, %v2477, %v2474
    %2479 = vxpose.xlu0.b32.start [1/16] %v2478, 128
    %2480 = vxpose.xlu0.b32.cont [2/16] 0.0, 128
    %2481 = vxpose.xlu0.b32.cont [3/16] 0.0, 128
    %2482 = vxpose.xlu0.b32.cont [4/16] 0.0, 128
    %2483 = vxpose.xlu0.b32.cont [5/16] 0.0, 128
    %2484 = vxpose.xlu0.b32.cont [6/16] 0.0, 128
    %2485 = vxpose.xlu0.b32.cont [7/16] 0.0, 128
    %2486 = vxpose.xlu0.b32.cont [8/16] 0.0, 128
    %2487 = vxpose.xlu0.b32.cont [9/16] 0.0, 128
    %2488 = vxpose.xlu0.b32.cont [10/16] 0.0, 128
    %2489 = vxpose.xlu0.b32.cont [11/16] 0.0, 128
    %2490 = vxpose.xlu0.b32.cont [12/16] 0.0, 128
    %2491 = vxpose.xlu0.b32.cont [13/16] 0.0, 128
    %2492 = vxpose.xlu0.b32.cont [14/16] 0.0, 128
    %2493 = vxpose.xlu0.b32.cont [15/16] 0.0, 128
    %2494 = vxpose.xlu0.b32.end [16/16] 0.0, 128
    %v2495 = vpop.trf.xlu0
    %v2496 = vpop.trf.xlu0
    %v2497 = vpop.trf.xlu0
    %v2498 = vpop.trf.xlu0
    %v2499 = vpop.trf.xlu0
    %v2500 = vpop.trf.xlu0
    %v2501 = vpop.trf.xlu0
    %v2502 = vpop.trf.xlu0
    %v2503 = vpop.trf.xlu0
    %v2504 = vpop.trf.xlu0
    %v2505 = vpop.trf.xlu0
    %v2506 = vpop.trf.xlu0
    %v2507 = vpop.trf.xlu0
    %v2508 = vpop.trf.xlu0
    %v2509 = vpop.trf.xlu0
    %v2510 = vpop.trf.xlu0
    %v2516 = vrot.slane %v2495, 6
    %v2517 = vrot.slane %v2496, 6
    %v2518 = vsel %vm64, %v2516, %v2517
    %v2519 = vrot.slane %v2497, 6
    %v2520 = vsel %vm64, %v2517, %v2519
    %v2521 = vrot.slane %v2498, 6
    %v2522 = vsel %vm64, %v2519, %v2521
    %v2523 = vrot.slane %v2499, 6
    %v2524 = vsel %vm64, %v2521, %v2523
    %v2534 = vrot.slane %v2499, 2
    %v2535 = vrot.slane %v2500, 2
    %v2536 = vsel %vm84, %v2534, %v2535
    %v2537 = vrot.slane %v2501, 2
    %v2538 = vsel %vm84, %v2535, %v2537
    %v2539 = vrot.slane %v2502, 2
    %v2540 = vsel %vm84, %v2537, %v2539
    %v2541 = vrot.slane %v2503, 2
    %v2542 = vsel %vm84, %v2539, %v2541
    %v2544 = vsel %vm64, 0.0, %v2516
    %v2545 = vsel %vm130, %v2524, 0.0
    %v2546 = vsel %vm84, %v2545, 0.0
    %v2547 = vsel %vm64, %v2541, 0.0
    %v2548 = vld [vmem:[#allocation2 + $0xbe0] sm:$0xff]
    %v2549 = vld [vmem:[#allocation2 + $0xbf0] sm:$0xf]
    %v2550 = vld [vmem:[#allocation5 + $0x27] ss:$0 sm:$0xff]
    %v2553 = vrot.slane %v2546, 2
    %v2554 = vrot.slane %v2536, 2
    %v2555 = vsel %vm84, %v2553, %v2554
    %v2556 = vrot.slane %v2538, 2
    %v2557 = vsel %vm84, %v2554, %v2556
    %v2558 = vrot.slane %v2540, 2
    %v2559 = vsel %vm84, %v2556, %v2558
    %v2560 = vrot.slane %v2542, 2
    %v2561 = vsel %vm84, %v2558, %v2560
    %v2562 = vrot.slane %v2547, 2
    %v2563 = vsel %vm84, %v2560, %v2562
    %v2569 = vsel %vm130, %v2546, %v2555
    %v2571 = vrot.slane %v2544, 1
    %v2572 = vrot.slane %v2518, 1
    %v2573 = vsel %vm102, %v2571, %v2572
    %v2574 = vrot.slane %v2520, 1
    %v2575 = vsel %vm102, %v2572, %v2574
    %v2576 = vrot.slane %v2522, 1
    %v2577 = vsel %vm102, %v2574, %v2576
    %v2578 = vrot.slane %v2546, 1
    %v2579 = vsel %vm102, %v2576, %v2578
    %v2581 = vrot.slane %v2546, 3
    %v2582 = vrot.slane %v2536, 3
    %v2583 = vsel %vm112, %v2581, %v2582
    %v2584 = vrot.slane %v2538, 3
    %v2585 = vsel %vm112, %v2582, %v2584
    %v2586 = vrot.slane %v2540, 3
    %v2587 = vsel %vm112, %v2584, %v2586
    %v2588 = vrot.slane %v2542, 3
    %v2589 = vsel %vm112, %v2586, %v2588
    %v2590 = vrot.slane %v2547, 3
    %v2591 = vsel %vm112, %v2588, %v2590
    %v2593 = vsel %vm130, %v2578, %v2583
    %v2594 = vrot.slane %v2544, 2
    %v2595 = vrot.slane %v2518, 2
    %v2596 = vsel %vm84, %v2594, %v2595
    %v2597 = vrot.slane %v2520, 2
    %v2598 = vsel %vm84, %v2595, %v2597
    %v2599 = vrot.slane %v2522, 2
    %v2600 = vsel %vm84, %v2597, %v2599
    %v2601 = vsel %vm84, %v2599, %v2553
    %v2603 = vrot.slane %v2536, 4
    %v2604 = vrot.slane %v2538, 4
    %v2605 = vsel %vm130, %v2603, %v2604
    %v2606 = vrot.slane %v2540, 4
    %v2607 = vsel %vm130, %v2604, %v2606
    %v2608 = vrot.slane %v2542, 4
    %v2609 = vsel %vm130, %v2606, %v2608
    %v2610 = vrot.slane %v2547, 4
    %v2611 = vsel %vm130, %v2608, %v2610
    %v2613 = vsel %vm130, %v2553, %v2603
    %2615 = vrot.lane.b32.xlu0 %v2573, 4
    %v2616 = vpop.permute.xlu0 %2615
    %2617 = vrot.lane.b32.xlu0 %v2575, 4
    %v2618 = vpop.permute.xlu0 %2617
    %2619 = vrot.lane.b32.xlu0 %v2577, 4
    %v2620 = vpop.permute.xlu0 %2619
    %2621 = vrot.lane.b32.xlu0 %v2579, 4
    %v2622 = vpop.permute.xlu0 %2621
    %2623 = vrot.lane.b32.xlu0 %v2593, 4
    %v2624 = vpop.permute.xlu0 %2623
    %2625 = vrot.lane.b32.xlu0 %v2585, 4
    %v2626 = vpop.permute.xlu0 %2625
    %2627 = vrot.lane.b32.xlu0 %v2587, 4
    %v2628 = vpop.permute.xlu0 %2627
    %2629 = vrot.lane.b32.xlu0 %v2589, 4
    %v2630 = vpop.permute.xlu0 %2629
    %2631 = vrot.lane.b32.xlu0 %v2591, 4
    %v2632 = vpop.permute.xlu0 %2631
    %2643 = vrot.lane.b32.xlu0 %v2596, 8
    %v2644 = vpop.permute.xlu0 %2643
    %2645 = vrot.lane.b32.xlu0 %v2598, 8
    %v2646 = vpop.permute.xlu0 %2645
    %2647 = vrot.lane.b32.xlu0 %v2600, 8
    %v2648 = vpop.permute.xlu0 %2647
    %2649 = vrot.lane.b32.xlu0 %v2601, 8
    %v2650 = vpop.permute.xlu0 %2649
    %2651 = vrot.lane.b32.xlu0 %v2613, 8
    %v2652 = vpop.permute.xlu0 %2651
    %2653 = vrot.lane.b32.xlu0 %v2605, 8
    %v2654 = vpop.permute.xlu0 %2653
    %2655 = vrot.lane.b32.xlu0 %v2607, 8
    %v2656 = vpop.permute.xlu0 %2655
    %2657 = vrot.lane.b32.xlu0 %v2609, 8
    %v2658 = vpop.permute.xlu0 %2657
    %2659 = vrot.lane.b32.xlu0 %v2611, 8
    %v2660 = vpop.permute.xlu0 %2659
    %vm2670 = vcmask 31744
    %v2671 = vsel %vm2670, %v2544, %v2616
    %v2672 = vsel %vm2670, %v2518, %v2618
    %v2673 = vsel %vm2670, %v2520, %v2620
    %v2674 = vsel %vm2670, %v2522, %v2622
    %v2675 = vsel %vm2670, %v2569, %v2624
    %v2676 = vsel %vm2670, %v2557, %v2626
    %v2677 = vsel %vm2670, %v2559, %v2628
    %v2678 = vsel %vm2670, %v2561, %v2630
    %v2679 = vsel %vm2670, %v2563, %v2632
    %vm2680 = vcmask 64512
    %v2681 = vsel %vm2680, %v2671, %v2644
    %v2682 = vsel %vm2680, %v2672, %v2646
    %v2683 = vsel %vm2680, %v2673, %v2648
    %v2684 = vsel %vm2680, %v2674, %v2650
    %v2685 = vsel %vm2680, %v2675, %v2652
    %v2686 = vsel %vm2680, %v2676, %v2654
    %v2687 = vsel %vm2680, %v2677, %v2656
    %v2688 = vsel %vm2680, %v2678, %v2658
    %v2689 = vsel %vm2680, %v2679, %v2660
    %vm2690 = vcmask 97280
    %v2692 = vsel %vm2690, %v2681, 0
    %v2695 = vsel %vm2690, %v2682, 0
    %v2698 = vsel %vm2690, %v2683, 0
    %v2701 = vsel %vm2690, %v2684, 0
    %v2704 = vsel %vm2690, %v2685, 0
    %v2707 = vsel %vm2690, %v2686, 0
    %v2710 = vsel %vm2690, %v2687, 0
    %v2713 = vsel %vm2690, %v2688, 0
    %v2716 = vsel %vm2690, %v2689, 0
    %v2719 = vsel %vm130, %v2549, 0
    %2721 = vmatprep.subr.mxu0 0.0
    %2722 = vmatpush1.msra.mxu0 %v2548
    %2723 = vmatprep.subr.mxu0 0.0
    %2724 = vmatpush1.msra.mxu0 %v2719
    %2725 = vmatprep.subr.mxu0 0.0
    %2726 = vmatpush1.msra.mxu0 0.0
    %2727 = vmatprep.subr.mxu0 0.0
    %2728 = vmatpush1.msra.mxu0 0.0
    %2729 = vmatprep.subr.mxu0 0.0
    %2730 = vmatpush1.msra.mxu0 0.0
    %2731 = vmatprep.subr.mxu0 0.0
    %2732 = vmatpush1.msra.mxu0 0.0
    %2733 = vmatprep.subr.mxu0 0.0
    %2734 = vmatpush1.msra.mxu0 0.0
    %2735 = vmatprep.subr.mxu0 0.0
    %2736 = vmatpush1.msra.mxu0 0.0
    %2737 = vmatprep.subr.mxu0 0.0
    %2738 = vmatpush1.msra.mxu0 0.0
    %2739 = vmatprep.subr.mxu0 0.0
    %2740 = vmatpush1.msra.mxu0 0.0
    %2741 = vmatprep.subr.mxu0 0.0
    %2742 = vmatpush1.msra.mxu0 0.0
    %2743 = vmatprep.subr.mxu0 0.0
    %2744 = vmatpush1.msra.mxu0 0.0
    %2745 = vmatprep.subr.mxu0 0.0
    %2746 = vmatpush1.msra.mxu0 0.0
    %2747 = vmatprep.subr.mxu0 0.0
    %2748 = vmatpush1.msra.mxu0 0.0
    %2749 = vmatprep.subr.mxu0 0.0
    %2750 = vmatpush1.msra.mxu0 0.0
    %2751 = vmatprep.subr.mxu0 0.0
    %2752 = vmatpush1.msra.mxu0 0.0
    %2753 = vmatprep.subr.mxu0 0.0
    %2754 = vmatpush1.msra.mxu0 0.0
    %2755 = vmatprep.subr.mxu0 0.0
    %2756 = vmatpush1.msra.mxu0 0.0
    %2757 = vmatprep.subr.mxu0 0.0
    %2758 = vmatpush1.msra.mxu0 0.0
    %2759 = vmatprep.subr.mxu0 0.0
    %2760 = vmatpush1.msra.mxu0 0.0
    %2761 = vmatprep.subr.mxu0 0.0
    %2762 = vmatpush1.msra.mxu0 0.0
    %2763 = vmatprep.subr.mxu0 0.0
    %2764 = vmatpush1.msra.mxu0 0.0
    %2765 = vmatprep.subr.mxu0 0.0
    %2766 = vmatpush1.msra.mxu0 0.0
    %2767 = vmatprep.subr.mxu0 0.0
    %2768 = vmatpush1.msra.mxu0 0.0
    %2769 = vmatprep.subr.mxu0 0.0
    %2770 = vmatpush1.msra.mxu0 0.0
    %2771 = vmatprep.subr.mxu0 0.0
    %2772 = vmatpush1.msra.mxu0 0.0
    %2773 = vmatprep.subr.mxu0 0.0
    %2774 = vmatpush1.msra.mxu0 0.0
    %2775 = vmatprep.subr.mxu0 0.0
    %2776 = vmatpush1.msra.mxu0 0.0
    %2777 = vmatprep.subr.mxu0 0.0
    %2778 = vmatpush1.msra.mxu0 0.0
    %2779 = vmatprep.subr.mxu0 0.0
    %2780 = vmatpush1.msra.mxu0 0.0
    %2781 = vmatprep.subr.mxu0 0.0
    %2782 = vmatpush1.msra.mxu0 0.0
    %2783 = vmatprep.subr.mxu0 0.0
    %2784 = vmatpush1.msra.mxu0 0.0
    %2785 = vmatprep.mubr.f32.mxu0 0.0
    %2786 = vmatmul.mubr.f32.gmra.mrb[0].mxu0 %v2692
    %v2787 = vpop.f32.mrb[0].mxu0
    %v2788 = vadd.f32 %v2550, %v2787
    %v2789 = vpop.f32.mrb[0].mxu0
    %2790 = vmatprep.mubr.f32.mxu0 0.0
    %2791 = vmatmul.mubr.f32.gmra.mrb[0].mxu0 %v2695
    %v2792 = vpop.f32.mrb[0].mxu0
    %v2793 = vadd.f32 %v2550, %v2792
    %v2794 = vpop.f32.mrb[0].mxu0
    %2795 = vmatprep.mubr.f32.mxu0 0.0
    %2796 = vmatmul.mubr.f32.gmra.mrb[0].mxu0 %v2698
    %v2797 = vpop.f32.mrb[0].mxu0
    %v2798 = vadd.f32 %v2550, %v2797
    %v2799 = vpop.f32.mrb[0].mxu0
    %2800 = vmatprep.mubr.f32.mxu0 0.0
    %2801 = vmatmul.mubr.f32.gmra.mrb[0].mxu0 %v2701
    %v2802 = vpop.f32.mrb[0].mxu0
    %v2803 = vadd.f32 %v2550, %v2802
    %v2804 = vpop.f32.mrb[0].mxu0
    %2805 = vmatprep.mubr.f32.mxu0 0.0
    %2806 = vmatmul.mubr.f32.gmra.mrb[0].mxu0 %v2704
    %v2807 = vpop.f32.mrb[0].mxu0
    %v2808 = vadd.f32 %v2550, %v2807
    %v2809 = vpop.f32.mrb[0].mxu0
    %2810 = vmatprep.mubr.f32.mxu0 0.0
    %2811 = vmatmul.mubr.f32.gmra.mrb[0].mxu0 %v2707
    %v2812 = vpop.f32.mrb[0].mxu0
    %v2813 = vadd.f32 %v2550, %v2812
    %v2814 = vpop.f32.mrb[0].mxu0
    %2815 = vmatprep.mubr.f32.mxu0 0.0
    %2816 = vmatmul.mubr.f32.gmra.mrb[0].mxu0 %v2710
    %v2817 = vpop.f32.mrb[0].mxu0
    %v2818 = vadd.f32 %v2550, %v2817
    %v2819 = vpop.f32.mrb[0].mxu0
    %2820 = vmatprep.mubr.f32.mxu0 0.0
    %2821 = vmatmul.mubr.f32.gmra.mrb[0].mxu0 %v2713
    %v2822 = vpop.f32.mrb[0].mxu0
    %v2823 = vadd.f32 %v2550, %v2822
    %v2824 = vpop.f32.mrb[0].mxu0
    %2825 = vmatprep.mubr.f32.mxu0 0.0
    %2826 = vmatmul.mubr.f32.gmra.mrb[0].mxu0 %v2716
    %v2827 = vpop.f32.mrb[0].mxu0
    %v2828 = vadd.f32 %v2550, %v2827
    %v2829 = vpop.f32.mrb[0].mxu0
    %2830 = vdwg.mxu0
    %v2831 = vld [vmem:[#allocation5 + $0x30] ss:$0 sm:$0xff]
    %v2832 = vld [vmem:[#allocation5 + $0x31] ss:$0 sm:$0xff]
    %v2833 = vsel %vm197, %v2788, 0.0
    %v2834 = vsel %vm197, %v2793, 0.0
    %v2835 = vadd.f32 %v2833, %v2834
    %v2836 = vsel %vm197, %v2798, 0.0
    %v2837 = vadd.f32 %v2835, %v2836
    %v2838 = vsel %vm197, %v2803, 0.0
    %v2839 = vadd.f32 %v2837, %v2838
    %v2840 = vsel %vm197, %v2808, 0.0
    %v2841 = vadd.f32 %v2839, %v2840
    %v2842 = vsel %vm197, %v2813, 0.0
    %v2843 = vadd.f32 %v2841, %v2842
    %v2844 = vsel %vm197, %v2818, 0.0
    %v2845 = vadd.f32 %v2843, %v2844
    %v2846 = vsel %vm197, %v2823, 0.0
    %v2847 = vadd.f32 %v2845, %v2846
    %v2848 = vsel %vm197, %v2828, 0.0
    %v2849 = vadd.f32 %v2847, %v2848
    %v2850 = vrot.slane %v2849, 4
    %v2851 = vadd.f32 %v2849, %v2850
    %v2852 = vrot.slane %v2851, 2
    %v2853 = vadd.f32 %v2851, %v2852
    %v2854 = vrot.slane %v2853, 1
    %v2855 = vadd.f32 %v2853, %v2854
    %v2856 = vrcp.pop 72.0
    %v2857 = vmul.f32 %v2855, %v2856
    %v2858 = vsub.f32 %v2788, %v2857
    %v2859 = vsub.f32 %v2793, %v2857
    %v2860 = vsub.f32 %v2798, %v2857
    %v2861 = vsub.f32 %v2803, %v2857
    %v2862 = vsub.f32 %v2808, %v2857
    %v2863 = vsub.f32 %v2813, %v2857
    %v2864 = vsub.f32 %v2818, %v2857
    %v2865 = vsub.f32 %v2823, %v2857
    %v2866 = vsub.f32 %v2828, %v2857
    %v2867 = vmul.f32 %v2858, %v2858
    %v2868 = vmul.f32 %v2859, %v2859
    %v2869 = vmul.f32 %v2860, %v2860
    %v2870 = vmul.f32 %v2861, %v2861
    %v2871 = vmul.f32 %v2862, %v2862
    %v2872 = vmul.f32 %v2863, %v2863
    %v2873 = vmul.f32 %v2864, %v2864
    %v2874 = vmul.f32 %v2865, %v2865
    %v2875 = vmul.f32 %v2866, %v2866
    %v2876 = vsel %vm197, %v2867, 0.0
    %v2877 = vsel %vm197, %v2868, 0.0
    %v2878 = vadd.f32 %v2876, %v2877
    %v2879 = vsel %vm197, %v2869, 0.0
    %v2880 = vadd.f32 %v2878, %v2879
    %v2881 = vsel %vm197, %v2870, 0.0
    %v2882 = vadd.f32 %v2880, %v2881
    %v2883 = vsel %vm197, %v2871, 0.0
    %v2884 = vadd.f32 %v2882, %v2883
    %v2885 = vsel %vm197, %v2872, 0.0
    %v2886 = vadd.f32 %v2884, %v2885
    %v2887 = vsel %vm197, %v2873, 0.0
    %v2888 = vadd.f32 %v2886, %v2887
    %v2889 = vsel %vm197, %v2874, 0.0
    %v2890 = vadd.f32 %v2888, %v2889
    %v2891 = vsel %vm197, %v2875, 0.0
    %v2892 = vadd.f32 %v2890, %v2891
    %v2893 = vrot.slane %v2892, 4
    %v2894 = vadd.f32 %v2892, %v2893
    %v2895 = vrot.slane %v2894, 2
    %v2896 = vadd.f32 %v2894, %v2895
    %v2897 = vrot.slane %v2896, 1
    %v2898 = vadd.f32 %v2896, %v2897
    %v2899 = vmul.f32 %v2898, %v2856
    %v2900 = vadd.f32 %v2899, 1e-05
    %v2901 = vrsqrt.pop %v2900
    %v2902 = vmul.f32 %v2831, %v2901
    %v2903 = vmul.f32 %v2858, %v2902
    %v2904 = vmul.f32 %v2859, %v2902
    %v2905 = vmul.f32 %v2860, %v2902
    %v2906 = vmul.f32 %v2861, %v2902
    %v2907 = vmul.f32 %v2862, %v2902
    %v2908 = vmul.f32 %v2863, %v2902
    %v2909 = vmul.f32 %v2864, %v2902
    %v2910 = vmul.f32 %v2865, %v2902
    %v2911 = vmul.f32 %v2866, %v2902
    %v2912 = vadd.f32 %v2903, %v2832
    %v2913 = vadd.f32 %v2904, %v2832
    %v2914 = vadd.f32 %v2905, %v2832
    %v2915 = vadd.f32 %v2906, %v2832
    %v2916 = vadd.f32 %v2907, %v2832
    %v2917 = vadd.f32 %v2908, %v2832
    %v2918 = vadd.f32 %v2909, %v2832
    %v2919 = vadd.f32 %v2910, %v2832
    %v2920 = vadd.f32 %v2911, %v2832
    %v2921 = vmul.f32 %v2912, 0.2
    %v2922 = vmul.f32 %v2913, 0.2
    %v2923 = vmul.f32 %v2914, 0.2
    %v2924 = vmul.f32 %v2915, 0.2
    %v2925 = vmul.f32 %v2916, 0.2
    %v2926 = vmul.f32 %v2917, 0.2
    %v2927 = vmul.f32 %v2918, 0.2
    %v2928 = vmul.f32 %v2919, 0.2
    %v2929 = vmul.f32 %v2920, 0.2
    %v2930 = vmax.f32 %v2912, %v2921
    %v2931 = vmax.f32 %v2913, %v2922
    %v2932 = vmax.f32 %v2914, %v2923
    %v2933 = vmax.f32 %v2915, %v2924
    %v2934 = vmax.f32 %v2916, %v2925
    %v2935 = vmax.f32 %v2917, %v2926
    %v2936 = vmax.f32 %v2918, %v2927
    %v2937 = vmax.f32 %v2919, %v2928
    %v2938 = vmax.f32 %v2920, %v2929
    %v2944 = vrot.slane %v2930, 6
    %v2945 = vrot.slane %v2931, 6
    %v2946 = vsel %vm64, %v2944, %v2945
    %v2947 = vrot.slane %v2932, 6
    %v2948 = vsel %vm64, %v2945, %v2947
    %v2949 = vrot.slane %v2933, 6
    %v2950 = vsel %vm64, %v2947, %v2949
    %v2951 = vrot.slane %v2934, 6
    %v2952 = vsel %vm64, %v2949, %v2951
    %v2962 = vrot.slane %v2934, 2
    %v2963 = vrot.slane %v2935, 2
    %v2964 = vsel %vm84, %v2962, %v2963
    %v2965 = vrot.slane %v2936, 2
    %v2966 = vsel %vm84, %v2963, %v2965
    %v2967 = vrot.slane %v2937, 2
    %v2968 = vsel %vm84, %v2965, %v2967
    %v2969 = vrot.slane %v2938, 2
    %v2970 = vsel %vm84, %v2967, %v2969
    %v2973 = vsel %vm64, 0.0, %v2944
    %v2974 = vsel %vm84, %v2952, 0.0
    %v2975 = vsel %vm64, 0.0, %v2964
    %v2976 = vsel %vm84, %v2969, 0.0
    %v2977 = vld [vmem:[#allocation2 + $0xc00] sm:$0xff]
    %v2978 = vld [vmem:[#allocation2 + $0xc10] sm:$0xff]
    %v2979 = vld [vmem:[#allocation2 + $0xc20] sm:$0xff]
    %v2980 = vld [vmem:[#allocation2 + $0xc30] sm:$0xff]
    %v2981 = vld [vmem:[#allocation2 + $0xc40] sm:$0xff]
    %v2982 = vld [vmem:[#allocation2 + $0xc50] sm:$0xff]
    %v2983 = vld [vmem:[#allocation2 + $0xc60] sm:$0xff]
    %v2984 = vld [vmem:[#allocation2 + $0xc70] sm:$0xff]
    %v2985 = vld [vmem:[#allocation2 + $0xc80] sm:$0xff]
    %v2986 = vld [vmem:[#allocation2 + $0xc90] sm:$0xff]
    %v2987 = vld [vmem:[#allocation2 + $0xca0] sm:$0xff]
    %v2988 = vld [vmem:[#allocation2 + $0xcb0] sm:$0xff]
    %v2989 = vld [vmem:[#allocation5 + $0x32] ss:$0 sm:$0xff]
    %v2992 = vrot.slane %v2975, 2
    %v2993 = vrot.slane %v2966, 2
    %v2994 = vsel %vm84, %v2992, %v2993
    %v2995 = vrot.slane %v2968, 2
    %v2996 = vsel %vm84, %v2993, %v2995
    %v2997 = vrot.slane %v2970, 2
    %v2998 = vsel %vm84, %v2995, %v2997
    %v2999 = vrot.slane %v2976, 2
    %v3000 = vsel %vm84, %v2997, %v2999
    %v3007 = vsel %vm84, %v2974, %v2992
    %v3010 = vrot.slane %v2973, 1
    %v3011 = vrot.slane %v2946, 1
    %v3012 = vsel %vm102, %v3010, %v3011
    %v3013 = vrot.slane %v2948, 1
    %v3014 = vsel %vm102, %v3011, %v3013
    %v3015 = vrot.slane %v2950, 1
    %v3016 = vsel %vm102, %v3013, %v3015
    %v3017 = vrot.slane %v2974, 1
    %v3018 = vsel %vm102, %v3015, %v3017
    %v3020 = vrot.slane %v2975, 3
    %v3021 = vrot.slane %v2966, 3
    %v3022 = vsel %vm112, %v3020, %v3021
    %v3023 = vrot.slane %v2968, 3
    %v3024 = vsel %vm112, %v3021, %v3023
    %v3025 = vrot.slane %v2970, 3
    %v3026 = vsel %vm112, %v3023, %v3025
    %v3027 = vrot.slane %v2976, 3
    %v3028 = vsel %vm112, %v3025, %v3027
    %v3030 = vsel %vm84, %v3017, %v3020
    %v3031 = vrot.slane %v2973, 2
    %v3032 = vrot.slane %v2946, 2
    %v3033 = vsel %vm84, %v3031, %v3032
    %v3034 = vrot.slane %v2948, 2
    %v3035 = vsel %vm84, %v3032, %v3034
    %v3036 = vrot.slane %v2950, 2
    %v3037 = vsel %vm84, %v3034, %v3036
    %v3038 = vrot.slane %v2974, 2
    %v3039 = vsel %vm84, %v3036, %v3038
    %v3041 = vrot.slane %v2975, 4
    %v3042 = vrot.slane %v2966, 4
    %v3043 = vsel %vm130, %v3041, %v3042
    %v3044 = vrot.slane %v2968, 4
    %v3045 = vsel %vm130, %v3042, %v3044
    %v3046 = vrot.slane %v2970, 4
    %v3047 = vsel %vm130, %v3044, %v3046
    %v3048 = vrot.slane %v2976, 4
    %v3049 = vsel %vm130, %v3046, %v3048
    %v3051 = vsel %vm84, %v3038, %v3041
    %3053 = vrot.lane.b32.xlu0 %v3012, 32
    %v3054 = vpop.permute.xlu0 %3053
    %3055 = vrot.lane.b32.xlu0 %v3014, 32
    %v3056 = vpop.permute.xlu0 %3055
    %3057 = vrot.lane.b32.xlu0 %v3016, 32
    %v3058 = vpop.permute.xlu0 %3057
    %3059 = vrot.lane.b32.xlu0 %v3018, 32
    %v3060 = vpop.permute.xlu0 %3059
    %3061 = vrot.lane.b32.xlu0 %v3030, 32
    %v3062 = vpop.permute.xlu0 %3061
    %3063 = vrot.lane.b32.xlu0 %v3022, 32
    %v3064 = vpop.permute.xlu0 %3063
    %3065 = vrot.lane.b32.xlu0 %v3024, 32
    %v3066 = vpop.permute.xlu0 %3065
    %3067 = vrot.lane.b32.xlu0 %v3026, 32
    %v3068 = vpop.permute.xlu0 %3067
    %3069 = vrot.lane.b32.xlu0 %v3028, 32
    %v3070 = vpop.permute.xlu0 %3069
    %3071 = vrot.lane.b32.xlu0 %v3027, 32
    %v3072 = vpop.permute.xlu0 %3071
    %3084 = vrot.lane.b32.xlu0 %v3033, 64
    %v3085 = vpop.permute.xlu0 %3084
    %3086 = vrot.lane.b32.xlu0 %v3035, 64
    %v3087 = vpop.permute.xlu0 %3086
    %3088 = vrot.lane.b32.xlu0 %v3037, 64
    %v3089 = vpop.permute.xlu0 %3088
    %3090 = vrot.lane.b32.xlu0 %v3039, 64
    %v3091 = vpop.permute.xlu0 %3090
    %3092 = vrot.lane.b32.xlu0 %v3051, 64
    %v3093 = vpop.permute.xlu0 %3092
    %3094 = vrot.lane.b32.xlu0 %v3043, 64
    %v3095 = vpop.permute.xlu0 %3094
    %3096 = vrot.lane.b32.xlu0 %v3045, 64
    %v3097 = vpop.permute.xlu0 %3096
    %3098 = vrot.lane.b32.xlu0 %v3047, 64
    %v3099 = vpop.permute.xlu0 %3098
    %3100 = vrot.lane.b32.xlu0 %v3049, 64
    %v3101 = vpop.permute.xlu0 %3100
    %3102 = vrot.lane.b32.xlu0 %v3048, 64
    %v3103 = vpop.permute.xlu0 %3102
    %v3114 = vsel %vm197, %v2973, %v3054
    %v3115 = vsel %vm197, %v2946, %v3056
    %v3116 = vsel %vm197, %v2948, %v3058
    %v3117 = vsel %vm197, %v2950, %v3060
    %v3118 = vsel %vm197, %v3007, %v3062
    %v3119 = vsel %vm197, %v2994, %v3064
    %v3120 = vsel %vm197, %v2996, %v3066
    %v3121 = vsel %vm197, %v2998, %v3068
    %v3122 = vsel %vm197, %v3000, %v3070
    %v3123 = vsel %vm197, %v2999, %v3072
    %v3124 = vsel %vm560, %v3114, %v3085
    %v3125 = vsel %vm560, %v3115, %v3087
    %v3126 = vsel %vm560, %v3116, %v3089
    %v3127 = vsel %vm560, %v3117, %v3091
    %v3128 = vsel %vm560, %v3118, %v3093
    %v3129 = vsel %vm560, %v3119, %v3095
    %v3130 = vsel %vm560, %v3120, %v3097
    %v3131 = vsel %vm560, %v3121, %v3099
    %v3132 = vsel %vm560, %v3122, %v3101
    %v3133 = vsel %vm560, %v3123, %v3103
    %v3135 = vsel %vm569, %v3124, 0
    %v3138 = vsel %vm569, %v3125, 0
    %v3141 = vsel %vm569, %v3126, 0
    %v3144 = vsel %vm569, %v3127, 0
    %v3147 = vsel %vm569, %v3128, 0
    %v3150 = vsel %vm569, %v3129, 0
    %v3153 = vsel %vm569, %v3130, 0
    %v3156 = vsel %vm569, %v3131, 0
    %v3159 = vsel %vm569, %v3132, 0
    %v3162 = vsel %vm569, %v3133, 0
    %3164 = vmatprep.subr.mxu0 0.0
    %3165 = vmatpush1.msra.mxu0 %v2977
    %3166 = vmatprep.subr.mxu0 0.0
    %3167 = vmatpush1.msra.mxu0 %v2978
    %3168 = vmatprep.subr.mxu0 0.0
    %3169 = vmatpush1.msra.mxu0 %v2979
    %3170 = vmatprep.subr.mxu0 0.0
    %3171 = vmatpush1.msra.mxu0 %v2980
    %3172 = vmatprep.subr.mxu0 0.0
    %3173 = vmatpush1.msra.mxu0 %v2981
    %3174 = vmatprep.subr.mxu0 0.0
    %3175 = vmatpush1.msra.mxu0 %v2982
    %3176 = vmatprep.subr.mxu0 0.0
    %3177 = vmatpush1.msra.mxu0 %v2983
    %3178 = vmatprep.subr.mxu0 0.0
    %3179 = vmatpush1.msra.mxu0 %v2984
    %3180 = vmatprep.subr.mxu0 0.0
    %3181 = vmatpush1.msra.mxu0 %v2985
    %3182 = vmatprep.subr.mxu0 0.0
    %3183 = vmatpush1.msra.mxu0 %v2986
    %3184 = vmatprep.subr.mxu0 0.0
    %3185 = vmatpush1.msra.mxu0 %v2987
    %3186 = vmatprep.subr.mxu0 0.0
    %3187 = vmatpush1.msra.mxu0 %v2988
    %3188 = vmatprep.subr.mxu0 0.0
    %3189 = vmatpush1.msra.mxu0 0.0
    %3190 = vmatprep.subr.mxu0 0.0
    %3191 = vmatpush1.msra.mxu0 0.0
    %3192 = vmatprep.subr.mxu0 0.0
    %3193 = vmatpush1.msra.mxu0 0.0
    %3194 = vmatprep.subr.mxu0 0.0
    %3195 = vmatpush1.msra.mxu0 0.0
    %3196 = vmatprep.subr.mxu0 0.0
    %3197 = vmatpush1.msra.mxu0 0.0
    %3198 = vmatprep.subr.mxu0 0.0
    %3199 = vmatpush1.msra.mxu0 0.0
    %3200 = vmatprep.subr.mxu0 0.0
    %3201 = vmatpush1.msra.mxu0 0.0
    %3202 = vmatprep.subr.mxu0 0.0
    %3203 = vmatpush1.msra.mxu0 0.0
    %3204 = vmatprep.subr.mxu0 0.0
    %3205 = vmatpush1.msra.mxu0 0.0
    %3206 = vmatprep.subr.mxu0 0.0
    %3207 = vmatpush1.msra.mxu0 0.0
    %3208 = vmatprep.subr.mxu0 0.0
    %3209 = vmatpush1.msra.mxu0 0.0
    %3210 = vmatprep.subr.mxu0 0.0
    %3211 = vmatpush1.msra.mxu0 0.0
    %3212 = vmatprep.subr.mxu0 0.0
    %3213 = vmatpush1.msra.mxu0 0.0
    %3214 = vmatprep.subr.mxu0 0.0
    %3215 = vmatpush1.msra.mxu0 0.0
    %3216 = vmatprep.subr.mxu0 0.0
    %3217 = vmatpush1.msra.mxu0 0.0
    %3218 = vmatprep.subr.mxu0 0.0
    %3219 = vmatpush1.msra.mxu0 0.0
    %3220 = vmatprep.subr.mxu0 0.0
    %3221 = vmatpush1.msra.mxu0 0.0
    %3222 = vmatprep.subr.mxu0 0.0
    %3223 = vmatpush1.msra.mxu0 0.0
    %3224 = vmatprep.subr.mxu0 0.0
    %3225 = vmatpush1.msra.mxu0 0.0
    %3226 = vmatprep.subr.mxu0 0.0
    %3227 = vmatpush1.msra.mxu0 0.0
    %3228 = vmatprep.mubr.f32.mxu0 0.0
    %3229 = vmatmul.mubr.f32.gmra.mrb[0].mxu0 %v3135
    %v3230 = vpop.f32.mrb[0].mxu0
    %v3231 = vadd.f32 %v2989, %v3230
    %v3232 = vpop.f32.mrb[0].mxu0
    %3233 = vmatprep.mubr.f32.mxu0 0.0
    %3234 = vmatmul.mubr.f32.gmra.mrb[0].mxu0 %v3138
    %v3235 = vpop.f32.mrb[0].mxu0
    %v3236 = vadd.f32 %v2989, %v3235
    %v3237 = vpop.f32.mrb[0].mxu0
    %3238 = vmatprep.mubr.f32.mxu0 0.0
    %3239 = vmatmul.mubr.f32.gmra.mrb[0].mxu0 %v3141
    %v3240 = vpop.f32.mrb[0].mxu0
    %v3241 = vadd.f32 %v2989, %v3240
    %v3242 = vpop.f32.mrb[0].mxu0
    %3243 = vmatprep.mubr.f32.mxu0 0.0
    %3244 = vmatmul.mubr.f32.gmra.mrb[0].mxu0 %v3144
    %v3245 = vpop.f32.mrb[0].mxu0
    %v3246 = vadd.f32 %v2989, %v3245
    %v3247 = vpop.f32.mrb[0].mxu0
    %3248 = vmatprep.mubr.f32.mxu0 0.0
    %3249 = vmatmul.mubr.f32.gmra.mrb[0].mxu0 %v3147
    %v3250 = vpop.f32.mrb[0].mxu0
    %v3251 = vadd.f32 %v2989, %v3250
    %v3252 = vpop.f32.mrb[0].mxu0
    %3253 = vmatprep.mubr.f32.mxu0 0.0
    %3254 = vmatmul.mubr.f32.gmra.mrb[0].mxu0 %v3150
    %v3255 = vpop.f32.mrb[0].mxu0
    %v3256 = vadd.f32 %v2989, %v3255
    %v3257 = vpop.f32.mrb[0].mxu0
    %3258 = vmatprep.mubr.f32.mxu0 0.0
    %3259 = vmatmul.mubr.f32.gmra.mrb[0].mxu0 %v3153
    %v3260 = vpop.f32.mrb[0].mxu0
    %v3261 = vadd.f32 %v2989, %v3260
    %v3262 = vpop.f32.mrb[0].mxu0
    %3263 = vmatprep.mubr.f32.mxu0 0.0
    %3264 = vmatmul.mubr.f32.gmra.mrb[0].mxu0 %v3156
    %v3265 = vpop.f32.mrb[0].mxu0
    %v3266 = vadd.f32 %v2989, %v3265
    %v3267 = vpop.f32.mrb[0].mxu0
    %3268 = vmatprep.mubr.f32.mxu0 0.0
    %3269 = vmatmul.mubr.f32.gmra.mrb[0].mxu0 %v3159
    %v3270 = vpop.f32.mrb[0].mxu0
    %v3271 = vadd.f32 %v2989, %v3270
    %v3272 = vpop.f32.mrb[0].mxu0
    %3273 = vmatprep.mubr.f32.mxu0 0.0
    %3274 = vmatmul.mubr.f32.gmra.mrb[0].mxu0 %v3162
    %v3275 = vpop.f32.mrb[0].mxu0
    %v3276 = vadd.f32 %v2989, %v3275
    %v3277 = vpop.f32.mrb[0].mxu0
    %3278 = vdwg.mxu0
    %v3279 = vld [vmem:[#allocation5 + $0x33] ss:$0 sm:$0xff]
    %v3280 = vld [vmem:[#allocation5 + $0x34] ss:$0 sm:$0xff]
    %v3281 = vsel %vm197, %v3231, 0.0
    %v3282 = vsel %vm197, %v3236, 0.0
    %v3283 = vadd.f32 %v3281, %v3282
    %v3284 = vsel %vm197, %v3241, 0.0
    %v3285 = vadd.f32 %v3283, %v3284
    %v3286 = vsel %vm197, %v3246, 0.0
    %v3287 = vadd.f32 %v3285, %v3286
    %v3288 = vsel %vm197, %v3251, 0.0
    %v3289 = vadd.f32 %v3287, %v3288
    %v3290 = vsel %vm197, %v3256, 0.0
    %v3291 = vadd.f32 %v3289, %v3290
    %v3292 = vsel %vm197, %v3261, 0.0
    %v3293 = vadd.f32 %v3291, %v3292
    %v3294 = vsel %vm197, %v3266, 0.0
    %v3295 = vadd.f32 %v3293, %v3294
    %v3296 = vsel %vm197, %v3271, 0.0
    %v3297 = vadd.f32 %v3295, %v3296
    %vm3298 = vcmask 257024
    %v3299 = vsel %vm3298, %v3276, 0.0
    %v3300 = vadd.f32 %v3297, %v3299
    %v3301 = vrot.slane %v3300, 4
    %v3302 = vadd.f32 %v3300, %v3301
    %v3303 = vrot.slane %v3302, 2
    %v3304 = vadd.f32 %v3302, %v3303
    %v3305 = vrot.slane %v3304, 1
    %v3306 = vadd.f32 %v3304, %v3305
    %v3307 = vrcp.pop 76.0
    %v3308 = vmul.f32 %v3306, %v3307
    %v3309 = vsub.f32 %v3231, %v3308
    %v3310 = vsub.f32 %v3236, %v3308
    %v3311 = vsub.f32 %v3241, %v3308
    %v3312 = vsub.f32 %v3246, %v3308
    %v3313 = vsub.f32 %v3251, %v3308
    %v3314 = vsub.f32 %v3256, %v3308
    %v3315 = vsub.f32 %v3261, %v3308
    %v3316 = vsub.f32 %v3266, %v3308
    %v3317 = vsub.f32 %v3271, %v3308
    %v3318 = vsub.f32 %v3276, %v3308
    %v3319 = vmul.f32 %v3309, %v3309
    %v3320 = vmul.f32 %v3310, %v3310
    %v3321 = vmul.f32 %v3311, %v3311
    %v3322 = vmul.f32 %v3312, %v3312
    %v3323 = vmul.f32 %v3313, %v3313
    %v3324 = vmul.f32 %v3314, %v3314
    %v3325 = vmul.f32 %v3315, %v3315
    %v3326 = vmul.f32 %v3316, %v3316
    %v3327 = vmul.f32 %v3317, %v3317
    %v3328 = vmul.f32 %v3318, %v3318
    %v3329 = vsel %vm197, %v3319, 0.0
    %v3330 = vsel %vm197, %v3320, 0.0
    %v3331 = vadd.f32 %v3329, %v3330
    %v3332 = vsel %vm197, %v3321, 0.0
    %v3333 = vadd.f32 %v3331, %v3332
    %v3334 = vsel %vm197, %v3322, 0.0
    %v3335 = vadd.f32 %v3333, %v3334
    %v3336 = vsel %vm197, %v3323, 0.0
    %v3337 = vadd.f32 %v3335, %v3336
    %v3338 = vsel %vm197, %v3324, 0.0
    %v3339 = vadd.f32 %v3337, %v3338
    %v3340 = vsel %vm197, %v3325, 0.0
    %v3341 = vadd.f32 %v3339, %v3340
    %v3342 = vsel %vm197, %v3326, 0.0
    %v3343 = vadd.f32 %v3341, %v3342
    %v3344 = vsel %vm197, %v3327, 0.0
    %v3345 = vadd.f32 %v3343, %v3344
    %v3346 = vsel %vm3298, %v3328, 0.0
    %v3347 = vadd.f32 %v3345, %v3346
    %v3348 = vrot.slane %v3347, 4
    %v3349 = vadd.f32 %v3347, %v3348
    %v3350 = vrot.slane %v3349, 2
    %v3351 = vadd.f32 %v3349, %v3350
    %v3352 = vrot.slane %v3351, 1
    %v3353 = vadd.f32 %v3351, %v3352
    %v3354 = vmul.f32 %v3353, %v3307
    %v3355 = vadd.f32 %v3354, 1e-05
    %v3356 = vrsqrt.pop %v3355
    %v3357 = vmul.f32 %v3279, %v3356
    %v3358 = vmul.f32 %v3309, %v3357
    %v3359 = vmul.f32 %v3310, %v3357
    %v3360 = vmul.f32 %v3311, %v3357
    %v3361 = vmul.f32 %v3312, %v3357
    %v3362 = vmul.f32 %v3313, %v3357
    %v3363 = vmul.f32 %v3314, %v3357
    %v3364 = vmul.f32 %v3315, %v3357
    %v3365 = vmul.f32 %v3316, %v3357
    %v3366 = vmul.f32 %v3317, %v3357
    %v3367 = vmul.f32 %v3318, %v3357
    %v3368 = vadd.f32 %v3358, %v3280
    %v3369 = vadd.f32 %v3359, %v3280
    %v3370 = vadd.f32 %v3360, %v3280
    %v3371 = vadd.f32 %v3361, %v3280
    %v3372 = vadd.f32 %v3362, %v3280
    %v3373 = vadd.f32 %v3363, %v3280
    %v3374 = vadd.f32 %v3364, %v3280
    %v3375 = vadd.f32 %v3365, %v3280
    %v3376 = vadd.f32 %v3366, %v3280
    %v3377 = vadd.f32 %v3367, %v3280
    %v3378 = vmul.f32 %v3368, 0.2
    %v3379 = vmul.f32 %v3369, 0.2
    %v3380 = vmul.f32 %v3370, 0.2
    %v3381 = vmul.f32 %v3371, 0.2
    %v3382 = vmul.f32 %v3372, 0.2
    %v3383 = vmul.f32 %v3373, 0.2
    %v3384 = vmul.f32 %v3374, 0.2
    %v3385 = vmul.f32 %v3375, 0.2
    %v3386 = vmul.f32 %v3376, 0.2
    %v3387 = vmul.f32 %v3377, 0.2
    %v3388 = vmax.f32 %v3368, %v3378
    %v3389 = vmax.f32 %v3369, %v3379
    %v3390 = vmax.f32 %v3370, %v3380
    %v3391 = vmax.f32 %v3371, %v3381
    %v3392 = vmax.f32 %v3372, %v3382
    %v3393 = vmax.f32 %v3373, %v3383
    %v3394 = vmax.f32 %v3374, %v3384
    %v3395 = vmax.f32 %v3375, %v3385
    %v3396 = vmax.f32 %v3376, %v3386
    %v3397 = vmax.f32 %v3377, %v3387
    %v3398 = vld [vmem:[#allocation2 + $0xcc0] sm:$0xff]
    %v3399 = vld [vmem:[#allocation2 + $0xcd0] sm:$0xff]
    %v3400 = vld [vmem:[#allocation2 + $0xce0] sm:$0xff]
    %v3401 = vld [vmem:[#allocation2 + $0xcf0] sm:$0xff]
    %v3402 = vld [vmem:[#allocation2 + $0xd00] sm:$0xff]
    %v3403 = vld [vmem:[#allocation2 + $0xd10] sm:$0xff]
    %v3404 = vld [vmem:[#allocation2 + $0xd20] sm:$0xff]
    %v3405 = vld [vmem:[#allocation2 + $0xd30] sm:$0xff]
    %v3406 = vld [vmem:[#allocation2 + $0xd40] sm:$0xff]
    %v3407 = vld [vmem:[#allocation2 + $0xd50] sm:$0xff]
    %v3408 = vld [vmem:[#allocation2 + $0xd60] sm:$0xff]
    %v3409 = vld [vmem:[#allocation2 + $0xd70] sm:$0xff]
    %v3410 = vld [vmem:[#allocation5 + $0x35] ss:$0 sm:$0xff]
    %v3417 = vrot.slane %v3392, 2
    %v3418 = vrot.slane %v3393, 2
    %v3419 = vsel %vm84, %v3417, %v3418
    %v3420 = vrot.slane %v3394, 2
    %v3421 = vsel %vm84, %v3418, %v3420
    %v3422 = vrot.slane %v3395, 2
    %v3423 = vsel %vm84, %v3420, %v3422
    %v3424 = vrot.slane %v3396, 2
    %v3425 = vsel %vm84, %v3422, %v3424
    %v3426 = vrot.slane %v3397, 2
    %v3427 = vsel %vm84, %v3424, %v3426
    %v3433 = vsel %vm130, %v3392, %v3419
    %v3438 = vrot.slane %v3388, 1
    %v3439 = vrot.slane %v3389, 1
    %v3440 = vsel %vm102, %v3438, %v3439
    %v3441 = vrot.slane %v3390, 1
    %v3442 = vsel %vm102, %v3439, %v3441
    %v3443 = vrot.slane %v3391, 1
    %v3444 = vsel %vm102, %v3441, %v3443
    %v3445 = vrot.slane %v3392, 1
    %v3446 = vsel %vm102, %v3443, %v3445
    %v3448 = vrot.slane %v3392, 3
    %v3449 = vrot.slane %v3393, 3
    %v3450 = vsel %vm112, %v3448, %v3449
    %v3451 = vrot.slane %v3394, 3
    %v3452 = vsel %vm112, %v3449, %v3451
    %v3453 = vrot.slane %v3395, 3
    %v3454 = vsel %vm112, %v3451, %v3453
    %v3455 = vrot.slane %v3396, 3
    %v3456 = vsel %vm112, %v3453, %v3455
    %v3457 = vrot.slane %v3397, 3
    %v3458 = vsel %vm112, %v3455, %v3457
    %v3460 = vsel %vm130, %v3445, %v3450
    %v3461 = vrot.slane %v3388, 2
    %v3462 = vrot.slane %v3389, 2
    %v3463 = vsel %vm84, %v3461, %v3462
    %v3464 = vrot.slane %v3390, 2
    %v3465 = vsel %vm84, %v3462, %v3464
    %v3466 = vrot.slane %v3391, 2
    %v3467 = vsel %vm84, %v3464, %v3466
    %v3468 = vsel %vm84, %v3466, %v3417
    %v3470 = vrot.slane %v3393, 4
    %v3471 = vrot.slane %v3394, 4
    %v3472 = vsel %vm130, %v3470, %v3471
    %v3473 = vrot.slane %v3395, 4
    %v3474 = vsel %vm130, %v3471, %v3473
    %v3475 = vrot.slane %v3396, 4
    %v3476 = vsel %vm130, %v3473, %v3475
    %v3477 = vrot.slane %v3397, 4
    %v3478 = vsel %vm130, %v3475, %v3477
    %v3480 = vsel %vm130, %v3417, %v3470
    %3482 = vrot.lane.b32.xlu0 %v3440, 32
    %v3483 = vpop.permute.xlu0 %3482
    %3484 = vrot.lane.b32.xlu0 %v3442, 32
    %v3485 = vpop.permute.xlu0 %3484
    %3486 = vrot.lane.b32.xlu0 %v3444, 32
    %v3487 = vpop.permute.xlu0 %3486
    %3488 = vrot.lane.b32.xlu0 %v3446, 32
    %v3489 = vpop.permute.xlu0 %3488
    %3490 = vrot.lane.b32.xlu0 %v3460, 32
    %v3491 = vpop.permute.xlu0 %3490
    %3492 = vrot.lane.b32.xlu0 %v3452, 32
    %v3493 = vpop.permute.xlu0 %3492
    %3494 = vrot.lane.b32.xlu0 %v3454, 32
    %v3495 = vpop.permute.xlu0 %3494
    %3496 = vrot.lane.b32.xlu0 %v3456, 32
    %v3497 = vpop.permute.xlu0 %3496
    %3498 = vrot.lane.b32.xlu0 %v3458, 32
    %v3499 = vpop.permute.xlu0 %3498
    %3510 = vrot.lane.b32.xlu0 %v3463, 64
    %v3511 = vpop.permute.xlu0 %3510
    %3512 = vrot.lane.b32.xlu0 %v3465, 64
    %v3513 = vpop.permute.xlu0 %3512
    %3514 = vrot.lane.b32.xlu0 %v3467, 64
    %v3515 = vpop.permute.xlu0 %3514
    %3516 = vrot.lane.b32.xlu0 %v3468, 64
    %v3517 = vpop.permute.xlu0 %3516
    %3518 = vrot.lane.b32.xlu0 %v3480, 64
    %v3519 = vpop.permute.xlu0 %3518
    %3520 = vrot.lane.b32.xlu0 %v3472, 64
    %v3521 = vpop.permute.xlu0 %3520
    %3522 = vrot.lane.b32.xlu0 %v3474, 64
    %v3523 = vpop.permute.xlu0 %3522
    %3524 = vrot.lane.b32.xlu0 %v3476, 64
    %v3525 = vpop.permute.xlu0 %3524
    %3526 = vrot.lane.b32.xlu0 %v3478, 64
    %v3527 = vpop.permute.xlu0 %3526
    %v3537 = vsel %vm197, %v3388, %v3483
    %v3538 = vsel %vm197, %v3389, %v3485
    %v3539 = vsel %vm197, %v3390, %v3487
    %v3540 = vsel %vm197, %v3391, %v3489
    %v3541 = vsel %vm197, %v3433, %v3491
    %v3542 = vsel %vm197, %v3421, %v3493
    %v3543 = vsel %vm197, %v3423, %v3495
    %v3544 = vsel %vm197, %v3425, %v3497
    %v3545 = vsel %vm197, %v3427, %v3499
    %v3546 = vsel %vm560, %v3537, %v3511
    %v3547 = vsel %vm560, %v3538, %v3513
    %v3548 = vsel %vm560, %v3539, %v3515
    %v3549 = vsel %vm560, %v3540, %v3517
    %v3550 = vsel %vm560, %v3541, %v3519
    %v3551 = vsel %vm560, %v3542, %v3521
    %v3552 = vsel %vm560, %v3543, %v3523
    %v3553 = vsel %vm560, %v3544, %v3525
    %v3554 = vsel %vm560, %v3545, %v3527
    %v3556 = vsel %vm569, %v3546, 0
    %v3559 = vsel %vm569, %v3547, 0
    %v3562 = vsel %vm569, %v3548, 0
    %v3565 = vsel %vm569, %v3549, 0
    %v3568 = vsel %vm569, %v3550, 0
    %v3571 = vsel %vm569, %v3551, 0
    %v3574 = vsel %vm569, %v3552, 0
    %v3577 = vsel %vm569, %v3553, 0
    %v3580 = vsel %vm569, %v3554, 0
    %3582 = vmatprep.subr.mxu0 0.0
    %3583 = vmatpush1.msra.mxu0 %v3398
    %3584 = vmatprep.subr.mxu0 0.0
    %3585 = vmatpush1.msra.mxu0 %v3399
    %3586 = vmatprep.subr.mxu0 0.0
    %3587 = vmatpush1.msra.mxu0 %v3400
    %3588 = vmatprep.subr.mxu0 0.0
    %3589 = vmatpush1.msra.mxu0 %v3401
    %3590 = vmatprep.subr.mxu0 0.0
    %3591 = vmatpush1.msra.mxu0 %v3402
    %3592 = vmatprep.subr.mxu0 0.0
    %3593 = vmatpush1.msra.mxu0 %v3403
    %3594 = vmatprep.subr.mxu0 0.0
    %3595 = vmatpush1.msra.mxu0 %v3404
    %3596 = vmatprep.subr.mxu0 0.0
    %3597 = vmatpush1.msra.mxu0 %v3405
    %3598 = vmatprep.subr.mxu0 0.0
    %3599 = vmatpush1.msra.mxu0 %v3406
    %3600 = vmatprep.subr.mxu0 0.0
    %3601 = vmatpush1.msra.mxu0 %v3407
    %3602 = vmatprep.subr.mxu0 0.0
    %3603 = vmatpush1.msra.mxu0 %v3408
    %3604 = vmatprep.subr.mxu0 0.0
    %3605 = vmatpush1.msra.mxu0 %v3409
    %3606 = vmatprep.subr.mxu0 0.0
    %3607 = vmatpush1.msra.mxu0 0.0
    %3608 = vmatprep.subr.mxu0 0.0
    %3609 = vmatpush1.msra.mxu0 0.0
    %3610 = vmatprep.subr.mxu0 0.0
    %3611 = vmatpush1.msra.mxu0 0.0
    %3612 = vmatprep.subr.mxu0 0.0
    %3613 = vmatpush1.msra.mxu0 0.0
    %3614 = vmatprep.subr.mxu0 0.0
    %3615 = vmatpush1.msra.mxu0 0.0
    %3616 = vmatprep.subr.mxu0 0.0
    %3617 = vmatpush1.msra.mxu0 0.0
    %3618 = vmatprep.subr.mxu0 0.0
    %3619 = vmatpush1.msra.mxu0 0.0
    %3620 = vmatprep.subr.mxu0 0.0
    %3621 = vmatpush1.msra.mxu0 0.0
    %3622 = vmatprep.subr.mxu0 0.0
    %3623 = vmatpush1.msra.mxu0 0.0
    %3624 = vmatprep.subr.mxu0 0.0
    %3625 = vmatpush1.msra.mxu0 0.0
    %3626 = vmatprep.subr.mxu0 0.0
    %3627 = vmatpush1.msra.mxu0 0.0
    %3628 = vmatprep.subr.mxu0 0.0
    %3629 = vmatpush1.msra.mxu0 0.0
    %3630 = vmatprep.subr.mxu0 0.0
    %3631 = vmatpush1.msra.mxu0 0.0
    %3632 = vmatprep.subr.mxu0 0.0
    %3633 = vmatpush1.msra.mxu0 0.0
    %3634 = vmatprep.subr.mxu0 0.0
    %3635 = vmatpush1.msra.mxu0 0.0
    %3636 = vmatprep.subr.mxu0 0.0
    %3637 = vmatpush1.msra.mxu0 0.0
    %3638 = vmatprep.subr.mxu0 0.0
    %3639 = vmatpush1.msra.mxu0 0.0
    %3640 = vmatprep.subr.mxu0 0.0
    %3641 = vmatpush1.msra.mxu0 0.0
    %3642 = vmatprep.subr.mxu0 0.0
    %3643 = vmatpush1.msra.mxu0 0.0
    %3644 = vmatprep.subr.mxu0 0.0
    %3645 = vmatpush1.msra.mxu0 0.0
    %3646 = vmatprep.mubr.f32.mxu0 0.0
    %3647 = vmatmul.mubr.f32.gmra.mrb[0].mxu0 %v3556
    %v3648 = vpop.f32.mrb[0].mxu0
    %v3649 = vadd.f32 %v3410, %v3648
    %v3650 = vpop.f32.mrb[0].mxu0
    %3651 = vmatprep.mubr.f32.mxu0 0.0
    %3652 = vmatmul.mubr.f32.gmra.mrb[0].mxu0 %v3559
    %v3653 = vpop.f32.mrb[0].mxu0
    %v3654 = vadd.f32 %v3410, %v3653
    %v3655 = vpop.f32.mrb[0].mxu0
    %3656 = vmatprep.mubr.f32.mxu0 0.0
    %3657 = vmatmul.mubr.f32.gmra.mrb[0].mxu0 %v3562
    %v3658 = vpop.f32.mrb[0].mxu0
    %v3659 = vadd.f32 %v3410, %v3658
    %v3660 = vpop.f32.mrb[0].mxu0
    %3661 = vmatprep.mubr.f32.mxu0 0.0
    %3662 = vmatmul.mubr.f32.gmra.mrb[0].mxu0 %v3565
    %v3663 = vpop.f32.mrb[0].mxu0
    %v3664 = vadd.f32 %v3410, %v3663
    %v3665 = vpop.f32.mrb[0].mxu0
    %3666 = vmatprep.mubr.f32.mxu0 0.0
    %3667 = vmatmul.mubr.f32.gmra.mrb[0].mxu0 %v3568
    %v3668 = vpop.f32.mrb[0].mxu0
    %v3669 = vadd.f32 %v3410, %v3668
    %v3670 = vpop.f32.mrb[0].mxu0
    %3671 = vmatprep.mubr.f32.mxu0 0.0
    %3672 = vmatmul.mubr.f32.gmra.mrb[0].mxu0 %v3571
    %v3673 = vpop.f32.mrb[0].mxu0
    %v3674 = vadd.f32 %v3410, %v3673
    %v3675 = vpop.f32.mrb[0].mxu0
    %3676 = vmatprep.mubr.f32.mxu0 0.0
    %3677 = vmatmul.mubr.f32.gmra.mrb[0].mxu0 %v3574
    %v3678 = vpop.f32.mrb[0].mxu0
    %v3679 = vadd.f32 %v3410, %v3678
    %v3680 = vpop.f32.mrb[0].mxu0
    %3681 = vmatprep.mubr.f32.mxu0 0.0
    %3682 = vmatmul.mubr.f32.gmra.mrb[0].mxu0 %v3577
    %v3683 = vpop.f32.mrb[0].mxu0
    %v3684 = vadd.f32 %v3410, %v3683
    %v3685 = vpop.f32.mrb[0].mxu0
    %3686 = vmatprep.mubr.f32.mxu0 0.0
    %3687 = vmatmul.mubr.f32.gmra.mrb[0].mxu0 %v3580
    %v3688 = vpop.f32.mrb[0].mxu0
    %v3689 = vadd.f32 %v3410, %v3688
    %v3690 = vpop.f32.mrb[0].mxu0
    %3691 = vdwg.mxu0
    %v3692 = vld [vmem:[#allocation2 + $0xd80] sm:$0xff]
    %v3693 = vld [vmem:[#allocation2 + $0xd90] sm:$0xff]
    %v3694 = vld [vmem:[#allocation2 + $0xda0] sm:$0xff]
    %v3695 = vld [vmem:[#allocation2 + $0xdb0] sm:$0xff]
    %v3696 = vld [vmem:[#allocation2 + $0xdc0] sm:$0xff]
    %v3697 = vld [vmem:[#allocation2 + $0xdd0] sm:$0xff]
    %v3698 = vld [vmem:[#allocation2 + $0xde0] sm:$0xff]
    %v3699 = vld [vmem:[#allocation2 + $0xdf0] sm:$0xff]
    %v3700 = vld [vmem:[#allocation2 + $0xe00] sm:$0xff]
    %v3701 = vld [vmem:[#allocation2 + $0xe10] sm:$0xff]
    %v3702 = vld [vmem:[#allocation2 + $0xe20] sm:$0xff]
    %v3703 = vld [vmem:[#allocation2 + $0xe30] sm:$0xff]
    %v3704 = vld [vmem:[#allocation5 + $0x36] ss:$0 sm:$0xff]
    %v3710 = vrot.slane %v3669, 2
    %v3711 = vrot.slane %v3674, 2
    %v3712 = vsel %vm84, %v3710, %v3711
    %v3713 = vrot.slane %v3679, 2
    %v3714 = vsel %vm84, %v3711, %v3713
    %v3715 = vrot.slane %v3684, 2
    %v3716 = vsel %vm84, %v3713, %v3715
    %v3717 = vrot.slane %v3689, 2
    %v3718 = vsel %vm84, %v3715, %v3717
    %v3724 = vsel %vm64, %v3669, %v3712
    %v3729 = vrot.slane %v3649, 1
    %v3730 = vrot.slane %v3654, 1
    %v3731 = vsel %vm102, %v3729, %v3730
    %v3732 = vrot.slane %v3659, 1
    %v3733 = vsel %vm102, %v3730, %v3732
    %v3734 = vrot.slane %v3664, 1
    %v3735 = vsel %vm102, %v3732, %v3734
    %v3736 = vrot.slane %v3669, 1
    %v3737 = vsel %vm102, %v3734, %v3736
    %v3739 = vrot.slane %v3669, 3
    %v3740 = vrot.slane %v3674, 3
    %v3741 = vsel %vm112, %v3739, %v3740
    %v3742 = vrot.slane %v3679, 3
    %v3743 = vsel %vm112, %v3740, %v3742
    %v3744 = vrot.slane %v3684, 3
    %v3745 = vsel %vm112, %v3742, %v3744
    %v3746 = vrot.slane %v3689, 3
    %v3747 = vsel %vm112, %v3744, %v3746
    %v3749 = vsel %vm64, %v3736, %v3741
    %v3750 = vrot.slane %v3649, 2
    %v3751 = vrot.slane %v3654, 2
    %v3752 = vsel %vm84, %v3750, %v3751
    %v3753 = vrot.slane %v3659, 2
    %v3754 = vsel %vm84, %v3751, %v3753
    %v3755 = vrot.slane %v3664, 2
    %v3756 = vsel %vm84, %v3753, %v3755
    %v3757 = vsel %vm84, %v3755, %v3710
    %v3759 = vrot.slane %v3669, 4
    %v3760 = vrot.slane %v3674, 4
    %v3761 = vsel %vm130, %v3759, %v3760
    %v3762 = vrot.slane %v3679, 4
    %v3763 = vsel %vm130, %v3760, %v3762
    %v3764 = vrot.slane %v3684, 4
    %v3765 = vsel %vm130, %v3762, %v3764
    %v3766 = vrot.slane %v3689, 4
    %v3767 = vsel %vm130, %v3764, %v3766
    %v3769 = vsel %vm64, %v3710, %v3761
    %3771 = vrot.lane.b32.xlu0 %v3731, 32
    %v3772 = vpop.permute.xlu0 %3771
    %3773 = vrot.lane.b32.xlu0 %v3733, 32
    %v3774 = vpop.permute.xlu0 %3773
    %3775 = vrot.lane.b32.xlu0 %v3735, 32
    %v3776 = vpop.permute.xlu0 %3775
    %3777 = vrot.lane.b32.xlu0 %v3737, 32
    %v3778 = vpop.permute.xlu0 %3777
    %3779 = vrot.lane.b32.xlu0 %v3749, 32
    %v3780 = vpop.permute.xlu0 %3779
    %3781 = vrot.lane.b32.xlu0 %v3743, 32
    %v3782 = vpop.permute.xlu0 %3781
    %3783 = vrot.lane.b32.xlu0 %v3745, 32
    %v3784 = vpop.permute.xlu0 %3783
    %3785 = vrot.lane.b32.xlu0 %v3747, 32
    %v3786 = vpop.permute.xlu0 %3785
    %3787 = vrot.lane.b32.xlu0 %v3746, 32
    %v3788 = vpop.permute.xlu0 %3787
    %3799 = vrot.lane.b32.xlu0 %v3752, 64
    %v3800 = vpop.permute.xlu0 %3799
    %3801 = vrot.lane.b32.xlu0 %v3754, 64
    %v3802 = vpop.permute.xlu0 %3801
    %3803 = vrot.lane.b32.xlu0 %v3756, 64
    %v3804 = vpop.permute.xlu0 %3803
    %3805 = vrot.lane.b32.xlu0 %v3757, 64
    %v3806 = vpop.permute.xlu0 %3805
    %3807 = vrot.lane.b32.xlu0 %v3769, 64
    %v3808 = vpop.permute.xlu0 %3807
    %3809 = vrot.lane.b32.xlu0 %v3763, 64
    %v3810 = vpop.permute.xlu0 %3809
    %3811 = vrot.lane.b32.xlu0 %v3765, 64
    %v3812 = vpop.permute.xlu0 %3811
    %3813 = vrot.lane.b32.xlu0 %v3767, 64
    %v3814 = vpop.permute.xlu0 %3813
    %3815 = vrot.lane.b32.xlu0 %v3766, 64
    %v3816 = vpop.permute.xlu0 %3815
    %v3826 = vsel %vm197, %v3649, %v3772
    %v3827 = vsel %vm197, %v3654, %v3774
    %v3828 = vsel %vm197, %v3659, %v3776
    %v3829 = vsel %vm197, %v3664, %v3778
    %v3830 = vsel %vm197, %v3724, %v3780
    %v3831 = vsel %vm197, %v3714, %v3782
    %v3832 = vsel %vm197, %v3716, %v3784
    %v3833 = vsel %vm197, %v3718, %v3786
    %v3834 = vsel %vm197, %v3717, %v3788
    %v3835 = vsel %vm560, %v3826, %v3800
    %v3836 = vsel %vm560, %v3827, %v3802
    %v3837 = vsel %vm560, %v3828, %v3804
    %v3838 = vsel %vm560, %v3829, %v3806
    %v3839 = vsel %vm560, %v3830, %v3808
    %v3840 = vsel %vm560, %v3831, %v3810
    %v3841 = vsel %vm560, %v3832, %v3812
    %v3842 = vsel %vm560, %v3833, %v3814
    %v3843 = vsel %vm560, %v3834, %v3816
    %v3845 = vsel %vm569, %v3835, 0
    %v3848 = vsel %vm569, %v3836, 0
    %v3851 = vsel %vm569, %v3837, 0
    %v3854 = vsel %vm569, %v3838, 0
    %v3857 = vsel %vm569, %v3839, 0
    %v3860 = vsel %vm569, %v3840, 0
    %v3863 = vsel %vm569, %v3841, 0
    %v3866 = vsel %vm569, %v3842, 0
    %v3869 = vsel %vm569, %v3843, 0
    %3871 = vmatprep.subr.mxu0 0.0
    %3872 = vmatpush1.msra.mxu0 %v3692
    %3873 = vmatprep.subr.mxu0 0.0
    %3874 = vmatpush1.msra.mxu0 %v3693
    %3875 = vmatprep.subr.mxu0 0.0
    %3876 = vmatpush1.msra.mxu0 %v3694
    %3877 = vmatprep.subr.mxu0 0.0
    %3878 = vmatpush1.msra.mxu0 %v3695
    %3879 = vmatprep.subr.mxu0 0.0
    %3880 = vmatpush1.msra.mxu0 %v3696
    %3881 = vmatprep.subr.mxu0 0.0
    %3882 = vmatpush1.msra.mxu0 %v3697
    %3883 = vmatprep.subr.mxu0 0.0
    %3884 = vmatpush1.msra.mxu0 %v3698
    %3885 = vmatprep.subr.mxu0 0.0
    %3886 = vmatpush1.msra.mxu0 %v3699
    %3887 = vmatprep.subr.mxu0 0.0
    %3888 = vmatpush1.msra.mxu0 %v3700
    %3889 = vmatprep.subr.mxu0 0.0
    %3890 = vmatpush1.msra.mxu0 %v3701
    %3891 = vmatprep.subr.mxu0 0.0
    %3892 = vmatpush1.msra.mxu0 %v3702
    %3893 = vmatprep.subr.mxu0 0.0
    %3894 = vmatpush1.msra.mxu0 %v3703
    %3895 = vmatprep.subr.mxu0 0.0
    %3896 = vmatpush1.msra.mxu0 0.0
    %3897 = vmatprep.subr.mxu0 0.0
    %3898 = vmatpush1.msra.mxu0 0.0
    %3899 = vmatprep.subr.mxu0 0.0
    %3900 = vmatpush1.msra.mxu0 0.0
    %3901 = vmatprep.subr.mxu0 0.0
    %3902 = vmatpush1.msra.mxu0 0.0
    %3903 = vmatprep.subr.mxu0 0.0
    %3904 = vmatpush1.msra.mxu0 0.0
    %3905 = vmatprep.subr.mxu0 0.0
    %3906 = vmatpush1.msra.mxu0 0.0
    %3907 = vmatprep.subr.mxu0 0.0
    %3908 = vmatpush1.msra.mxu0 0.0
    %3909 = vmatprep.subr.mxu0 0.0
    %3910 = vmatpush1.msra.mxu0 0.0
    %3911 = vmatprep.subr.mxu0 0.0
    %3912 = vmatpush1.msra.mxu0 0.0
    %3913 = vmatprep.subr.mxu0 0.0
    %3914 = vmatpush1.msra.mxu0 0.0
    %3915 = vmatprep.subr.mxu0 0.0
    %3916 = vmatpush1.msra.mxu0 0.0
    %3917 = vmatprep.subr.mxu0 0.0
    %3918 = vmatpush1.msra.mxu0 0.0
    %3919 = vmatprep.subr.mxu0 0.0
    %3920 = vmatpush1.msra.mxu0 0.0
    %3921 = vmatprep.subr.mxu0 0.0
    %3922 = vmatpush1.msra.mxu0 0.0
    %3923 = vmatprep.subr.mxu0 0.0
    %3924 = vmatpush1.msra.mxu0 0.0
    %3925 = vmatprep.subr.mxu0 0.0
    %3926 = vmatpush1.msra.mxu0 0.0
    %3927 = vmatprep.subr.mxu0 0.0
    %3928 = vmatpush1.msra.mxu0 0.0
    %3929 = vmatprep.subr.mxu0 0.0
    %3930 = vmatpush1.msra.mxu0 0.0
    %3931 = vmatprep.subr.mxu0 0.0
    %3932 = vmatpush1.msra.mxu0 0.0
    %3933 = vmatprep.subr.mxu0 0.0
    %3934 = vmatpush1.msra.mxu0 0.0
    %3935 = vmatprep.mubr.f32.mxu0 0.0
    %3936 = vmatmul.mubr.f32.gmra.mrb[0].mxu0 %v3845
    %v3937 = vpop.f32.mrb[0].mxu0
    %v3938 = vadd.f32 %v3704, %v3937
    %v3939 = vpop.f32.mrb[0].mxu0
    %3940 = vmatprep.mubr.f32.mxu0 0.0
    %3941 = vmatmul.mubr.f32.gmra.mrb[0].mxu0 %v3848
    %v3942 = vpop.f32.mrb[0].mxu0
    %v3943 = vadd.f32 %v3704, %v3942
    %v3944 = vpop.f32.mrb[0].mxu0
    %3945 = vmatprep.mubr.f32.mxu0 0.0
    %3946 = vmatmul.mubr.f32.gmra.mrb[0].mxu0 %v3851
    %v3947 = vpop.f32.mrb[0].mxu0
    %v3948 = vadd.f32 %v3704, %v3947
    %v3949 = vpop.f32.mrb[0].mxu0
    %3950 = vmatprep.mubr.f32.mxu0 0.0
    %3951 = vmatmul.mubr.f32.gmra.mrb[0].mxu0 %v3854
    %v3952 = vpop.f32.mrb[0].mxu0
    %v3953 = vadd.f32 %v3704, %v3952
    %v3954 = vpop.f32.mrb[0].mxu0
    %3955 = vmatprep.mubr.f32.mxu0 0.0
    %3956 = vmatmul.mubr.f32.gmra.mrb[0].mxu0 %v3857
    %v3957 = vpop.f32.mrb[0].mxu0
    %v3958 = vadd.f32 %v3704, %v3957
    %v3959 = vpop.f32.mrb[0].mxu0
    %3960 = vmatprep.mubr.f32.mxu0 0.0
    %3961 = vmatmul.mubr.f32.gmra.mrb[0].mxu0 %v3860
    %v3962 = vpop.f32.mrb[0].mxu0
    %v3963 = vadd.f32 %v3704, %v3962
    %v3964 = vpop.f32.mrb[0].mxu0
    %3965 = vmatprep.mubr.f32.mxu0 0.0
    %3966 = vmatmul.mubr.f32.gmra.mrb[0].mxu0 %v3863
    %v3967 = vpop.f32.mrb[0].mxu0
    %v3968 = vadd.f32 %v3704, %v3967
    %v3969 = vpop.f32.mrb[0].mxu0
    %3970 = vmatprep.mubr.f32.mxu0 0.0
    %3971 = vmatmul.mubr.f32.gmra.mrb[0].mxu0 %v3866
    %v3972 = vpop.f32.mrb[0].mxu0
    %v3973 = vadd.f32 %v3704, %v3972
    %v3974 = vpop.f32.mrb[0].mxu0
    %3975 = vmatprep.mubr.f32.mxu0 0.0
    %3976 = vmatmul.mubr.f32.gmra.mrb[0].mxu0 %v3869
    %v3977 = vpop.f32.mrb[0].mxu0
    %v3978 = vadd.f32 %v3704, %v3977
    %v3979 = vpop.f32.mrb[0].mxu0
    %3980 = vdwg.mxu0
    %3981 = vst.msk [vmem:[%s3] sm:$0xff] %vm188, %v3938
    %3982 = vst.msk [vmem:[%s3 + $0x8] sm:$0xff] %vm188, %v3943
    %3983 = vst.msk [vmem:[%s3 + $0x10] sm:$0xff] %vm188, %v3948
    %3984 = vst.msk [vmem:[%s3 + $0x18] sm:$0xff] %vm188, %v3953
    %vm3985 = vcmask 123904
    %3986 = vst.msk [vmem:[%s3 + $0x20] sm:$0x3] %vm3985, %v3958
    %s3987 = scalar_lea.vmem %s3, 40
    %vm3988 = vcmask 130050
    %3989 = vst.msk [vmem:[%s3987 - $0x2] sm:$0xfc] %vm3988, %v3958
    %3990 = vst.msk [vmem:[%s3987 + $0x6] sm:$0xff] %vm188, %v3963
    %3991 = vst.msk [vmem:[%s3987 + $0xe] sm:$0xff] %vm188, %v3968
    %3992 = vst.msk [vmem:[%s3987 + $0x16] sm:$0xff] %vm188, %v3973
    %vm3993 = vcmask 125952
    %3994 = vst.msk [vmem:[%s3987 + $0x1e] sm:$0xf] %vm3993, %v3978
    // Predicated region
    $region22: #{forward.1} parent=1 // pred_check
      _
    $region23: #{forward.1} parent=1 // pred_check_branch
      %3996 = sbr.rel (0) target = $region25
    $region24: #{forward.1} parent=1 // pred_region
      _
    $region25: #{forward.1} parent=1 // pred_fallthru
      _
    // Predicated region
    $region26: #{forward.1} parent=1 // pred_check
      _
    $region27: #{forward.1} parent=1 // pred_check_branch
      %3998 = sbr.rel (0) target = $region29
    $region28: #{forward.1} parent=1 // pred_region
      %s4000 = ssub.s32 32, 32
      %4001 = vsyncadd [#allocation4], %s4000
      %s4003 = sshll.u32 [#allocation7], 4
      %s4004 = int_to_ptr.vmem [resolvable:$true] %s4003
      %4006 = dma.vmem_to_hbm [thread:$0]  %s4004, 32, %s4, [#allocation4]
    $region29: #{forward.1} parent=1 // pred_fallthru
      _
    // Predicated region
    $region30: #{forward.1} parent=1 // pred_check
      _
    $region31: #{forward.1} parent=1 // pred_check_branch
      %4008 = sbr.rel (0) target = $region33
    $region32: #{forward.1} parent=1 // pred_region
      %s4010 = ssub.s32 32, 32
      %4011 = vsyncadd [#allocation9], %s4010
      %s4013 = sshll.u32 [#allocation8], 4
      %s4014 = int_to_ptr.vmem [resolvable:$true] %s4013
      %4016 = dma.vmem_to_hbm [thread:$0]  %s4014, 32, %s5, [#allocation9]
    $region33: #{forward.1} parent=1 // pred_fallthru
      _
    // Predicated region
    $region34: #{forward.1} parent=1 // pred_check
      _
    $region35: #{forward.1} parent=1 // pred_check_branch
      %4018 = sbr.rel (0) target = $region37
    $region36: #{forward.1} parent=1 // pred_region
      %s4020 = ssub.s32 32, 32
      %4021 = vsyncadd [#allocation9], %s4020
      %s4023 = sshll.u32 [#allocation10], 4
      %s4024 = int_to_ptr.vmem [resolvable:$true] %s4023
      %4026 = dma.vmem_to_hbm [thread:$0]  %s4024, 32, %s6, [#allocation9]
    $region37: #{forward.1} parent=1 // pred_fallthru
      _
    // Predicated region
    $region38: #{forward.1} parent=1 // pred_check
      _
    $region39: #{forward.1} parent=1 // pred_check_branch
      %4028 = sbr.rel (0) target = $region41
    $region40: #{forward.1} parent=1 // pred_region
      _
    $region41: #{forward.1} parent=1 // pred_fallthru
      _
    // Predicated region
    $region42: #{forward.1} parent=1 // pred_check
      _
    $region43: #{forward.1} parent=1 // pred_check_branch
      %4030 = sbr.rel (0) target = $region45
    $region44: #{forward.1} parent=1 // pred_region
      %4031 = dma.done [#allocation4], 32
    $region45: #{forward.1} parent=1 // pred_fallthru
      _
    // Predicated region
    $region46: #{forward.1} parent=1 // pred_check
      _
    $region47: #{forward.1} parent=1 // pred_check_branch
      %4033 = sbr.rel (0) target = $region49
    $region48: #{forward.1} parent=1 // pred_region
      %4034 = dma.done [#allocation9], 32
    $region49: #{forward.1} parent=1 // pred_fallthru
      _
    // Predicated region
    $region50: #{forward.1} parent=1 // pred_check
      _
    $region51: #{forward.1} parent=1 // pred_check_branch
      %4036 = sbr.rel (0) target = $region53
    $region52: #{forward.1} parent=1 // pred_region
      %4037 = dma.done [#allocation9], 32
    $region53: #{forward.1} parent=1 // pred_fallthru
      _
    %4038 = vsyncpa [#allocation3], 1
    %4039 = vsyncpa [#allocation6], 1
    %4040 = vsyncpa [#allocation4], 1
    %4041 = vsyncpa [#allocation9], 1

</llo_original>
